<compile_context>
chip_gen: v5e
topology: v5e:2x2
jax: 0.10.0
libtpu: 0.0.40
codegen_flags: <defaults>
</compile_context>

<pallas_src>
import math

import jax
import jax.numpy as jnp
from jax.experimental import pallas as pl
from jax.experimental.pallas import tpu as pltpu

# ---- scaled-down config ------------------------------------------------------
# original: DIM=(8*8+1)*384=24960, heads=8, dim_head=DIM, mlp_dim=DIM,
#           depth=6, 7 stacked Encoders, fc1 out=384, out=1, img_dim=32*32*3
B = 2               # batch
SEQ = 8             # tokens
IMG_DIM = 768       # flattened image features (orig 32*32*3=3072)
DIM = 128           # transformer dim (orig 24960)
HEADS = 2           # orig 8
DIM_HEAD = DIM      # orig dim_head == dim
MLP_DIM = DIM       # orig mlp_dim == dim
DEPTH = 2           # orig 6
NUM_STAGES = 2      # orig 7
NUM_LAYERS = NUM_STAGES * DEPTH
FC1_DIM = 384       # orig 1*384
INNER = HEADS * DIM_HEAD
SCALE = DIM_HEAD ** -0.5
LN_EPS = 1e-5       # torch nn.LayerNorm default
OUT_PAD = 128       # lane-dense width for the final scalar prediction (col 0 is real)

# tanh-approx GELU executes in the otherwise-idle EUP slot (biggest win on v5e where the
# VALU saturates first); set False for exact erf = torch nn.GELU default.
_GELU_TANH = True

# NOTE(v6e/v7x occupancy): every matmul here has M=SEQ=8 — the kernel is latency-bound,
# not MXU-throughput-bound.  If the caller can batch more images, raise B (grid axis) /
# SEQ so M approaches 128-256.
# NOTE(v7x scaling): at the original model size (DIM=24960) full-weight residency breaks
# on v7x's 64 MiB VMEM first — switch to a layer-axis grid with per-layer weight
# BlockSpecs + pl.Buffered streaming in that regime.


# ---- in-kernel helpers (operate on values, not refs) --------------------------
def _mm(x, w):
    """MXU matmul: bf16 inputs, f32 accumulation. astype is a no-op if already bf16."""
    return jnp.dot(x.astype(jnp.bfloat16), w, preferred_element_type=jnp.float32)


def _qkt(q, k):
    """q @ k^T via dot_general contracting the last dims (both bf16), f32 accumulate."""
    return jax.lax.dot_general(q, k, (((1,), (1,)), ((), ())),
                               preferred_element_type=jnp.float32)


def _layernorm_bf16(x, g, b):
    """LayerNorm: stats and affine in f32, output cast to bf16 in the same pass."""
    mean = jnp.mean(x, axis=-1, keepdims=True)
    c = x - mean
    var = jnp.mean(c * c, axis=-1, keepdims=True)
    return (c * jax.lax.rsqrt(var + LN_EPS) * g + b).astype(jnp.bfloat16)


def _gelu(y):
    if _GELU_TANH:
        return jax.nn.gelu(y, approximate=True)        # tanh -> EUP slot
    return 0.5 * y * (1.0 + jax.lax.erf(y * (1.0 / math.sqrt(2.0))))


# ---- fused forward kernel ------------------------------------------------------
def _tdisc_kernel(img_ref, in_w_ref, in_b_ref,
                  ln1_g_ref, ln1_b_ref, w_qkv_ref, w_out_ref, b_out_ref,
                  ln2_g_ref, ln2_b_ref, w1_ref, b1_ref, w2_ref, b2_ref,
                  w_eff_ref, b_eff_ref,
                  o_ref):
    # input_layer (img already bf16)
    x = _mm(img_ref[0], in_w_ref[...]) + in_b_ref[...]              # (SEQ, DIM) f32

    # stacked Encoders (all layers unrolled inside the single kernel)
    for l in range(NUM_LAYERS):
        # --- PreNorm + MHAttention + residual ---------------------------------
        xn = _layernorm_bf16(x, ln1_g_ref[l:l + 1, :], ln1_b_ref[l:l + 1, :])
        qkv = _mm(xn, w_qkv_ref[l])                                  # (SEQ, 3*INNER); bias=False
        for h in range(HEADS):                                       # static unroll; lane-aligned slices
            q = qkv[:, h * DIM_HEAD:(h + 1) * DIM_HEAD].astype(jnp.bfloat16)
            k = qkv[:, INNER + h * DIM_HEAD:INNER + (h + 1) * DIM_HEAD].astype(jnp.bfloat16)
            v = qkv[:, 2 * INNER + h * DIM_HEAD:2 * INNER + (h + 1) * DIM_HEAD].astype(jnp.bfloat16)
            # SCALE already folded into the q columns of w_qkv at init.
            dots = _qkt(q, k)                                        # (SEQ, SEQ) f32
            m = jnp.max(dots, axis=-1, keepdims=True)
            e = jnp.exp(dots - m)
            p = e * pl.reciprocal(jnp.sum(e, axis=-1, keepdims=True), approx=True)
            oh = _mm(p, v)                                           # (SEQ, DIM_HEAD) f32
            # distributed output projection: accumulate per head (no concat relayout)
            x = x + _mm(oh, w_out_ref[l, h * DIM_HEAD:(h + 1) * DIM_HEAD, :])
        x = x + b_out_ref[l:l + 1, :]                                # to_out bias (residual already in x)

        # --- PreNorm + FeedForward + residual (dropout p=0 is identity) --------
        xn = _layernorm_bf16(x, ln2_g_ref[l:l + 1, :], ln2_b_ref[l:l + 1, :])
        hdn = _gelu(_mm(xn, w1_ref[l]) + b1_ref[l:l + 1, :])
        x = x + _mm(hdn, w2_ref[l]) + b2_ref[l:l + 1, :]

    # fc1 + out pre-fused offline into one (DIM, OUT_PAD) matmul; lane-dense store.
    o_ref[0] = _mm(x, w_eff_ref[...]) + b_eff_ref[...]               # (SEQ, OUT_PAD); col 0 = pred


# ---- wrapper -------------------------------------------------------------------
def tdiscriminator_forward(img, params):
    img_bf16 = img.astype(jnp.bfloat16)                              # halve img DMA

    args = (
        img_bf16,
        params["input_w"], params["input_b"],
        params["ln1_g"], params["ln1_b"],
        params["w_qkv"], params["w_out"], params["b_out"],
        params["ln2_g"], params["ln2_b"],
        params["w1"], params["b1"], params["w2"], params["b2"],
        params["w_eff"], params["b_eff"],
    )

    def replicated(shape):
        return pl.BlockSpec(tuple(shape), lambda b, _n=len(shape): (0,) * _n)

    in_specs = (
        [pl.BlockSpec((1, SEQ, IMG_DIM), lambda b: (b, 0, 0))]       # per-batch img block
        + [replicated(a.shape) for a in args[1:]]                    # weights: full, VMEM-resident
    )
    out_specs = pl.BlockSpec((1, SEQ, OUT_PAD), lambda b: (b, 0, 0))

    y = pl.pallas_call(
        _tdisc_kernel,
        out_shape=jax.ShapeDtypeStruct((B, SEQ, OUT_PAD), jnp.float32),
        grid=(B,),
        in_specs=in_specs,
        out_specs=out_specs,
        compiler_params=pltpu.CompilerParams(
            dimension_semantics=("parallel",)),                      # lights up both v7x TCs
    )(*args)
    return y[:, :, :1]                                               # (B, SEQ, 1)


# ---- deterministic parameter init -----------------------------------------------
def init_params(key):
    keys = iter(jax.random.split(key, 64))

    def normal(shape, scale=0.02):
        return scale * jax.random.normal(next(keys), shape, jnp.float32)

    L = NUM_LAYERS

    # to_qkv (bias=False); fold the attention scale into the q projection columns.
    w_qkv = normal((L, DIM, 3 * INNER))
    w_qkv = w_qkv.at[:, :, :INNER].multiply(SCALE)

    # fc1 / out, pre-fused offline (no nonlinearity between them), lane-padded to OUT_PAD.
    fc1_w = normal((DIM, FC1_DIM))
    fc1_b = jnp.zeros((FC1_DIM,), jnp.float32)
    out_w = normal((FC1_DIM, 1))
    out_b = jnp.zeros((1,), jnp.float32)
    w_eff = jnp.zeros((DIM, OUT_PAD), jnp.float32).at[:, 0].set((fc1_w @ out_w)[:, 0])
    b_eff = jnp.zeros((1, OUT_PAD), jnp.float32).at[0, 0].set((fc1_b @ out_w + out_b)[0])

    return {
        "input_w": normal((IMG_DIM, DIM)).astype(jnp.bfloat16),
        "input_b": jnp.zeros((1, DIM), jnp.float32),
        # stacked per-layer Encoder weights, leading axis = layer
        "ln1_g": jnp.ones((L, DIM), jnp.float32),
        "ln1_b": jnp.zeros((L, DIM), jnp.float32),
        "w_qkv": w_qkv.astype(jnp.bfloat16),
        "w_out": normal((L, INNER, DIM)).astype(jnp.bfloat16),
        "b_out": jnp.zeros((L, DIM), jnp.float32),
        "ln2_g": jnp.ones((L, DIM), jnp.float32),
        "ln2_b": jnp.zeros((L, DIM), jnp.float32),
        "w1": normal((L, DIM, MLP_DIM)).astype(jnp.bfloat16),
        "b1": jnp.zeros((L, MLP_DIM), jnp.float32),
        "w2": normal((L, MLP_DIM, DIM)).astype(jnp.bfloat16),
        "b2": jnp.zeros((L, DIM), jnp.float32),
        "w_eff": w_eff.astype(jnp.bfloat16),
        "b_eff": b_eff,
    }


if __name__ == "__main__":
    key = jax.random.PRNGKey(0)
    pkey, xkey = jax.random.split(key)
    params = init_params(pkey)
    img = jax.random.normal(xkey, (B, SEQ, IMG_DIM), jnp.float32)

    fwd = jax.jit(tdiscriminator_forward)
    out = fwd(img, params)
    jax.block_until_ready(out)
    assert out.shape == (B, SEQ, 1) and out.dtype == jnp.float32
    assert bool(jnp.all(jnp.isfinite(out)))
    print("KERNEL_OK")
</pallas_src>

<mosaic_0001>
module attributes {stable_mosaic.version = 11 : i64} {
  func.func @_tdisc_kernel(%arg0: i32, %arg1: memref<1x8x768xbf16, #tpu.memory_space<vmem>>, %arg2: memref<768x128xbf16, #tpu.memory_space<vmem>>, %arg3: memref<1x128xf32, #tpu.memory_space<vmem>>, %arg4: memref<4x128xf32, #tpu.memory_space<vmem>>, %arg5: memref<4x128xf32, #tpu.memory_space<vmem>>, %arg6: memref<4x128x768xbf16, #tpu.memory_space<vmem>>, %arg7: memref<4x256x128xbf16, #tpu.memory_space<vmem>>, %arg8: memref<4x128xf32, #tpu.memory_space<vmem>>, %arg9: memref<4x128xf32, #tpu.memory_space<vmem>>, %arg10: memref<4x128xf32, #tpu.memory_space<vmem>>, %arg11: memref<4x128x128xbf16, #tpu.memory_space<vmem>>, %arg12: memref<4x128xf32, #tpu.memory_space<vmem>>, %arg13: memref<4x128x128xbf16, #tpu.memory_space<vmem>>, %arg14: memref<4x128xf32, #tpu.memory_space<vmem>>, %arg15: memref<128x128xbf16, #tpu.memory_space<vmem>>, %arg16: memref<1x128xf32, #tpu.memory_space<vmem>>, %arg17: memref<1x8x128xf32, #tpu.memory_space<vmem>>) attributes {dimension_semantics = [#tpu.dimension_semantics<parallel>], iteration_bounds = array<i64: 2>, scalar_prefetch = 0 : i64, scratch_operands = 0 : i64, tpu.core_type = #tpu.core_type<tc>, window_params = [{transform_indices = @transform_0, window_bounds = array<i64: 1, 8, 768>}, {pipeline_mode = #tpu.pipeline_mode<synchronous>, transform_indices = @transform_1, window_bounds = array<i64: 768, 128>}, {pipeline_mode = #tpu.pipeline_mode<synchronous>, transform_indices = @transform_2, window_bounds = array<i64: 1, 128>}, {pipeline_mode = #tpu.pipeline_mode<synchronous>, transform_indices = @transform_3, window_bounds = array<i64: 4, 128>}, {pipeline_mode = #tpu.pipeline_mode<synchronous>, transform_indices = @transform_4, window_bounds = array<i64: 4, 128>}, {pipeline_mode = #tpu.pipeline_mode<synchronous>, transform_indices = @transform_5, window_bounds = array<i64: 4, 128, 768>}, {pipeline_mode = #tpu.pipeline_mode<synchronous>, transform_indices = @transform_6, window_bounds = array<i64: 4, 256, 128>}, {pipeline_mode = #tpu.pipeline_mode<synchronous>, transform_indices = @transform_7, window_bounds = array<i64: 4, 128>}, {pipeline_mode = #tpu.pipeline_mode<synchronous>, transform_indices = @transform_8, window_bounds = array<i64: 4, 128>}, {pipeline_mode = #tpu.pipeline_mode<synchronous>, transform_indices = @transform_9, window_bounds = array<i64: 4, 128>}, {pipeline_mode = #tpu.pipeline_mode<synchronous>, transform_indices = @transform_10, window_bounds = array<i64: 4, 128, 128>}, {pipeline_mode = #tpu.pipeline_mode<synchronous>, transform_indices = @transform_11, window_bounds = array<i64: 4, 128>}, {pipeline_mode = #tpu.pipeline_mode<synchronous>, transform_indices = @transform_12, window_bounds = array<i64: 4, 128, 128>}, {pipeline_mode = #tpu.pipeline_mode<synchronous>, transform_indices = @transform_13, window_bounds = array<i64: 4, 128>}, {pipeline_mode = #tpu.pipeline_mode<synchronous>, transform_indices = @transform_14, window_bounds = array<i64: 128, 128>}, {pipeline_mode = #tpu.pipeline_mode<synchronous>, transform_indices = @transform_15, window_bounds = array<i64: 1, 128>}, {transform_indices = @transform_16, window_bounds = array<i64: 1, 8, 128>}]} {
    %c0 = arith.constant 0 : index
    %c0_0 = arith.constant 0 : index
    %c0_1 = arith.constant 0 : index
    %0 = vector.load %arg1[%c0, %c0_0, %c0_1] : memref<1x8x768xbf16, #tpu.memory_space<vmem>>, vector<1x8x768xbf16>
    %1 = vector.shape_cast %0 : vector<1x8x768xbf16> to vector<8x768xbf16>
    %c0_2 = arith.constant 0 : index
    %c0_3 = arith.constant 0 : index
    %2 = vector.load %arg2[%c0_2, %c0_3] : memref<768x128xbf16, #tpu.memory_space<vmem>>, vector<768x128xbf16>
    %cst = arith.constant dense<0.000000e+00> : vector<8x128xf32>
    %3 = tpu.matmul %1, %2, %cst {dimension_numbers = #tpu.dot_dimension_numbers<[1], [0], [0], [1], [0, 0, 1, 1], [], []>} : vector<8x768xbf16>, vector<768x128xbf16>, vector<8x128xf32> -> vector<8x128xf32>
    %c0_4 = arith.constant 0 : index
    %c0_5 = arith.constant 0 : index
    %4 = vector.load %arg3[%c0_4, %c0_5] : memref<1x128xf32, #tpu.memory_space<vmem>>, vector<1x128xf32>
    %5 = vector.broadcast %4 : vector<1x128xf32> to vector<8x128xf32>
    %6 = arith.addf %3, %5 : vector<8x128xf32>
    %c0_6 = arith.constant 0 : index
    %c0_7 = arith.constant 0 : index
    %7 = vector.load %arg4[%c0_6, %c0_7] : memref<4x128xf32, #tpu.memory_space<vmem>>, vector<1x128xf32>
    %c0_8 = arith.constant 0 : index
    %c0_9 = arith.constant 0 : index
    %8 = vector.load %arg5[%c0_8, %c0_9] : memref<4x128xf32, #tpu.memory_space<vmem>>, vector<1x128xf32>
    %cst_10 = arith.constant dense<0.000000e+00> : vector<8xf32>
    %9 = vector.multi_reduction <add>, %6, %cst_10 [1] : vector<8x128xf32> to vector<8xf32>
    %10 = vector.shape_cast %9 : vector<8xf32> to vector<8x1xf32>
    %cst_11 = arith.constant 1.280000e+02 : f32
    %11 = vector.broadcast %cst_11 : f32 to vector<8x1xf32>
    %12 = arith.divf %10, %11 : vector<8x1xf32>
    %13 = vector.broadcast %12 : vector<8x1xf32> to vector<8x128xf32>
    %14 = arith.subf %6, %13 : vector<8x128xf32>
    %15 = arith.mulf %14, %14 : vector<8x128xf32>
    %cst_12 = arith.constant dense<0.000000e+00> : vector<8xf32>
    %16 = vector.multi_reduction <add>, %15, %cst_12 [1] : vector<8x128xf32> to vector<8xf32>
    %17 = vector.shape_cast %16 : vector<8xf32> to vector<8x1xf32>
    %cst_13 = arith.constant 1.280000e+02 : f32
    %18 = vector.broadcast %cst_13 : f32 to vector<8x1xf32>
    %19 = arith.divf %17, %18 : vector<8x1xf32>
    %cst_14 = arith.constant 9.99999974E-6 : f32
    %20 = vector.broadcast %cst_14 : f32 to vector<8x1xf32>
    %21 = arith.addf %19, %20 : vector<8x1xf32>
    %22 = math.rsqrt %21 : vector<8x1xf32>
    %23 = vector.broadcast %22 : vector<8x1xf32> to vector<8x128xf32>
    %24 = arith.mulf %14, %23 : vector<8x128xf32>
    %25 = vector.broadcast %7 : vector<1x128xf32> to vector<8x128xf32>
    %26 = arith.mulf %24, %25 : vector<8x128xf32>
    %27 = vector.broadcast %8 : vector<1x128xf32> to vector<8x128xf32>
    %28 = arith.addf %26, %27 : vector<8x128xf32>
    %29 = arith.truncf %28 : vector<8x128xf32> to vector<8x128xbf16>
    %c0_15 = arith.constant 0 : index
    %c0_16 = arith.constant 0 : index
    %c0_17 = arith.constant 0 : index
    %30 = vector.load %arg6[%c0_15, %c0_16, %c0_17] : memref<4x128x768xbf16, #tpu.memory_space<vmem>>, vector<1x128x768xbf16>
    %31 = vector.shape_cast %30 : vector<1x128x768xbf16> to vector<128x768xbf16>
    %cst_18 = arith.constant dense<0.000000e+00> : vector<8x768xf32>
    %32 = tpu.matmul %29, %31, %cst_18 {dimension_numbers = #tpu.dot_dimension_numbers<[1], [0], [0], [1], [0, 0, 1, 1], [], []>} : vector<8x128xbf16>, vector<128x768xbf16>, vector<8x768xf32> -> vector<8x768xf32>
    %33 = vector.extract_strided_slice %32 {offsets = [0, 0], sizes = [8, 128], strides = [1, 1]} : vector<8x768xf32> to vector<8x128xf32>
    %34 = arith.truncf %33 : vector<8x128xf32> to vector<8x128xbf16>
    %35 = vector.extract_strided_slice %32 {offsets = [0, 256], sizes = [8, 128], strides = [1, 1]} : vector<8x768xf32> to vector<8x128xf32>
    %36 = arith.truncf %35 : vector<8x128xf32> to vector<8x128xbf16>
    %37 = vector.extract_strided_slice %32 {offsets = [0, 512], sizes = [8, 128], strides = [1, 1]} : vector<8x768xf32> to vector<8x128xf32>
    %38 = arith.truncf %37 : vector<8x128xf32> to vector<8x128xbf16>
    %cst_19 = arith.constant dense<0.000000e+00> : vector<8x8xf32>
    %39 = tpu.matmul %34, %36, %cst_19 {dimension_numbers = #tpu.dot_dimension_numbers<[1], [1], [0], [0], [0, 0, 1, 0], [], []>} : vector<8x128xbf16>, vector<8x128xbf16>, vector<8x8xf32> -> vector<8x8xf32>
    %cst_20 = arith.constant dense<0xFF800000> : vector<8xf32>
    %40 = vector.multi_reduction <maximumf>, %39, %cst_20 [1] : vector<8x8xf32> to vector<8xf32>
    %41 = vector.shape_cast %40 : vector<8xf32> to vector<8x1xf32>
    %42 = vector.broadcast %41 : vector<8x1xf32> to vector<8x8xf32>
    %43 = arith.subf %39, %42 : vector<8x8xf32>
    %44 = math.exp %43 : vector<8x8xf32>
    %cst_21 = arith.constant dense<0.000000e+00> : vector<8xf32>
    %45 = vector.multi_reduction <add>, %44, %cst_21 [1] : vector<8x8xf32> to vector<8xf32>
    %46 = vector.shape_cast %45 : vector<8xf32> to vector<8x1xf32>
    %47 = tpu.reciprocal %46 {approx = true} : vector<8x1xf32> -> vector<8x1xf32>
    %48 = vector.broadcast %47 : vector<8x1xf32> to vector<8x8xf32>
    %49 = arith.mulf %44, %48 : vector<8x8xf32>
    %50 = arith.truncf %49 : vector<8x8xf32> to vector<8x8xbf16>
    %cst_22 = arith.constant dense<0.000000e+00> : vector<8x128xf32>
    %51 = tpu.matmul %50, %38, %cst_22 {dimension_numbers = #tpu.dot_dimension_numbers<[1], [0], [0], [1], [0, 0, 1, 1], [], []>} : vector<8x8xbf16>, vector<8x128xbf16>, vector<8x128xf32> -> vector<8x128xf32>
    %c0_23 = arith.constant 0 : index
    %c0_24 = arith.constant 0 : index
    %c0_25 = arith.constant 0 : index
    %52 = vector.load %arg7[%c0_23, %c0_24, %c0_25] : memref<4x256x128xbf16, #tpu.memory_space<vmem>>, vector<1x128x128xbf16>
    %53 = vector.shape_cast %52 : vector<1x128x128xbf16> to vector<128x128xbf16>
    %54 = arith.truncf %51 : vector<8x128xf32> to vector<8x128xbf16>
    %cst_26 = arith.constant dense<0.000000e+00> : vector<8x128xf32>
    %55 = tpu.matmul %54, %53, %cst_26 {dimension_numbers = #tpu.dot_dimension_numbers<[1], [0], [0], [1], [0, 0, 1, 1], [], []>} : vector<8x128xbf16>, vector<128x128xbf16>, vector<8x128xf32> -> vector<8x128xf32>
    %56 = arith.addf %6, %55 : vector<8x128xf32>
    %57 = vector.extract_strided_slice %32 {offsets = [0, 128], sizes = [8, 128], strides = [1, 1]} : vector<8x768xf32> to vector<8x128xf32>
    %58 = arith.truncf %57 : vector<8x128xf32> to vector<8x128xbf16>
    %59 = vector.extract_strided_slice %32 {offsets = [0, 384], sizes = [8, 128], strides = [1, 1]} : vector<8x768xf32> to vector<8x128xf32>
    %60 = arith.truncf %59 : vector<8x128xf32> to vector<8x128xbf16>
    %61 = vector.extract_strided_slice %32 {offsets = [0, 640], sizes = [8, 128], strides = [1, 1]} : vector<8x768xf32> to vector<8x128xf32>
    %62 = arith.truncf %61 : vector<8x128xf32> to vector<8x128xbf16>
    %cst_27 = arith.constant dense<0.000000e+00> : vector<8x8xf32>
    %63 = tpu.matmul %58, %60, %cst_27 {dimension_numbers = #tpu.dot_dimension_numbers<[1], [1], [0], [0], [0, 0, 1, 0], [], []>} : vector<8x128xbf16>, vector<8x128xbf16>, vector<8x8xf32> -> vector<8x8xf32>
    %cst_28 = arith.constant dense<0xFF800000> : vector<8xf32>
    %64 = vector.multi_reduction <maximumf>, %63, %cst_28 [1] : vector<8x8xf32> to vector<8xf32>
    %65 = vector.shape_cast %64 : vector<8xf32> to vector<8x1xf32>
    %66 = vector.broadcast %65 : vector<8x1xf32> to vector<8x8xf32>
    %67 = arith.subf %63, %66 : vector<8x8xf32>
    %68 = math.exp %67 : vector<8x8xf32>
    %cst_29 = arith.constant dense<0.000000e+00> : vector<8xf32>
    %69 = vector.multi_reduction <add>, %68, %cst_29 [1] : vector<8x8xf32> to vector<8xf32>
    %70 = vector.shape_cast %69 : vector<8xf32> to vector<8x1xf32>
    %71 = tpu.reciprocal %70 {approx = true} : vector<8x1xf32> -> vector<8x1xf32>
    %72 = vector.broadcast %71 : vector<8x1xf32> to vector<8x8xf32>
    %73 = arith.mulf %68, %72 : vector<8x8xf32>
    %74 = arith.truncf %73 : vector<8x8xf32> to vector<8x8xbf16>
    %cst_30 = arith.constant dense<0.000000e+00> : vector<8x128xf32>
    %75 = tpu.matmul %74, %62, %cst_30 {dimension_numbers = #tpu.dot_dimension_numbers<[1], [0], [0], [1], [0, 0, 1, 1], [], []>} : vector<8x8xbf16>, vector<8x128xbf16>, vector<8x128xf32> -> vector<8x128xf32>
    %c0_31 = arith.constant 0 : index
    %c128 = arith.constant 128 : index
    %c0_32 = arith.constant 0 : index
    %76 = vector.load %arg7[%c0_31, %c128, %c0_32] : memref<4x256x128xbf16, #tpu.memory_space<vmem>>, vector<1x128x128xbf16>
    %77 = vector.shape_cast %76 : vector<1x128x128xbf16> to vector<128x128xbf16>
    %78 = arith.truncf %75 : vector<8x128xf32> to vector<8x128xbf16>
    %cst_33 = arith.constant dense<0.000000e+00> : vector<8x128xf32>
    %79 = tpu.matmul %78, %77, %cst_33 {dimension_numbers = #tpu.dot_dimension_numbers<[1], [0], [0], [1], [0, 0, 1, 1], [], []>} : vector<8x128xbf16>, vector<128x128xbf16>, vector<8x128xf32> -> vector<8x128xf32>
    %80 = arith.addf %56, %79 : vector<8x128xf32>
    %c0_34 = arith.constant 0 : index
    %c0_35 = arith.constant 0 : index
    %81 = vector.load %arg8[%c0_34, %c0_35] : memref<4x128xf32, #tpu.memory_space<vmem>>, vector<1x128xf32>
    %82 = vector.broadcast %81 : vector<1x128xf32> to vector<8x128xf32>
    %83 = arith.addf %80, %82 : vector<8x128xf32>
    %c0_36 = arith.constant 0 : index
    %c0_37 = arith.constant 0 : index
    %84 = vector.load %arg9[%c0_36, %c0_37] : memref<4x128xf32, #tpu.memory_space<vmem>>, vector<1x128xf32>
    %c0_38 = arith.constant 0 : index
    %c0_39 = arith.constant 0 : index
    %85 = vector.load %arg10[%c0_38, %c0_39] : memref<4x128xf32, #tpu.memory_space<vmem>>, vector<1x128xf32>
    %cst_40 = arith.constant dense<0.000000e+00> : vector<8xf32>
    %86 = vector.multi_reduction <add>, %83, %cst_40 [1] : vector<8x128xf32> to vector<8xf32>
    %87 = vector.shape_cast %86 : vector<8xf32> to vector<8x1xf32>
    %cst_41 = arith.constant 1.280000e+02 : f32
    %88 = vector.broadcast %cst_41 : f32 to vector<8x1xf32>
    %89 = arith.divf %87, %88 : vector<8x1xf32>
    %90 = vector.broadcast %89 : vector<8x1xf32> to vector<8x128xf32>
    %91 = arith.subf %83, %90 : vector<8x128xf32>
    %92 = arith.mulf %91, %91 : vector<8x128xf32>
    %cst_42 = arith.constant dense<0.000000e+00> : vector<8xf32>
    %93 = vector.multi_reduction <add>, %92, %cst_42 [1] : vector<8x128xf32> to vector<8xf32>
    %94 = vector.shape_cast %93 : vector<8xf32> to vector<8x1xf32>
    %cst_43 = arith.constant 1.280000e+02 : f32
    %95 = vector.broadcast %cst_43 : f32 to vector<8x1xf32>
    %96 = arith.divf %94, %95 : vector<8x1xf32>
    %cst_44 = arith.constant 9.99999974E-6 : f32
    %97 = vector.broadcast %cst_44 : f32 to vector<8x1xf32>
    %98 = arith.addf %96, %97 : vector<8x1xf32>
    %99 = math.rsqrt %98 : vector<8x1xf32>
    %100 = vector.broadcast %99 : vector<8x1xf32> to vector<8x128xf32>
    %101 = arith.mulf %91, %100 : vector<8x128xf32>
    %102 = vector.broadcast %84 : vector<1x128xf32> to vector<8x128xf32>
    %103 = arith.mulf %101, %102 : vector<8x128xf32>
    %104 = vector.broadcast %85 : vector<1x128xf32> to vector<8x128xf32>
    %105 = arith.addf %103, %104 : vector<8x128xf32>
    %106 = arith.truncf %105 : vector<8x128xf32> to vector<8x128xbf16>
    %c0_45 = arith.constant 0 : index
    %c0_46 = arith.constant 0 : index
    %c0_47 = arith.constant 0 : index
    %107 = vector.load %arg11[%c0_45, %c0_46, %c0_47] : memref<4x128x128xbf16, #tpu.memory_space<vmem>>, vector<1x128x128xbf16>
    %108 = vector.shape_cast %107 : vector<1x128x128xbf16> to vector<128x128xbf16>
    %cst_48 = arith.constant dense<0.000000e+00> : vector<8x128xf32>
    %109 = tpu.matmul %106, %108, %cst_48 {dimension_numbers = #tpu.dot_dimension_numbers<[1], [0], [0], [1], [0, 0, 1, 1], [], []>} : vector<8x128xbf16>, vector<128x128xbf16>, vector<8x128xf32> -> vector<8x128xf32>
    %c0_49 = arith.constant 0 : index
    %c0_50 = arith.constant 0 : index
    %110 = vector.load %arg12[%c0_49, %c0_50] : memref<4x128xf32, #tpu.memory_space<vmem>>, vector<1x128xf32>
    %111 = vector.broadcast %110 : vector<1x128xf32> to vector<8x128xf32>
    %112 = arith.addf %109, %111 : vector<8x128xf32>
    %113 = arith.mulf %112, %112 : vector<8x128xf32>
    %114 = arith.mulf %112, %113 : vector<8x128xf32>
    %cst_51 = arith.constant 4.471500e-02 : f32
    %115 = vector.broadcast %cst_51 : f32 to vector<8x128xf32>
    %116 = arith.mulf %115, %114 : vector<8x128xf32>
    %117 = arith.addf %112, %116 : vector<8x128xf32>
    %cst_52 = arith.constant 0.797884583 : f32
    %118 = vector.broadcast %cst_52 : f32 to vector<8x128xf32>
    %119 = arith.mulf %118, %117 : vector<8x128xf32>
    %120 = math.tanh %119 : vector<8x128xf32>
    %cst_53 = arith.constant 1.000000e+00 : f32
    %121 = vector.broadcast %cst_53 : f32 to vector<8x128xf32>
    %122 = arith.addf %121, %120 : vector<8x128xf32>
    %cst_54 = arith.constant 5.000000e-01 : f32
    %123 = vector.broadcast %cst_54 : f32 to vector<8x128xf32>
    %124 = arith.mulf %123, %122 : vector<8x128xf32>
    %125 = arith.mulf %112, %124 : vector<8x128xf32>
    %c0_55 = arith.constant 0 : index
    %c0_56 = arith.constant 0 : index
    %c0_57 = arith.constant 0 : index
    %126 = vector.load %arg13[%c0_55, %c0_56, %c0_57] : memref<4x128x128xbf16, #tpu.memory_space<vmem>>, vector<1x128x128xbf16>
    %127 = vector.shape_cast %126 : vector<1x128x128xbf16> to vector<128x128xbf16>
    %128 = arith.truncf %125 : vector<8x128xf32> to vector<8x128xbf16>
    %cst_58 = arith.constant dense<0.000000e+00> : vector<8x128xf32>
    %129 = tpu.matmul %128, %127, %cst_58 {dimension_numbers = #tpu.dot_dimension_numbers<[1], [0], [0], [1], [0, 0, 1, 1], [], []>} : vector<8x128xbf16>, vector<128x128xbf16>, vector<8x128xf32> -> vector<8x128xf32>
    %130 = arith.addf %83, %129 : vector<8x128xf32>
    %c0_59 = arith.constant 0 : index
    %c0_60 = arith.constant 0 : index
    %131 = vector.load %arg14[%c0_59, %c0_60] : memref<4x128xf32, #tpu.memory_space<vmem>>, vector<1x128xf32>
    %132 = vector.broadcast %131 : vector<1x128xf32> to vector<8x128xf32>
    %133 = arith.addf %130, %132 : vector<8x128xf32>
    %c1 = arith.constant 1 : index
    %c0_61 = arith.constant 0 : index
    %134 = vector.load %arg4[%c1, %c0_61] : memref<4x128xf32, #tpu.memory_space<vmem>>, vector<1x128xf32>
    %c1_62 = arith.constant 1 : index
    %c0_63 = arith.constant 0 : index
    %135 = vector.load %arg5[%c1_62, %c0_63] : memref<4x128xf32, #tpu.memory_space<vmem>>, vector<1x128xf32>
    %cst_64 = arith.constant dense<0.000000e+00> : vector<8xf32>
    %136 = vector.multi_reduction <add>, %133, %cst_64 [1] : vector<8x128xf32> to vector<8xf32>
    %137 = vector.shape_cast %136 : vector<8xf32> to vector<8x1xf32>
    %cst_65 = arith.constant 1.280000e+02 : f32
    %138 = vector.broadcast %cst_65 : f32 to vector<8x1xf32>
    %139 = arith.divf %137, %138 : vector<8x1xf32>
    %140 = vector.broadcast %139 : vector<8x1xf32> to vector<8x128xf32>
    %141 = arith.subf %133, %140 : vector<8x128xf32>
    %142 = arith.mulf %141, %141 : vector<8x128xf32>
    %cst_66 = arith.constant dense<0.000000e+00> : vector<8xf32>
    %143 = vector.multi_reduction <add>, %142, %cst_66 [1] : vector<8x128xf32> to vector<8xf32>
    %144 = vector.shape_cast %143 : vector<8xf32> to vector<8x1xf32>
    %cst_67 = arith.constant 1.280000e+02 : f32
    %145 = vector.broadcast %cst_67 : f32 to vector<8x1xf32>
    %146 = arith.divf %144, %145 : vector<8x1xf32>
    %cst_68 = arith.constant 9.99999974E-6 : f32
    %147 = vector.broadcast %cst_68 : f32 to vector<8x1xf32>
    %148 = arith.addf %146, %147 : vector<8x1xf32>
    %149 = math.rsqrt %148 : vector<8x1xf32>
    %150 = vector.broadcast %149 : vector<8x1xf32> to vector<8x128xf32>
    %151 = arith.mulf %141, %150 : vector<8x128xf32>
    %152 = vector.broadcast %134 : vector<1x128xf32> to vector<8x128xf32>
    %153 = arith.mulf %151, %152 : vector<8x128xf32>
    %154 = vector.broadcast %135 : vector<1x128xf32> to vector<8x128xf32>
    %155 = arith.addf %153, %154 : vector<8x128xf32>
    %156 = arith.truncf %155 : vector<8x128xf32> to vector<8x128xbf16>
    %c1_69 = arith.constant 1 : index
    %c0_70 = arith.constant 0 : index
    %c0_71 = arith.constant 0 : index
    %157 = vector.load %arg6[%c1_69, %c0_70, %c0_71] : memref<4x128x768xbf16, #tpu.memory_space<vmem>>, vector<1x128x768xbf16>
    %158 = vector.shape_cast %157 : vector<1x128x768xbf16> to vector<128x768xbf16>
    %cst_72 = arith.constant dense<0.000000e+00> : vector<8x768xf32>
    %159 = tpu.matmul %156, %158, %cst_72 {dimension_numbers = #tpu.dot_dimension_numbers<[1], [0], [0], [1], [0, 0, 1, 1], [], []>} : vector<8x128xbf16>, vector<128x768xbf16>, vector<8x768xf32> -> vector<8x768xf32>
    %160 = vector.extract_strided_slice %159 {offsets = [0, 0], sizes = [8, 128], strides = [1, 1]} : vector<8x768xf32> to vector<8x128xf32>
    %161 = arith.truncf %160 : vector<8x128xf32> to vector<8x128xbf16>
    %162 = vector.extract_strided_slice %159 {offsets = [0, 256], sizes = [8, 128], strides = [1, 1]} : vector<8x768xf32> to vector<8x128xf32>
    %163 = arith.truncf %162 : vector<8x128xf32> to vector<8x128xbf16>
    %164 = vector.extract_strided_slice %159 {offsets = [0, 512], sizes = [8, 128], strides = [1, 1]} : vector<8x768xf32> to vector<8x128xf32>
    %165 = arith.truncf %164 : vector<8x128xf32> to vector<8x128xbf16>
    %cst_73 = arith.constant dense<0.000000e+00> : vector<8x8xf32>
    %166 = tpu.matmul %161, %163, %cst_73 {dimension_numbers = #tpu.dot_dimension_numbers<[1], [1], [0], [0], [0, 0, 1, 0], [], []>} : vector<8x128xbf16>, vector<8x128xbf16>, vector<8x8xf32> -> vector<8x8xf32>
    %cst_74 = arith.constant dense<0xFF800000> : vector<8xf32>
    %167 = vector.multi_reduction <maximumf>, %166, %cst_74 [1] : vector<8x8xf32> to vector<8xf32>
    %168 = vector.shape_cast %167 : vector<8xf32> to vector<8x1xf32>
    %169 = vector.broadcast %168 : vector<8x1xf32> to vector<8x8xf32>
    %170 = arith.subf %166, %169 : vector<8x8xf32>
    %171 = math.exp %170 : vector<8x8xf32>
    %cst_75 = arith.constant dense<0.000000e+00> : vector<8xf32>
    %172 = vector.multi_reduction <add>, %171, %cst_75 [1] : vector<8x8xf32> to vector<8xf32>
    %173 = vector.shape_cast %172 : vector<8xf32> to vector<8x1xf32>
    %174 = tpu.reciprocal %173 {approx = true} : vector<8x1xf32> -> vector<8x1xf32>
    %175 = vector.broadcast %174 : vector<8x1xf32> to vector<8x8xf32>
    %176 = arith.mulf %171, %175 : vector<8x8xf32>
    %177 = arith.truncf %176 : vector<8x8xf32> to vector<8x8xbf16>
    %cst_76 = arith.constant dense<0.000000e+00> : vector<8x128xf32>
    %178 = tpu.matmul %177, %165, %cst_76 {dimension_numbers = #tpu.dot_dimension_numbers<[1], [0], [0], [1], [0, 0, 1, 1], [], []>} : vector<8x8xbf16>, vector<8x128xbf16>, vector<8x128xf32> -> vector<8x128xf32>
    %c1_77 = arith.constant 1 : index
    %c0_78 = arith.constant 0 : index
    %c0_79 = arith.constant 0 : index
    %179 = vector.load %arg7[%c1_77, %c0_78, %c0_79] : memref<4x256x128xbf16, #tpu.memory_space<vmem>>, vector<1x128x128xbf16>
    %180 = vector.shape_cast %179 : vector<1x128x128xbf16> to vector<128x128xbf16>
    %181 = arith.truncf %178 : vector<8x128xf32> to vector<8x128xbf16>
    %cst_80 = arith.constant dense<0.000000e+00> : vector<8x128xf32>
    %182 = tpu.matmul %181, %180, %cst_80 {dimension_numbers = #tpu.dot_dimension_numbers<[1], [0], [0], [1], [0, 0, 1, 1], [], []>} : vector<8x128xbf16>, vector<128x128xbf16>, vector<8x128xf32> -> vector<8x128xf32>
    %183 = arith.addf %133, %182 : vector<8x128xf32>
    %184 = vector.extract_strided_slice %159 {offsets = [0, 128], sizes = [8, 128], strides = [1, 1]} : vector<8x768xf32> to vector<8x128xf32>
    %185 = arith.truncf %184 : vector<8x128xf32> to vector<8x128xbf16>
    %186 = vector.extract_strided_slice %159 {offsets = [0, 384], sizes = [8, 128], strides = [1, 1]} : vector<8x768xf32> to vector<8x128xf32>
    %187 = arith.truncf %186 : vector<8x128xf32> to vector<8x128xbf16>
    %188 = vector.extract_strided_slice %159 {offsets = [0, 640], sizes = [8, 128], strides = [1, 1]} : vector<8x768xf32> to vector<8x128xf32>
    %189 = arith.truncf %188 : vector<8x128xf32> to vector<8x128xbf16>
    %cst_81 = arith.constant dense<0.000000e+00> : vector<8x8xf32>
    %190 = tpu.matmul %185, %187, %cst_81 {dimension_numbers = #tpu.dot_dimension_numbers<[1], [1], [0], [0], [0, 0, 1, 0], [], []>} : vector<8x128xbf16>, vector<8x128xbf16>, vector<8x8xf32> -> vector<8x8xf32>
    %cst_82 = arith.constant dense<0xFF800000> : vector<8xf32>
    %191 = vector.multi_reduction <maximumf>, %190, %cst_82 [1] : vector<8x8xf32> to vector<8xf32>
    %192 = vector.shape_cast %191 : vector<8xf32> to vector<8x1xf32>
    %193 = vector.broadcast %192 : vector<8x1xf32> to vector<8x8xf32>
    %194 = arith.subf %190, %193 : vector<8x8xf32>
    %195 = math.exp %194 : vector<8x8xf32>
    %cst_83 = arith.constant dense<0.000000e+00> : vector<8xf32>
    %196 = vector.multi_reduction <add>, %195, %cst_83 [1] : vector<8x8xf32> to vector<8xf32>
    %197 = vector.shape_cast %196 : vector<8xf32> to vector<8x1xf32>
    %198 = tpu.reciprocal %197 {approx = true} : vector<8x1xf32> -> vector<8x1xf32>
    %199 = vector.broadcast %198 : vector<8x1xf32> to vector<8x8xf32>
    %200 = arith.mulf %195, %199 : vector<8x8xf32>
    %201 = arith.truncf %200 : vector<8x8xf32> to vector<8x8xbf16>
    %cst_84 = arith.constant dense<0.000000e+00> : vector<8x128xf32>
    %202 = tpu.matmul %201, %189, %cst_84 {dimension_numbers = #tpu.dot_dimension_numbers<[1], [0], [0], [1], [0, 0, 1, 1], [], []>} : vector<8x8xbf16>, vector<8x128xbf16>, vector<8x128xf32> -> vector<8x128xf32>
    %c1_85 = arith.constant 1 : index
    %c128_86 = arith.constant 128 : index
    %c0_87 = arith.constant 0 : index
    %203 = vector.load %arg7[%c1_85, %c128_86, %c0_87] : memref<4x256x128xbf16, #tpu.memory_space<vmem>>, vector<1x128x128xbf16>
    %204 = vector.shape_cast %203 : vector<1x128x128xbf16> to vector<128x128xbf16>
    %205 = arith.truncf %202 : vector<8x128xf32> to vector<8x128xbf16>
    %cst_88 = arith.constant dense<0.000000e+00> : vector<8x128xf32>
    %206 = tpu.matmul %205, %204, %cst_88 {dimension_numbers = #tpu.dot_dimension_numbers<[1], [0], [0], [1], [0, 0, 1, 1], [], []>} : vector<8x128xbf16>, vector<128x128xbf16>, vector<8x128xf32> -> vector<8x128xf32>
    %207 = arith.addf %183, %206 : vector<8x128xf32>
    %c1_89 = arith.constant 1 : index
    %c0_90 = arith.constant 0 : index
    %208 = vector.load %arg8[%c1_89, %c0_90] : memref<4x128xf32, #tpu.memory_space<vmem>>, vector<1x128xf32>
    %209 = vector.broadcast %208 : vector<1x128xf32> to vector<8x128xf32>
    %210 = arith.addf %207, %209 : vector<8x128xf32>
    %c1_91 = arith.constant 1 : index
    %c0_92 = arith.constant 0 : index
    %211 = vector.load %arg9[%c1_91, %c0_92] : memref<4x128xf32, #tpu.memory_space<vmem>>, vector<1x128xf32>
    %c1_93 = arith.constant 1 : index
    %c0_94 = arith.constant 0 : index
    %212 = vector.load %arg10[%c1_93, %c0_94] : memref<4x128xf32, #tpu.memory_space<vmem>>, vector<1x128xf32>
    %cst_95 = arith.constant dense<0.000000e+00> : vector<8xf32>
    %213 = vector.multi_reduction <add>, %210, %cst_95 [1] : vector<8x128xf32> to vector<8xf32>
    %214 = vector.shape_cast %213 : vector<8xf32> to vector<8x1xf32>
    %cst_96 = arith.constant 1.280000e+02 : f32
    %215 = vector.broadcast %cst_96 : f32 to vector<8x1xf32>
    %216 = arith.divf %214, %215 : vector<8x1xf32>
    %217 = vector.broadcast %216 : vector<8x1xf32> to vector<8x128xf32>
    %218 = arith.subf %210, %217 : vector<8x128xf32>
    %219 = arith.mulf %218, %218 : vector<8x128xf32>
    %cst_97 = arith.constant dense<0.000000e+00> : vector<8xf32>
    %220 = vector.multi_reduction <add>, %219, %cst_97 [1] : vector<8x128xf32> to vector<8xf32>
    %221 = vector.shape_cast %220 : vector<8xf32> to vector<8x1xf32>
    %cst_98 = arith.constant 1.280000e+02 : f32
    %222 = vector.broadcast %cst_98 : f32 to vector<8x1xf32>
    %223 = arith.divf %221, %222 : vector<8x1xf32>
    %cst_99 = arith.constant 9.99999974E-6 : f32
    %224 = vector.broadcast %cst_99 : f32 to vector<8x1xf32>
    %225 = arith.addf %223, %224 : vector<8x1xf32>
    %226 = math.rsqrt %225 : vector<8x1xf32>
    %227 = vector.broadcast %226 : vector<8x1xf32> to vector<8x128xf32>
    %228 = arith.mulf %218, %227 : vector<8x128xf32>
    %229 = vector.broadcast %211 : vector<1x128xf32> to vector<8x128xf32>
    %230 = arith.mulf %228, %229 : vector<8x128xf32>
    %231 = vector.broadcast %212 : vector<1x128xf32> to vector<8x128xf32>
    %232 = arith.addf %230, %231 : vector<8x128xf32>
    %233 = arith.truncf %232 : vector<8x128xf32> to vector<8x128xbf16>
    %c1_100 = arith.constant 1 : index
    %c0_101 = arith.constant 0 : index
    %c0_102 = arith.constant 0 : index
    %234 = vector.load %arg11[%c1_100, %c0_101, %c0_102] : memref<4x128x128xbf16, #tpu.memory_space<vmem>>, vector<1x128x128xbf16>
    %235 = vector.shape_cast %234 : vector<1x128x128xbf16> to vector<128x128xbf16>
    %cst_103 = arith.constant dense<0.000000e+00> : vector<8x128xf32>
    %236 = tpu.matmul %233, %235, %cst_103 {dimension_numbers = #tpu.dot_dimension_numbers<[1], [0], [0], [1], [0, 0, 1, 1], [], []>} : vector<8x128xbf16>, vector<128x128xbf16>, vector<8x128xf32> -> vector<8x128xf32>
    %c1_104 = arith.constant 1 : index
    %c0_105 = arith.constant 0 : index
    %237 = vector.load %arg12[%c1_104, %c0_105] : memref<4x128xf32, #tpu.memory_space<vmem>>, vector<1x128xf32>
    %238 = vector.broadcast %237 : vector<1x128xf32> to vector<8x128xf32>
    %239 = arith.addf %236, %238 : vector<8x128xf32>
    %240 = arith.mulf %239, %239 : vector<8x128xf32>
    %241 = arith.mulf %239, %240 : vector<8x128xf32>
    %cst_106 = arith.constant 4.471500e-02 : f32
    %242 = vector.broadcast %cst_106 : f32 to vector<8x128xf32>
    %243 = arith.mulf %242, %241 : vector<8x128xf32>
    %244 = arith.addf %239, %243 : vector<8x128xf32>
    %cst_107 = arith.constant 0.797884583 : f32
    %245 = vector.broadcast %cst_107 : f32 to vector<8x128xf32>
    %246 = arith.mulf %245, %244 : vector<8x128xf32>
    %247 = math.tanh %246 : vector<8x128xf32>
    %cst_108 = arith.constant 1.000000e+00 : f32
    %248 = vector.broadcast %cst_108 : f32 to vector<8x128xf32>
    %249 = arith.addf %248, %247 : vector<8x128xf32>
    %cst_109 = arith.constant 5.000000e-01 : f32
    %250 = vector.broadcast %cst_109 : f32 to vector<8x128xf32>
    %251 = arith.mulf %250, %249 : vector<8x128xf32>
    %252 = arith.mulf %239, %251 : vector<8x128xf32>
    %c1_110 = arith.constant 1 : index
    %c0_111 = arith.constant 0 : index
    %c0_112 = arith.constant 0 : index
    %253 = vector.load %arg13[%c1_110, %c0_111, %c0_112] : memref<4x128x128xbf16, #tpu.memory_space<vmem>>, vector<1x128x128xbf16>
    %254 = vector.shape_cast %253 : vector<1x128x128xbf16> to vector<128x128xbf16>
    %255 = arith.truncf %252 : vector<8x128xf32> to vector<8x128xbf16>
    %cst_113 = arith.constant dense<0.000000e+00> : vector<8x128xf32>
    %256 = tpu.matmul %255, %254, %cst_113 {dimension_numbers = #tpu.dot_dimension_numbers<[1], [0], [0], [1], [0, 0, 1, 1], [], []>} : vector<8x128xbf16>, vector<128x128xbf16>, vector<8x128xf32> -> vector<8x128xf32>
    %257 = arith.addf %210, %256 : vector<8x128xf32>
    %c1_114 = arith.constant 1 : index
    %c0_115 = arith.constant 0 : index
    %258 = vector.load %arg14[%c1_114, %c0_115] : memref<4x128xf32, #tpu.memory_space<vmem>>, vector<1x128xf32>
    %259 = vector.broadcast %258 : vector<1x128xf32> to vector<8x128xf32>
    %260 = arith.addf %257, %259 : vector<8x128xf32>
    %c2 = arith.constant 2 : index
    %c0_116 = arith.constant 0 : index
    %261 = vector.load %arg4[%c2, %c0_116] : memref<4x128xf32, #tpu.memory_space<vmem>>, vector<1x128xf32>
    %c2_117 = arith.constant 2 : index
    %c0_118 = arith.constant 0 : index
    %262 = vector.load %arg5[%c2_117, %c0_118] : memref<4x128xf32, #tpu.memory_space<vmem>>, vector<1x128xf32>
    %cst_119 = arith.constant dense<0.000000e+00> : vector<8xf32>
    %263 = vector.multi_reduction <add>, %260, %cst_119 [1] : vector<8x128xf32> to vector<8xf32>
    %264 = vector.shape_cast %263 : vector<8xf32> to vector<8x1xf32>
    %cst_120 = arith.constant 1.280000e+02 : f32
    %265 = vector.broadcast %cst_120 : f32 to vector<8x1xf32>
    %266 = arith.divf %264, %265 : vector<8x1xf32>
    %267 = vector.broadcast %266 : vector<8x1xf32> to vector<8x128xf32>
    %268 = arith.subf %260, %267 : vector<8x128xf32>
    %269 = arith.mulf %268, %268 : vector<8x128xf32>
    %cst_121 = arith.constant dense<0.000000e+00> : vector<8xf32>
    %270 = vector.multi_reduction <add>, %269, %cst_121 [1] : vector<8x128xf32> to vector<8xf32>
    %271 = vector.shape_cast %270 : vector<8xf32> to vector<8x1xf32>
    %cst_122 = arith.constant 1.280000e+02 : f32
    %272 = vector.broadcast %cst_122 : f32 to vector<8x1xf32>
    %273 = arith.divf %271, %272 : vector<8x1xf32>
    %cst_123 = arith.constant 9.99999974E-6 : f32
    %274 = vector.broadcast %cst_123 : f32 to vector<8x1xf32>
    %275 = arith.addf %273, %274 : vector<8x1xf32>
    %276 = math.rsqrt %275 : vector<8x1xf32>
    %277 = vector.broadcast %276 : vector<8x1xf32> to vector<8x128xf32>
    %278 = arith.mulf %268, %277 : vector<8x128xf32>
    %279 = vector.broadcast %261 : vector<1x128xf32> to vector<8x128xf32>
    %280 = arith.mulf %278, %279 : vector<8x128xf32>
    %281 = vector.broadcast %262 : vector<1x128xf32> to vector<8x128xf32>
    %282 = arith.addf %280, %281 : vector<8x128xf32>
    %283 = arith.truncf %282 : vector<8x128xf32> to vector<8x128xbf16>
    %c2_124 = arith.constant 2 : index
    %c0_125 = arith.constant 0 : index
    %c0_126 = arith.constant 0 : index
    %284 = vector.load %arg6[%c2_124, %c0_125, %c0_126] : memref<4x128x768xbf16, #tpu.memory_space<vmem>>, vector<1x128x768xbf16>
    %285 = vector.shape_cast %284 : vector<1x128x768xbf16> to vector<128x768xbf16>
    %cst_127 = arith.constant dense<0.000000e+00> : vector<8x768xf32>
    %286 = tpu.matmul %283, %285, %cst_127 {dimension_numbers = #tpu.dot_dimension_numbers<[1], [0], [0], [1], [0, 0, 1, 1], [], []>} : vector<8x128xbf16>, vector<128x768xbf16>, vector<8x768xf32> -> vector<8x768xf32>
    %287 = vector.extract_strided_slice %286 {offsets = [0, 0], sizes = [8, 128], strides = [1, 1]} : vector<8x768xf32> to vector<8x128xf32>
    %288 = arith.truncf %287 : vector<8x128xf32> to vector<8x128xbf16>
    %289 = vector.extract_strided_slice %286 {offsets = [0, 256], sizes = [8, 128], strides = [1, 1]} : vector<8x768xf32> to vector<8x128xf32>
    %290 = arith.truncf %289 : vector<8x128xf32> to vector<8x128xbf16>
    %291 = vector.extract_strided_slice %286 {offsets = [0, 512], sizes = [8, 128], strides = [1, 1]} : vector<8x768xf32> to vector<8x128xf32>
    %292 = arith.truncf %291 : vector<8x128xf32> to vector<8x128xbf16>
    %cst_128 = arith.constant dense<0.000000e+00> : vector<8x8xf32>
    %293 = tpu.matmul %288, %290, %cst_128 {dimension_numbers = #tpu.dot_dimension_numbers<[1], [1], [0], [0], [0, 0, 1, 0], [], []>} : vector<8x128xbf16>, vector<8x128xbf16>, vector<8x8xf32> -> vector<8x8xf32>
    %cst_129 = arith.constant dense<0xFF800000> : vector<8xf32>
    %294 = vector.multi_reduction <maximumf>, %293, %cst_129 [1] : vector<8x8xf32> to vector<8xf32>
    %295 = vector.shape_cast %294 : vector<8xf32> to vector<8x1xf32>
    %296 = vector.broadcast %295 : vector<8x1xf32> to vector<8x8xf32>
    %297 = arith.subf %293, %296 : vector<8x8xf32>
    %298 = math.exp %297 : vector<8x8xf32>
    %cst_130 = arith.constant dense<0.000000e+00> : vector<8xf32>
    %299 = vector.multi_reduction <add>, %298, %cst_130 [1] : vector<8x8xf32> to vector<8xf32>
    %300 = vector.shape_cast %299 : vector<8xf32> to vector<8x1xf32>
    %301 = tpu.reciprocal %300 {approx = true} : vector<8x1xf32> -> vector<8x1xf32>
    %302 = vector.broadcast %301 : vector<8x1xf32> to vector<8x8xf32>
    %303 = arith.mulf %298, %302 : vector<8x8xf32>
    %304 = arith.truncf %303 : vector<8x8xf32> to vector<8x8xbf16>
    %cst_131 = arith.constant dense<0.000000e+00> : vector<8x128xf32>
    %305 = tpu.matmul %304, %292, %cst_131 {dimension_numbers = #tpu.dot_dimension_numbers<[1], [0], [0], [1], [0, 0, 1, 1], [], []>} : vector<8x8xbf16>, vector<8x128xbf16>, vector<8x128xf32> -> vector<8x128xf32>
    %c2_132 = arith.constant 2 : index
    %c0_133 = arith.constant 0 : index
    %c0_134 = arith.constant 0 : index
    %306 = vector.load %arg7[%c2_132, %c0_133, %c0_134] : memref<4x256x128xbf16, #tpu.memory_space<vmem>>, vector<1x128x128xbf16>
    %307 = vector.shape_cast %306 : vector<1x128x128xbf16> to vector<128x128xbf16>
    %308 = arith.truncf %305 : vector<8x128xf32> to vector<8x128xbf16>
    %cst_135 = arith.constant dense<0.000000e+00> : vector<8x128xf32>
    %309 = tpu.matmul %308, %307, %cst_135 {dimension_numbers = #tpu.dot_dimension_numbers<[1], [0], [0], [1], [0, 0, 1, 1], [], []>} : vector<8x128xbf16>, vector<128x128xbf16>, vector<8x128xf32> -> vector<8x128xf32>
    %310 = arith.addf %260, %309 : vector<8x128xf32>
    %311 = vector.extract_strided_slice %286 {offsets = [0, 128], sizes = [8, 128], strides = [1, 1]} : vector<8x768xf32> to vector<8x128xf32>
    %312 = arith.truncf %311 : vector<8x128xf32> to vector<8x128xbf16>
    %313 = vector.extract_strided_slice %286 {offsets = [0, 384], sizes = [8, 128], strides = [1, 1]} : vector<8x768xf32> to vector<8x128xf32>
    %314 = arith.truncf %313 : vector<8x128xf32> to vector<8x128xbf16>
    %315 = vector.extract_strided_slice %286 {offsets = [0, 640], sizes = [8, 128], strides = [1, 1]} : vector<8x768xf32> to vector<8x128xf32>
    %316 = arith.truncf %315 : vector<8x128xf32> to vector<8x128xbf16>
    %cst_136 = arith.constant dense<0.000000e+00> : vector<8x8xf32>
    %317 = tpu.matmul %312, %314, %cst_136 {dimension_numbers = #tpu.dot_dimension_numbers<[1], [1], [0], [0], [0, 0, 1, 0], [], []>} : vector<8x128xbf16>, vector<8x128xbf16>, vector<8x8xf32> -> vector<8x8xf32>
    %cst_137 = arith.constant dense<0xFF800000> : vector<8xf32>
    %318 = vector.multi_reduction <maximumf>, %317, %cst_137 [1] : vector<8x8xf32> to vector<8xf32>
    %319 = vector.shape_cast %318 : vector<8xf32> to vector<8x1xf32>
    %320 = vector.broadcast %319 : vector<8x1xf32> to vector<8x8xf32>
    %321 = arith.subf %317, %320 : vector<8x8xf32>
    %322 = math.exp %321 : vector<8x8xf32>
    %cst_138 = arith.constant dense<0.000000e+00> : vector<8xf32>
    %323 = vector.multi_reduction <add>, %322, %cst_138 [1] : vector<8x8xf32> to vector<8xf32>
    %324 = vector.shape_cast %323 : vector<8xf32> to vector<8x1xf32>
    %325 = tpu.reciprocal %324 {approx = true} : vector<8x1xf32> -> vector<8x1xf32>
    %326 = vector.broadcast %325 : vector<8x1xf32> to vector<8x8xf32>
    %327 = arith.mulf %322, %326 : vector<8x8xf32>
    %328 = arith.truncf %327 : vector<8x8xf32> to vector<8x8xbf16>
    %cst_139 = arith.constant dense<0.000000e+00> : vector<8x128xf32>
    %329 = tpu.matmul %328, %316, %cst_139 {dimension_numbers = #tpu.dot_dimension_numbers<[1], [0], [0], [1], [0, 0, 1, 1], [], []>} : vector<8x8xbf16>, vector<8x128xbf16>, vector<8x128xf32> -> vector<8x128xf32>
    %c2_140 = arith.constant 2 : index
    %c128_141 = arith.constant 128 : index
    %c0_142 = arith.constant 0 : index
    %330 = vector.load %arg7[%c2_140, %c128_141, %c0_142] : memref<4x256x128xbf16, #tpu.memory_space<vmem>>, vector<1x128x128xbf16>
    %331 = vector.shape_cast %330 : vector<1x128x128xbf16> to vector<128x128xbf16>
    %332 = arith.truncf %329 : vector<8x128xf32> to vector<8x128xbf16>
    %cst_143 = arith.constant dense<0.000000e+00> : vector<8x128xf32>
    %333 = tpu.matmul %332, %331, %cst_143 {dimension_numbers = #tpu.dot_dimension_numbers<[1], [0], [0], [1], [0, 0, 1, 1], [], []>} : vector<8x128xbf16>, vector<128x128xbf16>, vector<8x128xf32> -> vector<8x128xf32>
    %334 = arith.addf %310, %333 : vector<8x128xf32>
    %c2_144 = arith.constant 2 : index
    %c0_145 = arith.constant 0 : index
    %335 = vector.load %arg8[%c2_144, %c0_145] : memref<4x128xf32, #tpu.memory_space<vmem>>, vector<1x128xf32>
    %336 = vector.broadcast %335 : vector<1x128xf32> to vector<8x128xf32>
    %337 = arith.addf %334, %336 : vector<8x128xf32>
    %c2_146 = arith.constant 2 : index
    %c0_147 = arith.constant 0 : index
    %338 = vector.load %arg9[%c2_146, %c0_147] : memref<4x128xf32, #tpu.memory_space<vmem>>, vector<1x128xf32>
    %c2_148 = arith.constant 2 : index
    %c0_149 = arith.constant 0 : index
    %339 = vector.load %arg10[%c2_148, %c0_149] : memref<4x128xf32, #tpu.memory_space<vmem>>, vector<1x128xf32>
    %cst_150 = arith.constant dense<0.000000e+00> : vector<8xf32>
    %340 = vector.multi_reduction <add>, %337, %cst_150 [1] : vector<8x128xf32> to vector<8xf32>
    %341 = vector.shape_cast %340 : vector<8xf32> to vector<8x1xf32>
    %cst_151 = arith.constant 1.280000e+02 : f32
    %342 = vector.broadcast %cst_151 : f32 to vector<8x1xf32>
    %343 = arith.divf %341, %342 : vector<8x1xf32>
    %344 = vector.broadcast %343 : vector<8x1xf32> to vector<8x128xf32>
    %345 = arith.subf %337, %344 : vector<8x128xf32>
    %346 = arith.mulf %345, %345 : vector<8x128xf32>
    %cst_152 = arith.constant dense<0.000000e+00> : vector<8xf32>
    %347 = vector.multi_reduction <add>, %346, %cst_152 [1] : vector<8x128xf32> to vector<8xf32>
    %348 = vector.shape_cast %347 : vector<8xf32> to vector<8x1xf32>
    %cst_153 = arith.constant 1.280000e+02 : f32
    %349 = vector.broadcast %cst_153 : f32 to vector<8x1xf32>
    %350 = arith.divf %348, %349 : vector<8x1xf32>
    %cst_154 = arith.constant 9.99999974E-6 : f32
    %351 = vector.broadcast %cst_154 : f32 to vector<8x1xf32>
    %352 = arith.addf %350, %351 : vector<8x1xf32>
    %353 = math.rsqrt %352 : vector<8x1xf32>
    %354 = vector.broadcast %353 : vector<8x1xf32> to vector<8x128xf32>
    %355 = arith.mulf %345, %354 : vector<8x128xf32>
    %356 = vector.broadcast %338 : vector<1x128xf32> to vector<8x128xf32>
    %357 = arith.mulf %355, %356 : vector<8x128xf32>
    %358 = vector.broadcast %339 : vector<1x128xf32> to vector<8x128xf32>
    %359 = arith.addf %357, %358 : vector<8x128xf32>
    %360 = arith.truncf %359 : vector<8x128xf32> to vector<8x128xbf16>
    %c2_155 = arith.constant 2 : index
    %c0_156 = arith.constant 0 : index
    %c0_157 = arith.constant 0 : index
    %361 = vector.load %arg11[%c2_155, %c0_156, %c0_157] : memref<4x128x128xbf16, #tpu.memory_space<vmem>>, vector<1x128x128xbf16>
    %362 = vector.shape_cast %361 : vector<1x128x128xbf16> to vector<128x128xbf16>
    %cst_158 = arith.constant dense<0.000000e+00> : vector<8x128xf32>
    %363 = tpu.matmul %360, %362, %cst_158 {dimension_numbers = #tpu.dot_dimension_numbers<[1], [0], [0], [1], [0, 0, 1, 1], [], []>} : vector<8x128xbf16>, vector<128x128xbf16>, vector<8x128xf32> -> vector<8x128xf32>
    %c2_159 = arith.constant 2 : index
    %c0_160 = arith.constant 0 : index
    %364 = vector.load %arg12[%c2_159, %c0_160] : memref<4x128xf32, #tpu.memory_space<vmem>>, vector<1x128xf32>
    %365 = vector.broadcast %364 : vector<1x128xf32> to vector<8x128xf32>
    %366 = arith.addf %363, %365 : vector<8x128xf32>
    %367 = arith.mulf %366, %366 : vector<8x128xf32>
    %368 = arith.mulf %366, %367 : vector<8x128xf32>
    %cst_161 = arith.constant 4.471500e-02 : f32
    %369 = vector.broadcast %cst_161 : f32 to vector<8x128xf32>
    %370 = arith.mulf %369, %368 : vector<8x128xf32>
    %371 = arith.addf %366, %370 : vector<8x128xf32>
    %cst_162 = arith.constant 0.797884583 : f32
    %372 = vector.broadcast %cst_162 : f32 to vector<8x128xf32>
    %373 = arith.mulf %372, %371 : vector<8x128xf32>
    %374 = math.tanh %373 : vector<8x128xf32>
    %cst_163 = arith.constant 1.000000e+00 : f32
    %375 = vector.broadcast %cst_163 : f32 to vector<8x128xf32>
    %376 = arith.addf %375, %374 : vector<8x128xf32>
    %cst_164 = arith.constant 5.000000e-01 : f32
    %377 = vector.broadcast %cst_164 : f32 to vector<8x128xf32>
    %378 = arith.mulf %377, %376 : vector<8x128xf32>
    %379 = arith.mulf %366, %378 : vector<8x128xf32>
    %c2_165 = arith.constant 2 : index
    %c0_166 = arith.constant 0 : index
    %c0_167 = arith.constant 0 : index
    %380 = vector.load %arg13[%c2_165, %c0_166, %c0_167] : memref<4x128x128xbf16, #tpu.memory_space<vmem>>, vector<1x128x128xbf16>
    %381 = vector.shape_cast %380 : vector<1x128x128xbf16> to vector<128x128xbf16>
    %382 = arith.truncf %379 : vector<8x128xf32> to vector<8x128xbf16>
    %cst_168 = arith.constant dense<0.000000e+00> : vector<8x128xf32>
    %383 = tpu.matmul %382, %381, %cst_168 {dimension_numbers = #tpu.dot_dimension_numbers<[1], [0], [0], [1], [0, 0, 1, 1], [], []>} : vector<8x128xbf16>, vector<128x128xbf16>, vector<8x128xf32> -> vector<8x128xf32>
    %384 = arith.addf %337, %383 : vector<8x128xf32>
    %c2_169 = arith.constant 2 : index
    %c0_170 = arith.constant 0 : index
    %385 = vector.load %arg14[%c2_169, %c0_170] : memref<4x128xf32, #tpu.memory_space<vmem>>, vector<1x128xf32>
    %386 = vector.broadcast %385 : vector<1x128xf32> to vector<8x128xf32>
    %387 = arith.addf %384, %386 : vector<8x128xf32>
    %c3 = arith.constant 3 : index
    %c0_171 = arith.constant 0 : index
    %388 = vector.load %arg4[%c3, %c0_171] : memref<4x128xf32, #tpu.memory_space<vmem>>, vector<1x128xf32>
    %c3_172 = arith.constant 3 : index
    %c0_173 = arith.constant 0 : index
    %389 = vector.load %arg5[%c3_172, %c0_173] : memref<4x128xf32, #tpu.memory_space<vmem>>, vector<1x128xf32>
    %cst_174 = arith.constant dense<0.000000e+00> : vector<8xf32>
    %390 = vector.multi_reduction <add>, %387, %cst_174 [1] : vector<8x128xf32> to vector<8xf32>
    %391 = vector.shape_cast %390 : vector<8xf32> to vector<8x1xf32>
    %cst_175 = arith.constant 1.280000e+02 : f32
    %392 = vector.broadcast %cst_175 : f32 to vector<8x1xf32>
    %393 = arith.divf %391, %392 : vector<8x1xf32>
    %394 = vector.broadcast %393 : vector<8x1xf32> to vector<8x128xf32>
    %395 = arith.subf %387, %394 : vector<8x128xf32>
    %396 = arith.mulf %395, %395 : vector<8x128xf32>
    %cst_176 = arith.constant dense<0.000000e+00> : vector<8xf32>
    %397 = vector.multi_reduction <add>, %396, %cst_176 [1] : vector<8x128xf32> to vector<8xf32>
    %398 = vector.shape_cast %397 : vector<8xf32> to vector<8x1xf32>
    %cst_177 = arith.constant 1.280000e+02 : f32
    %399 = vector.broadcast %cst_177 : f32 to vector<8x1xf32>
    %400 = arith.divf %398, %399 : vector<8x1xf32>
    %cst_178 = arith.constant 9.99999974E-6 : f32
    %401 = vector.broadcast %cst_178 : f32 to vector<8x1xf32>
    %402 = arith.addf %400, %401 : vector<8x1xf32>
    %403 = math.rsqrt %402 : vector<8x1xf32>
    %404 = vector.broadcast %403 : vector<8x1xf32> to vector<8x128xf32>
    %405 = arith.mulf %395, %404 : vector<8x128xf32>
    %406 = vector.broadcast %388 : vector<1x128xf32> to vector<8x128xf32>
    %407 = arith.mulf %405, %406 : vector<8x128xf32>
    %408 = vector.broadcast %389 : vector<1x128xf32> to vector<8x128xf32>
    %409 = arith.addf %407, %408 : vector<8x128xf32>
    %410 = arith.truncf %409 : vector<8x128xf32> to vector<8x128xbf16>
    %c3_179 = arith.constant 3 : index
    %c0_180 = arith.constant 0 : index
    %c0_181 = arith.constant 0 : index
    %411 = vector.load %arg6[%c3_179, %c0_180, %c0_181] : memref<4x128x768xbf16, #tpu.memory_space<vmem>>, vector<1x128x768xbf16>
    %412 = vector.shape_cast %411 : vector<1x128x768xbf16> to vector<128x768xbf16>
    %cst_182 = arith.constant dense<0.000000e+00> : vector<8x768xf32>
    %413 = tpu.matmul %410, %412, %cst_182 {dimension_numbers = #tpu.dot_dimension_numbers<[1], [0], [0], [1], [0, 0, 1, 1], [], []>} : vector<8x128xbf16>, vector<128x768xbf16>, vector<8x768xf32> -> vector<8x768xf32>
    %414 = vector.extract_strided_slice %413 {offsets = [0, 0], sizes = [8, 128], strides = [1, 1]} : vector<8x768xf32> to vector<8x128xf32>
    %415 = arith.truncf %414 : vector<8x128xf32> to vector<8x128xbf16>
    %416 = vector.extract_strided_slice %413 {offsets = [0, 256], sizes = [8, 128], strides = [1, 1]} : vector<8x768xf32> to vector<8x128xf32>
    %417 = arith.truncf %416 : vector<8x128xf32> to vector<8x128xbf16>
    %418 = vector.extract_strided_slice %413 {offsets = [0, 512], sizes = [8, 128], strides = [1, 1]} : vector<8x768xf32> to vector<8x128xf32>
    %419 = arith.truncf %418 : vector<8x128xf32> to vector<8x128xbf16>
    %cst_183 = arith.constant dense<0.000000e+00> : vector<8x8xf32>
    %420 = tpu.matmul %415, %417, %cst_183 {dimension_numbers = #tpu.dot_dimension_numbers<[1], [1], [0], [0], [0, 0, 1, 0], [], []>} : vector<8x128xbf16>, vector<8x128xbf16>, vector<8x8xf32> -> vector<8x8xf32>
    %cst_184 = arith.constant dense<0xFF800000> : vector<8xf32>
    %421 = vector.multi_reduction <maximumf>, %420, %cst_184 [1] : vector<8x8xf32> to vector<8xf32>
    %422 = vector.shape_cast %421 : vector<8xf32> to vector<8x1xf32>
    %423 = vector.broadcast %422 : vector<8x1xf32> to vector<8x8xf32>
    %424 = arith.subf %420, %423 : vector<8x8xf32>
    %425 = math.exp %424 : vector<8x8xf32>
    %cst_185 = arith.constant dense<0.000000e+00> : vector<8xf32>
    %426 = vector.multi_reduction <add>, %425, %cst_185 [1] : vector<8x8xf32> to vector<8xf32>
    %427 = vector.shape_cast %426 : vector<8xf32> to vector<8x1xf32>
    %428 = tpu.reciprocal %427 {approx = true} : vector<8x1xf32> -> vector<8x1xf32>
    %429 = vector.broadcast %428 : vector<8x1xf32> to vector<8x8xf32>
    %430 = arith.mulf %425, %429 : vector<8x8xf32>
    %431 = arith.truncf %430 : vector<8x8xf32> to vector<8x8xbf16>
    %cst_186 = arith.constant dense<0.000000e+00> : vector<8x128xf32>
    %432 = tpu.matmul %431, %419, %cst_186 {dimension_numbers = #tpu.dot_dimension_numbers<[1], [0], [0], [1], [0, 0, 1, 1], [], []>} : vector<8x8xbf16>, vector<8x128xbf16>, vector<8x128xf32> -> vector<8x128xf32>
    %c3_187 = arith.constant 3 : index
    %c0_188 = arith.constant 0 : index
    %c0_189 = arith.constant 0 : index
    %433 = vector.load %arg7[%c3_187, %c0_188, %c0_189] : memref<4x256x128xbf16, #tpu.memory_space<vmem>>, vector<1x128x128xbf16>
    %434 = vector.shape_cast %433 : vector<1x128x128xbf16> to vector<128x128xbf16>
    %435 = arith.truncf %432 : vector<8x128xf32> to vector<8x128xbf16>
    %cst_190 = arith.constant dense<0.000000e+00> : vector<8x128xf32>
    %436 = tpu.matmul %435, %434, %cst_190 {dimension_numbers = #tpu.dot_dimension_numbers<[1], [0], [0], [1], [0, 0, 1, 1], [], []>} : vector<8x128xbf16>, vector<128x128xbf16>, vector<8x128xf32> -> vector<8x128xf32>
    %437 = arith.addf %387, %436 : vector<8x128xf32>
    %438 = vector.extract_strided_slice %413 {offsets = [0, 128], sizes = [8, 128], strides = [1, 1]} : vector<8x768xf32> to vector<8x128xf32>
    %439 = arith.truncf %438 : vector<8x128xf32> to vector<8x128xbf16>
    %440 = vector.extract_strided_slice %413 {offsets = [0, 384], sizes = [8, 128], strides = [1, 1]} : vector<8x768xf32> to vector<8x128xf32>
    %441 = arith.truncf %440 : vector<8x128xf32> to vector<8x128xbf16>
    %442 = vector.extract_strided_slice %413 {offsets = [0, 640], sizes = [8, 128], strides = [1, 1]} : vector<8x768xf32> to vector<8x128xf32>
    %443 = arith.truncf %442 : vector<8x128xf32> to vector<8x128xbf16>
    %cst_191 = arith.constant dense<0.000000e+00> : vector<8x8xf32>
    %444 = tpu.matmul %439, %441, %cst_191 {dimension_numbers = #tpu.dot_dimension_numbers<[1], [1], [0], [0], [0, 0, 1, 0], [], []>} : vector<8x128xbf16>, vector<8x128xbf16>, vector<8x8xf32> -> vector<8x8xf32>
    %cst_192 = arith.constant dense<0xFF800000> : vector<8xf32>
    %445 = vector.multi_reduction <maximumf>, %444, %cst_192 [1] : vector<8x8xf32> to vector<8xf32>
    %446 = vector.shape_cast %445 : vector<8xf32> to vector<8x1xf32>
    %447 = vector.broadcast %446 : vector<8x1xf32> to vector<8x8xf32>
    %448 = arith.subf %444, %447 : vector<8x8xf32>
    %449 = math.exp %448 : vector<8x8xf32>
    %cst_193 = arith.constant dense<0.000000e+00> : vector<8xf32>
    %450 = vector.multi_reduction <add>, %449, %cst_193 [1] : vector<8x8xf32> to vector<8xf32>
    %451 = vector.shape_cast %450 : vector<8xf32> to vector<8x1xf32>
    %452 = tpu.reciprocal %451 {approx = true} : vector<8x1xf32> -> vector<8x1xf32>
    %453 = vector.broadcast %452 : vector<8x1xf32> to vector<8x8xf32>
    %454 = arith.mulf %449, %453 : vector<8x8xf32>
    %455 = arith.truncf %454 : vector<8x8xf32> to vector<8x8xbf16>
    %cst_194 = arith.constant dense<0.000000e+00> : vector<8x128xf32>
    %456 = tpu.matmul %455, %443, %cst_194 {dimension_numbers = #tpu.dot_dimension_numbers<[1], [0], [0], [1], [0, 0, 1, 1], [], []>} : vector<8x8xbf16>, vector<8x128xbf16>, vector<8x128xf32> -> vector<8x128xf32>
    %c3_195 = arith.constant 3 : index
    %c128_196 = arith.constant 128 : index
    %c0_197 = arith.constant 0 : index
    %457 = vector.load %arg7[%c3_195, %c128_196, %c0_197] : memref<4x256x128xbf16, #tpu.memory_space<vmem>>, vector<1x128x128xbf16>
    %458 = vector.shape_cast %457 : vector<1x128x128xbf16> to vector<128x128xbf16>
    %459 = arith.truncf %456 : vector<8x128xf32> to vector<8x128xbf16>
    %cst_198 = arith.constant dense<0.000000e+00> : vector<8x128xf32>
    %460 = tpu.matmul %459, %458, %cst_198 {dimension_numbers = #tpu.dot_dimension_numbers<[1], [0], [0], [1], [0, 0, 1, 1], [], []>} : vector<8x128xbf16>, vector<128x128xbf16>, vector<8x128xf32> -> vector<8x128xf32>
    %461 = arith.addf %437, %460 : vector<8x128xf32>
    %c3_199 = arith.constant 3 : index
    %c0_200 = arith.constant 0 : index
    %462 = vector.load %arg8[%c3_199, %c0_200] : memref<4x128xf32, #tpu.memory_space<vmem>>, vector<1x128xf32>
    %463 = vector.broadcast %462 : vector<1x128xf32> to vector<8x128xf32>
    %464 = arith.addf %461, %463 : vector<8x128xf32>
    %c3_201 = arith.constant 3 : index
    %c0_202 = arith.constant 0 : index
    %465 = vector.load %arg9[%c3_201, %c0_202] : memref<4x128xf32, #tpu.memory_space<vmem>>, vector<1x128xf32>
    %c3_203 = arith.constant 3 : index
    %c0_204 = arith.constant 0 : index
    %466 = vector.load %arg10[%c3_203, %c0_204] : memref<4x128xf32, #tpu.memory_space<vmem>>, vector<1x128xf32>
    %cst_205 = arith.constant dense<0.000000e+00> : vector<8xf32>
    %467 = vector.multi_reduction <add>, %464, %cst_205 [1] : vector<8x128xf32> to vector<8xf32>
    %468 = vector.shape_cast %467 : vector<8xf32> to vector<8x1xf32>
    %cst_206 = arith.constant 1.280000e+02 : f32
    %469 = vector.broadcast %cst_206 : f32 to vector<8x1xf32>
    %470 = arith.divf %468, %469 : vector<8x1xf32>
    %471 = vector.broadcast %470 : vector<8x1xf32> to vector<8x128xf32>
    %472 = arith.subf %464, %471 : vector<8x128xf32>
    %473 = arith.mulf %472, %472 : vector<8x128xf32>
    %cst_207 = arith.constant dense<0.000000e+00> : vector<8xf32>
    %474 = vector.multi_reduction <add>, %473, %cst_207 [1] : vector<8x128xf32> to vector<8xf32>
    %475 = vector.shape_cast %474 : vector<8xf32> to vector<8x1xf32>
    %cst_208 = arith.constant 1.280000e+02 : f32
    %476 = vector.broadcast %cst_208 : f32 to vector<8x1xf32>
    %477 = arith.divf %475, %476 : vector<8x1xf32>
    %cst_209 = arith.constant 9.99999974E-6 : f32
    %478 = vector.broadcast %cst_209 : f32 to vector<8x1xf32>
    %479 = arith.addf %477, %478 : vector<8x1xf32>
    %480 = math.rsqrt %479 : vector<8x1xf32>
    %481 = vector.broadcast %480 : vector<8x1xf32> to vector<8x128xf32>
    %482 = arith.mulf %472, %481 : vector<8x128xf32>
    %483 = vector.broadcast %465 : vector<1x128xf32> to vector<8x128xf32>
    %484 = arith.mulf %482, %483 : vector<8x128xf32>
    %485 = vector.broadcast %466 : vector<1x128xf32> to vector<8x128xf32>
    %486 = arith.addf %484, %485 : vector<8x128xf32>
    %487 = arith.truncf %486 : vector<8x128xf32> to vector<8x128xbf16>
    %c3_210 = arith.constant 3 : index
    %c0_211 = arith.constant 0 : index
    %c0_212 = arith.constant 0 : index
    %488 = vector.load %arg11[%c3_210, %c0_211, %c0_212] : memref<4x128x128xbf16, #tpu.memory_space<vmem>>, vector<1x128x128xbf16>
    %489 = vector.shape_cast %488 : vector<1x128x128xbf16> to vector<128x128xbf16>
    %cst_213 = arith.constant dense<0.000000e+00> : vector<8x128xf32>
    %490 = tpu.matmul %487, %489, %cst_213 {dimension_numbers = #tpu.dot_dimension_numbers<[1], [0], [0], [1], [0, 0, 1, 1], [], []>} : vector<8x128xbf16>, vector<128x128xbf16>, vector<8x128xf32> -> vector<8x128xf32>
    %c3_214 = arith.constant 3 : index
    %c0_215 = arith.constant 0 : index
    %491 = vector.load %arg12[%c3_214, %c0_215] : memref<4x128xf32, #tpu.memory_space<vmem>>, vector<1x128xf32>
    %492 = vector.broadcast %491 : vector<1x128xf32> to vector<8x128xf32>
    %493 = arith.addf %490, %492 : vector<8x128xf32>
    %494 = arith.mulf %493, %493 : vector<8x128xf32>
    %495 = arith.mulf %493, %494 : vector<8x128xf32>
    %cst_216 = arith.constant 4.471500e-02 : f32
    %496 = vector.broadcast %cst_216 : f32 to vector<8x128xf32>
    %497 = arith.mulf %496, %495 : vector<8x128xf32>
    %498 = arith.addf %493, %497 : vector<8x128xf32>
    %cst_217 = arith.constant 0.797884583 : f32
    %499 = vector.broadcast %cst_217 : f32 to vector<8x128xf32>
    %500 = arith.mulf %499, %498 : vector<8x128xf32>
    %501 = math.tanh %500 : vector<8x128xf32>
    %cst_218 = arith.constant 1.000000e+00 : f32
    %502 = vector.broadcast %cst_218 : f32 to vector<8x128xf32>
    %503 = arith.addf %502, %501 : vector<8x128xf32>
    %cst_219 = arith.constant 5.000000e-01 : f32
    %504 = vector.broadcast %cst_219 : f32 to vector<8x128xf32>
    %505 = arith.mulf %504, %503 : vector<8x128xf32>
    %506 = arith.mulf %493, %505 : vector<8x128xf32>
    %c3_220 = arith.constant 3 : index
    %c0_221 = arith.constant 0 : index
    %c0_222 = arith.constant 0 : index
    %507 = vector.load %arg13[%c3_220, %c0_221, %c0_222] : memref<4x128x128xbf16, #tpu.memory_space<vmem>>, vector<1x128x128xbf16>
    %508 = vector.shape_cast %507 : vector<1x128x128xbf16> to vector<128x128xbf16>
    %509 = arith.truncf %506 : vector<8x128xf32> to vector<8x128xbf16>
    %cst_223 = arith.constant dense<0.000000e+00> : vector<8x128xf32>
    %510 = tpu.matmul %509, %508, %cst_223 {dimension_numbers = #tpu.dot_dimension_numbers<[1], [0], [0], [1], [0, 0, 1, 1], [], []>} : vector<8x128xbf16>, vector<128x128xbf16>, vector<8x128xf32> -> vector<8x128xf32>
    %511 = arith.addf %464, %510 : vector<8x128xf32>
    %c3_224 = arith.constant 3 : index
    %c0_225 = arith.constant 0 : index
    %512 = vector.load %arg14[%c3_224, %c0_225] : memref<4x128xf32, #tpu.memory_space<vmem>>, vector<1x128xf32>
    %513 = vector.broadcast %512 : vector<1x128xf32> to vector<8x128xf32>
    %514 = arith.addf %511, %513 : vector<8x128xf32>
    %c0_226 = arith.constant 0 : index
    %c0_227 = arith.constant 0 : index
    %515 = vector.load %arg15[%c0_226, %c0_227] : memref<128x128xbf16, #tpu.memory_space<vmem>>, vector<128x128xbf16>
    %516 = arith.truncf %514 : vector<8x128xf32> to vector<8x128xbf16>
    %cst_228 = arith.constant dense<0.000000e+00> : vector<8x128xf32>
    %517 = tpu.matmul %516, %515, %cst_228 {dimension_numbers = #tpu.dot_dimension_numbers<[1], [0], [0], [1], [0, 0, 1, 1], [], []>} : vector<8x128xbf16>, vector<128x128xbf16>, vector<8x128xf32> -> vector<8x128xf32>
    %c0_229 = arith.constant 0 : index
    %c0_230 = arith.constant 0 : index
    %518 = vector.load %arg16[%c0_229, %c0_230] : memref<1x128xf32, #tpu.memory_space<vmem>>, vector<1x128xf32>
    %519 = vector.broadcast %518 : vector<1x128xf32> to vector<8x128xf32>
    %520 = arith.addf %517, %519 : vector<8x128xf32>
    %c0_231 = arith.constant 0 : index
    %c0_232 = arith.constant 0 : index
    %c0_233 = arith.constant 0 : index
    %521 = vector.load %arg17[%c0_231, %c0_232, %c0_233] : memref<1x8x128xf32, #tpu.memory_space<vmem>>, vector<1x8x128xf32>
    %522 = vector.shape_cast %521 : vector<1x8x128xf32> to vector<8x128xf32>
    %523 = vector.shape_cast %520 : vector<8x128xf32> to vector<1x8x128xf32>
    tpu.vector_store %arg17[%c0_231, %c0_232, %c0_233], %523 {strides = array<i32>} : memref<1x8x128xf32, #tpu.memory_space<vmem>>, vector<1x8x128xf32>,
    return
  }
  func.func @transform_0(%arg0: i32) -> (i32, i32, i32) {
    %c0_i32 = arith.constant 0 : i32
    %c0_i32_0 = arith.constant 0 : i32
    %c0_i32_1 = arith.constant 0 : i32
    return %arg0, %c0_i32, %c0_i32_0 : i32, i32, i32
  }
  func.func @transform_1(%arg0: i32) -> (i32, i32) {
    %c0_i32 = arith.constant 0 : i32
    %c0_i32_0 = arith.constant 0 : i32
    %c0_i32_1 = arith.constant 0 : i32
    return %c0_i32, %c0_i32_0 : i32, i32
  }
  func.func @transform_2(%arg0: i32) -> (i32, i32) {
    %c0_i32 = arith.constant 0 : i32
    %c0_i32_0 = arith.constant 0 : i32
    %c0_i32_1 = arith.constant 0 : i32
    return %c0_i32, %c0_i32_0 : i32, i32
  }
  func.func @transform_3(%arg0: i32) -> (i32, i32) {
    %c0_i32 = arith.constant 0 : i32
    %c0_i32_0 = arith.constant 0 : i32
    %c0_i32_1 = arith.constant 0 : i32
    return %c0_i32, %c0_i32_0 : i32, i32
  }
  func.func @transform_4(%arg0: i32) -> (i32, i32) {
    %c0_i32 = arith.constant 0 : i32
    %c0_i32_0 = arith.constant 0 : i32
    %c0_i32_1 = arith.constant 0 : i32
    return %c0_i32, %c0_i32_0 : i32, i32
  }
  func.func @transform_5(%arg0: i32) -> (i32, i32, i32) {
    %c0_i32 = arith.constant 0 : i32
    %c0_i32_0 = arith.constant 0 : i32
    %c0_i32_1 = arith.constant 0 : i32
    %c0_i32_2 = arith.constant 0 : i32
    return %c0_i32, %c0_i32_0, %c0_i32_1 : i32, i32, i32
  }
  func.func @transform_6(%arg0: i32) -> (i32, i32, i32) {
    %c0_i32 = arith.constant 0 : i32
    %c0_i32_0 = arith.constant 0 : i32
    %c0_i32_1 = arith.constant 0 : i32
    %c0_i32_2 = arith.constant 0 : i32
    return %c0_i32, %c0_i32_0, %c0_i32_1 : i32, i32, i32
  }
  func.func @transform_7(%arg0: i32) -> (i32, i32) {
    %c0_i32 = arith.constant 0 : i32
    %c0_i32_0 = arith.constant 0 : i32
    %c0_i32_1 = arith.constant 0 : i32
    return %c0_i32, %c0_i32_0 : i32, i32
  }
  func.func @transform_8(%arg0: i32) -> (i32, i32) {
    %c0_i32 = arith.constant 0 : i32
    %c0_i32_0 = arith.constant 0 : i32
    %c0_i32_1 = arith.constant 0 : i32
    return %c0_i32, %c0_i32_0 : i32, i32
  }
  func.func @transform_9(%arg0: i32) -> (i32, i32) {
    %c0_i32 = arith.constant 0 : i32
    %c0_i32_0 = arith.constant 0 : i32
    %c0_i32_1 = arith.constant 0 : i32
    return %c0_i32, %c0_i32_0 : i32, i32
  }
  func.func @transform_10(%arg0: i32) -> (i32, i32, i32) {
    %c0_i32 = arith.constant 0 : i32
    %c0_i32_0 = arith.constant 0 : i32
    %c0_i32_1 = arith.constant 0 : i32
    %c0_i32_2 = arith.constant 0 : i32
    return %c0_i32, %c0_i32_0, %c0_i32_1 : i32, i32, i32
  }
  func.func @transform_11(%arg0: i32) -> (i32, i32) {
    %c0_i32 = arith.constant 0 : i32
    %c0_i32_0 = arith.constant 0 : i32
    %c0_i32_1 = arith.constant 0 : i32
    return %c0_i32, %c0_i32_0 : i32, i32
  }
  func.func @transform_12(%arg0: i32) -> (i32, i32, i32) {
    %c0_i32 = arith.constant 0 : i32
    %c0_i32_0 = arith.constant 0 : i32
    %c0_i32_1 = arith.constant 0 : i32
    %c0_i32_2 = arith.constant 0 : i32
    return %c0_i32, %c0_i32_0, %c0_i32_1 : i32, i32, i32
  }
  func.func @transform_13(%arg0: i32) -> (i32, i32) {
    %c0_i32 = arith.constant 0 : i32
    %c0_i32_0 = arith.constant 0 : i32
    %c0_i32_1 = arith.constant 0 : i32
    return %c0_i32, %c0_i32_0 : i32, i32
  }
  func.func @transform_14(%arg0: i32) -> (i32, i32) {
    %c0_i32 = arith.constant 0 : i32
    %c0_i32_0 = arith.constant 0 : i32
    %c0_i32_1 = arith.constant 0 : i32
    return %c0_i32, %c0_i32_0 : i32, i32
  }
  func.func @transform_15(%arg0: i32) -> (i32, i32) {
    %c0_i32 = arith.constant 0 : i32
    %c0_i32_0 = arith.constant 0 : i32
    %c0_i32_1 = arith.constant 0 : i32
    return %c0_i32, %c0_i32_0 : i32, i32
  }
  func.func @transform_16(%arg0: i32) -> (i32, i32, i32) {
    %c0_i32 = arith.constant 0 : i32
    %c0_i32_0 = arith.constant 0 : i32
    %c0_i32_1 = arith.constant 0 : i32
    return %arg0, %c0_i32, %c0_i32_0 : i32, i32, i32
  }
}

</mosaic_0001>

<llo_original>
// kernel: tdiscriminator_forward.1
$region0: #{tdiscriminator_forward.1}
  #allocation0 [shape = 'u32[]', space=smem, size = 0x4, offset = 0x4, fixed_abs, tag = 'smem constant byte address 0x4 - core index']
  #allocation1 [shape = 'u32[72,128]{1,0:T(1,128)}', space=vmem, size = 0x9000, scoped, tag = 'internal scratch']
  %s0 = inlined_call_operand.vmem [shape: bf16[2,8,768], index: 0, kind: input, shape index: {}]
  %s1 = inlined_call_operand.hbm [shape: bf16[768,128], index: 1, kind: input, shape index: {}]
  %s2 = inlined_call_operand.vmem [shape: f32[1,128], index: 2, kind: input, shape index: {}]
  %s3 = inlined_call_operand.vmem [shape: f32[4,128], index: 3, kind: input, shape index: {}]
  %s4 = inlined_call_operand.vmem [shape: f32[4,128], index: 4, kind: input, shape index: {}]
  %s5 = inlined_call_operand.hbm [shape: bf16[4,128,768], index: 5, kind: input, shape index: {}]
  %s6 = inlined_call_operand.hbm [shape: bf16[4,256,128], index: 6, kind: input, shape index: {}]
  %s7 = inlined_call_operand.vmem [shape: f32[4,128], index: 7, kind: input, shape index: {}]
  %s8 = inlined_call_operand.vmem [shape: f32[4,128], index: 8, kind: input, shape index: {}]
  %s9 = inlined_call_operand.vmem [shape: f32[4,128], index: 9, kind: input, shape index: {}]
  %s10 = inlined_call_operand.hbm [shape: bf16[4,128,128], index: 10, kind: input, shape index: {}]
  %s11 = inlined_call_operand.vmem [shape: f32[4,128], index: 11, kind: input, shape index: {}]
  %s12 = inlined_call_operand.hbm [shape: bf16[4,128,128], index: 12, kind: input, shape index: {}]
  %s13 = inlined_call_operand.vmem [shape: f32[4,128], index: 13, kind: input, shape index: {}]
  %s14 = inlined_call_operand.vmem [shape: bf16[128,128], index: 14, kind: input, shape index: {}]
  %s15 = inlined_call_operand.vmem [shape: f32[1,128], index: 15, kind: input, shape index: {}]
  %s16 = inlined_call_operand.vmem [shape: f32[2,8,128], index: 16, kind: output, shape index: {}]
  %s17 = sld [smem:[#allocation0]]
  $region117: #{tdiscriminator_forward.1} parent=0
    _
  %s19 = ssub.s32 1, %s17
  %s20 = scalar_select 0, %s19, %s17
  $region1: #{tdiscriminator_forward.1} parent=0
    #allocation2 [shape = 'u8[196608]{0}', space=vmem, size = 0x30000, scoped, tag = 'input window, operand 1, single buffered']
    #allocation3 [shape = 's32[2]{0}', space=sflag, size = 0x8, scoped, tag = 'scoped memory for tdiscriminator_forward.1']
    #allocation4 [shape = 'u8[786432]{0}', space=vmem, size = 0xc0000, scoped, tag = 'input window, operand 5, single buffered']
    #allocation5 [shape = 's32[1]{0}', space=sflag, size = 0x4, scoped, tag = 'scoped memory for tdiscriminator_forward.1']
    #allocation6 [shape = 'u8[262144]{0}', space=vmem, size = 0x40000, scoped, tag = 'input window, operand 6, single buffered']
    #allocation7 [shape = 'u8[131072]{0}', space=vmem, size = 0x20000, scoped, tag = 'input window, operand 10, single buffered']
    #allocation8 [shape = 's32[1]{0}', space=sflag, size = 0x4, scoped, tag = 'scoped memory for tdiscriminator_forward.1']
    #allocation9 [shape = 'u8[131072]{0}', space=vmem, size = 0x20000, scoped, tag = 'input window, operand 12, single buffered']
    %21 = vsyncpa [#allocation3], 0
    %22 = vsyncpa [#allocation5], 0
    %23 = vsyncpa [#allocation8], 0
    loop: start=0, step=1, limit=4
    $region2: #{tdiscriminator_forward.1} parent=1 // loop_pre_header
      _
    $region3: #{tdiscriminator_forward.1} parent=1 // loop_header
      %s25 = sphi 0, %s29
      %p26 = scmp.ge.s32.totalorder %s25, 4
      %s35 = sphi 0, %s37
      %s38 = sphi 0, %s35
      %s39 = sphi 0, %s38
      %s55 = sphi 0, %s39
      %s59 = sphi 0, %s59
      %s61 = sphi 0, %s59
      %s62 = sphi 0, %s61
      %s76 = sphi 0, %s62
      %s80 = sphi 0, %s80
      %s82 = sphi 0, %s80
      %s83 = sphi 0, %s82
      %s97 = sphi 0, %s83
      %s101 = sphi 0, %s101
      %s103 = sphi 0, %s101
      %s104 = sphi 0, %s103
      %s118 = sphi 0, %s104
      %s122 = sphi 0, %s122
      %s124 = sphi 0, %s122
      %s125 = sphi 0, %s124
      %s139 = sphi 0, %s125
      %s143 = sphi 0, %s143
      %s145 = sphi 0, %s143
      %s146 = sphi 0, %s145
      %s160 = sphi 0, %s146
      %s164 = sphi 0, %s164
      %s166 = sphi 0, %s164
      %s167 = sphi 0, %s166
      %s181 = sphi 0, %s167
      %s185 = sphi 0, %s185
      %s187 = sphi 0, %s185
      %s188 = sphi 0, %s187
      %s202 = sphi 0, %s188
      %s206 = sphi 0, %s206
      %s208 = sphi 0, %s206
      %s209 = sphi 0, %s208
      %s223 = sphi 0, %s209
      %s227 = sphi 0, %s227
      %s229 = sphi 0, %s227
      %s230 = sphi 0, %s229
      %s244 = sphi 0, %s230
      %s248 = sphi 0, %s248
      %s250 = sphi 0, %s248
      %s251 = sphi 0, %s250
      %s265 = sphi 0, %s251
      %s269 = sphi 0, %s269
      %s271 = sphi 0, %s269
      %s272 = sphi 0, %s271
      %s286 = sphi 0, %s272
      %s290 = sphi 0, %s290
      %s292 = sphi 0, %s290
      %s293 = sphi 0, %s292
      %s307 = sphi 0, %s293
      %s311 = sphi 0, %s311
      %s313 = sphi 0, %s311
      %s314 = sphi 0, %s313
      %s328 = sphi 0, %s314
      %s332 = sphi 0, %s332
      %s334 = sphi 0, %s332
      %s335 = sphi 0, %s334
      %s349 = sphi 0, %s335
      %s353 = sphi 0, %s353
      %s355 = sphi 0, %s353
      %s356 = sphi 0, %s355
      %s370 = sphi 0, %s356
      %s376 = sphi 0, %s378
      %s379 = sphi 0, %s376
      %s380 = sphi 0, %s379
      %s396 = sphi 0, %s380
    $region4: #{tdiscriminator_forward.1} parent=1 // loop_header_branch
      %28 = sbr.rel (%p26) target = $region8
    $region5: #{tdiscriminator_forward.1} parent=1 // loop_body
      %s30 = ssub.s32 %s25, 1
      %s31 = ssub.s32 %s25, 2
      %s32 = sadd.s32 %s25, 1
      %s33 = ssub.s32 %s25, %s32
      %p34 = scmp.eq.s32.totalorder %s33, 0
      %s36 = sadd.s32 %s35, 1
      %s37 = scalar_select %p34, %s35, %s36
      %p40 = pneg %p34
      %p41 = scmp.eq.s32.totalorder %s25, 1
      %p42 = por %p40, %p41
      %p43 = scmp.ne.s32.totalorder %s35, %s38
      %p44 = scmp.eq.s32.totalorder %s25, 0
      %p45 = por %p43, %p44
      %p46 = scmp.ne.s32.totalorder %s35, %s38
      %p47 = scmp.eq.s32.totalorder %s30, 1
      %p48 = por %p46, %p47
      %p49 = scmp.ne.s32.totalorder %s38, %s39
      %p50 = scmp.eq.s32.totalorder %s30, 0
      %p51 = por %p49, %p50
      %p52 = scmp.ne.s32.totalorder %s38, %s39
      %p53 = scmp.eq.s32.totalorder %s31, 1
      %p54 = por %p52, %p53
      %p56 = scmp.ne.s32.totalorder %s39, %s55
      %p57 = scmp.eq.s32.totalorder %s31, 0
      %p58 = por %p56, %p57
      %s60 = sadd.s32 %s59, 1
      %p63 = scmp.eq.s32.totalorder %s25, 1
      %p64 = scmp.ne.s32.totalorder %s59, %s61
      %p65 = scmp.eq.s32.totalorder %s25, 0
      %p66 = por %p64, %p65
      %p67 = scmp.ne.s32.totalorder %s59, %s61
      %p68 = scmp.eq.s32.totalorder %s30, 1
      %p69 = por %p67, %p68
      %p70 = scmp.ne.s32.totalorder %s61, %s62
      %p71 = scmp.eq.s32.totalorder %s30, 0
      %p72 = por %p70, %p71
      %p73 = scmp.ne.s32.totalorder %s61, %s62
      %p74 = scmp.eq.s32.totalorder %s31, 1
      %p75 = por %p73, %p74
      %p77 = scmp.ne.s32.totalorder %s62, %s76
      %p78 = scmp.eq.s32.totalorder %s31, 0
      %p79 = por %p77, %p78
      %s81 = sadd.s32 %s80, 1
      %p84 = scmp.eq.s32.totalorder %s25, 1
      %p85 = scmp.ne.s32.totalorder %s80, %s82
      %p86 = scmp.eq.s32.totalorder %s25, 0
      %p87 = por %p85, %p86
      %p88 = scmp.ne.s32.totalorder %s80, %s82
      %p89 = scmp.eq.s32.totalorder %s30, 1
      %p90 = por %p88, %p89
      %p91 = scmp.ne.s32.totalorder %s82, %s83
      %p92 = scmp.eq.s32.totalorder %s30, 0
      %p93 = por %p91, %p92
      %p94 = scmp.ne.s32.totalorder %s82, %s83
      %p95 = scmp.eq.s32.totalorder %s31, 1
      %p96 = por %p94, %p95
      %p98 = scmp.ne.s32.totalorder %s83, %s97
      %p99 = scmp.eq.s32.totalorder %s31, 0
      %p100 = por %p98, %p99
      %s102 = sadd.s32 %s101, 1
      %p105 = scmp.eq.s32.totalorder %s25, 1
      %p106 = scmp.ne.s32.totalorder %s101, %s103
      %p107 = scmp.eq.s32.totalorder %s25, 0
      %p108 = por %p106, %p107
      %p109 = scmp.ne.s32.totalorder %s101, %s103
      %p110 = scmp.eq.s32.totalorder %s30, 1
      %p111 = por %p109, %p110
      %p112 = scmp.ne.s32.totalorder %s103, %s104
      %p113 = scmp.eq.s32.totalorder %s30, 0
      %p114 = por %p112, %p113
      %p115 = scmp.ne.s32.totalorder %s103, %s104
      %p116 = scmp.eq.s32.totalorder %s31, 1
      %p117 = por %p115, %p116
      %p119 = scmp.ne.s32.totalorder %s104, %s118
      %p120 = scmp.eq.s32.totalorder %s31, 0
      %p121 = por %p119, %p120
      %s123 = sadd.s32 %s122, 1
      %p126 = scmp.eq.s32.totalorder %s25, 1
      %p127 = scmp.ne.s32.totalorder %s122, %s124
      %p128 = scmp.eq.s32.totalorder %s25, 0
      %p129 = por %p127, %p128
      %p130 = scmp.ne.s32.totalorder %s122, %s124
      %p131 = scmp.eq.s32.totalorder %s30, 1
      %p132 = por %p130, %p131
      %p133 = scmp.ne.s32.totalorder %s124, %s125
      %p134 = scmp.eq.s32.totalorder %s30, 0
      %p135 = por %p133, %p134
      %p136 = scmp.ne.s32.totalorder %s124, %s125
      %p137 = scmp.eq.s32.totalorder %s31, 1
      %p138 = por %p136, %p137
      %p140 = scmp.ne.s32.totalorder %s125, %s139
      %p141 = scmp.eq.s32.totalorder %s31, 0
      %p142 = por %p140, %p141
      %s144 = sadd.s32 %s143, 1
      %p147 = scmp.eq.s32.totalorder %s25, 1
      %p148 = scmp.ne.s32.totalorder %s143, %s145
      %p149 = scmp.eq.s32.totalorder %s25, 0
      %p150 = por %p148, %p149
      %p151 = scmp.ne.s32.totalorder %s143, %s145
      %p152 = scmp.eq.s32.totalorder %s30, 1
      %p153 = por %p151, %p152
      %p154 = scmp.ne.s32.totalorder %s145, %s146
      %p155 = scmp.eq.s32.totalorder %s30, 0
      %p156 = por %p154, %p155
      %p157 = scmp.ne.s32.totalorder %s145, %s146
      %p158 = scmp.eq.s32.totalorder %s31, 1
      %p159 = por %p157, %p158
      %p161 = scmp.ne.s32.totalorder %s146, %s160
      %p162 = scmp.eq.s32.totalorder %s31, 0
      %p163 = por %p161, %p162
      %s165 = sadd.s32 %s164, 1
      %p168 = scmp.eq.s32.totalorder %s25, 1
      %p169 = scmp.ne.s32.totalorder %s164, %s166
      %p170 = scmp.eq.s32.totalorder %s25, 0
      %p171 = por %p169, %p170
      %p172 = scmp.ne.s32.totalorder %s164, %s166
      %p173 = scmp.eq.s32.totalorder %s30, 1
      %p174 = por %p172, %p173
      %p175 = scmp.ne.s32.totalorder %s166, %s167
      %p176 = scmp.eq.s32.totalorder %s30, 0
      %p177 = por %p175, %p176
      %p178 = scmp.ne.s32.totalorder %s166, %s167
      %p179 = scmp.eq.s32.totalorder %s31, 1
      %p180 = por %p178, %p179
      %p182 = scmp.ne.s32.totalorder %s167, %s181
      %p183 = scmp.eq.s32.totalorder %s31, 0
      %p184 = por %p182, %p183
      %s186 = sadd.s32 %s185, 1
      %p189 = scmp.eq.s32.totalorder %s25, 1
      %p190 = scmp.ne.s32.totalorder %s185, %s187
      %p191 = scmp.eq.s32.totalorder %s25, 0
      %p192 = por %p190, %p191
      %p193 = scmp.ne.s32.totalorder %s185, %s187
      %p194 = scmp.eq.s32.totalorder %s30, 1
      %p195 = por %p193, %p194
      %p196 = scmp.ne.s32.totalorder %s187, %s188
      %p197 = scmp.eq.s32.totalorder %s30, 0
      %p198 = por %p196, %p197
      %p199 = scmp.ne.s32.totalorder %s187, %s188
      %p200 = scmp.eq.s32.totalorder %s31, 1
      %p201 = por %p199, %p200
      %p203 = scmp.ne.s32.totalorder %s188, %s202
      %p204 = scmp.eq.s32.totalorder %s31, 0
      %p205 = por %p203, %p204
      %s207 = sadd.s32 %s206, 1
      %p210 = scmp.eq.s32.totalorder %s25, 1
      %p211 = scmp.ne.s32.totalorder %s206, %s208
      %p212 = scmp.eq.s32.totalorder %s25, 0
      %p213 = por %p211, %p212
      %p214 = scmp.ne.s32.totalorder %s206, %s208
      %p215 = scmp.eq.s32.totalorder %s30, 1
      %p216 = por %p214, %p215
      %p217 = scmp.ne.s32.totalorder %s208, %s209
      %p218 = scmp.eq.s32.totalorder %s30, 0
      %p219 = por %p217, %p218
      %p220 = scmp.ne.s32.totalorder %s208, %s209
      %p221 = scmp.eq.s32.totalorder %s31, 1
      %p222 = por %p220, %p221
      %p224 = scmp.ne.s32.totalorder %s209, %s223
      %p225 = scmp.eq.s32.totalorder %s31, 0
      %p226 = por %p224, %p225
      %s228 = sadd.s32 %s227, 1
      %p231 = scmp.eq.s32.totalorder %s25, 1
      %p232 = scmp.ne.s32.totalorder %s227, %s229
      %p233 = scmp.eq.s32.totalorder %s25, 0
      %p234 = por %p232, %p233
      %p235 = scmp.ne.s32.totalorder %s227, %s229
      %p236 = scmp.eq.s32.totalorder %s30, 1
      %p237 = por %p235, %p236
      %p238 = scmp.ne.s32.totalorder %s229, %s230
      %p239 = scmp.eq.s32.totalorder %s30, 0
      %p240 = por %p238, %p239
      %p241 = scmp.ne.s32.totalorder %s229, %s230
      %p242 = scmp.eq.s32.totalorder %s31, 1
      %p243 = por %p241, %p242
      %p245 = scmp.ne.s32.totalorder %s230, %s244
      %p246 = scmp.eq.s32.totalorder %s31, 0
      %p247 = por %p245, %p246
      %s249 = sadd.s32 %s248, 1
      %p252 = scmp.eq.s32.totalorder %s25, 1
      %p253 = scmp.ne.s32.totalorder %s248, %s250
      %p254 = scmp.eq.s32.totalorder %s25, 0
      %p255 = por %p253, %p254
      %p256 = scmp.ne.s32.totalorder %s248, %s250
      %p257 = scmp.eq.s32.totalorder %s30, 1
      %p258 = por %p256, %p257
      %p259 = scmp.ne.s32.totalorder %s250, %s251
      %p260 = scmp.eq.s32.totalorder %s30, 0
      %p261 = por %p259, %p260
      %p262 = scmp.ne.s32.totalorder %s250, %s251
      %p263 = scmp.eq.s32.totalorder %s31, 1
      %p264 = por %p262, %p263
      %p266 = scmp.ne.s32.totalorder %s251, %s265
      %p267 = scmp.eq.s32.totalorder %s31, 0
      %p268 = por %p266, %p267
      %s270 = sadd.s32 %s269, 1
      %p273 = scmp.eq.s32.totalorder %s25, 1
      %p274 = scmp.ne.s32.totalorder %s269, %s271
      %p275 = scmp.eq.s32.totalorder %s25, 0
      %p276 = por %p274, %p275
      %p277 = scmp.ne.s32.totalorder %s269, %s271
      %p278 = scmp.eq.s32.totalorder %s30, 1
      %p279 = por %p277, %p278
      %p280 = scmp.ne.s32.totalorder %s271, %s272
      %p281 = scmp.eq.s32.totalorder %s30, 0
      %p282 = por %p280, %p281
      %p283 = scmp.ne.s32.totalorder %s271, %s272
      %p284 = scmp.eq.s32.totalorder %s31, 1
      %p285 = por %p283, %p284
      %p287 = scmp.ne.s32.totalorder %s272, %s286
      %p288 = scmp.eq.s32.totalorder %s31, 0
      %p289 = por %p287, %p288
      %s291 = sadd.s32 %s290, 1
      %p294 = scmp.eq.s32.totalorder %s25, 1
      %p295 = scmp.ne.s32.totalorder %s290, %s292
      %p296 = scmp.eq.s32.totalorder %s25, 0
      %p297 = por %p295, %p296
      %p298 = scmp.ne.s32.totalorder %s290, %s292
      %p299 = scmp.eq.s32.totalorder %s30, 1
      %p300 = por %p298, %p299
      %p301 = scmp.ne.s32.totalorder %s292, %s293
      %p302 = scmp.eq.s32.totalorder %s30, 0
      %p303 = por %p301, %p302
      %p304 = scmp.ne.s32.totalorder %s292, %s293
      %p305 = scmp.eq.s32.totalorder %s31, 1
      %p306 = por %p304, %p305
      %p308 = scmp.ne.s32.totalorder %s293, %s307
      %p309 = scmp.eq.s32.totalorder %s31, 0
      %p310 = por %p308, %p309
      %s312 = sadd.s32 %s311, 1
      %p315 = scmp.eq.s32.totalorder %s25, 1
      %p316 = scmp.ne.s32.totalorder %s311, %s313
      %p317 = scmp.eq.s32.totalorder %s25, 0
      %p318 = por %p316, %p317
      %p319 = scmp.ne.s32.totalorder %s311, %s313
      %p320 = scmp.eq.s32.totalorder %s30, 1
      %p321 = por %p319, %p320
      %p322 = scmp.ne.s32.totalorder %s313, %s314
      %p323 = scmp.eq.s32.totalorder %s30, 0
      %p324 = por %p322, %p323
      %p325 = scmp.ne.s32.totalorder %s313, %s314
      %p326 = scmp.eq.s32.totalorder %s31, 1
      %p327 = por %p325, %p326
      %p329 = scmp.ne.s32.totalorder %s314, %s328
      %p330 = scmp.eq.s32.totalorder %s31, 0
      %p331 = por %p329, %p330
      %s333 = sadd.s32 %s332, 1
      %p336 = scmp.eq.s32.totalorder %s25, 1
      %p337 = scmp.ne.s32.totalorder %s332, %s334
      %p338 = scmp.eq.s32.totalorder %s25, 0
      %p339 = por %p337, %p338
      %p340 = scmp.ne.s32.totalorder %s332, %s334
      %p341 = scmp.eq.s32.totalorder %s30, 1
      %p342 = por %p340, %p341
      %p343 = scmp.ne.s32.totalorder %s334, %s335
      %p344 = scmp.eq.s32.totalorder %s30, 0
      %p345 = por %p343, %p344
      %p346 = scmp.ne.s32.totalorder %s334, %s335
      %p347 = scmp.eq.s32.totalorder %s31, 1
      %p348 = por %p346, %p347
      %p350 = scmp.ne.s32.totalorder %s335, %s349
      %p351 = scmp.eq.s32.totalorder %s31, 0
      %p352 = por %p350, %p351
      %s354 = sadd.s32 %s353, 1
      %p357 = scmp.eq.s32.totalorder %s25, 1
      %p358 = scmp.ne.s32.totalorder %s353, %s355
      %p359 = scmp.eq.s32.totalorder %s25, 0
      %p360 = por %p358, %p359
      %p361 = scmp.ne.s32.totalorder %s353, %s355
      %p362 = scmp.eq.s32.totalorder %s30, 1
      %p363 = por %p361, %p362
      %p364 = scmp.ne.s32.totalorder %s355, %s356
      %p365 = scmp.eq.s32.totalorder %s30, 0
      %p366 = por %p364, %p365
      %p367 = scmp.ne.s32.totalorder %s355, %s356
      %p368 = scmp.eq.s32.totalorder %s31, 1
      %p369 = por %p367, %p368
      %p371 = scmp.ne.s32.totalorder %s356, %s370
      %p372 = scmp.eq.s32.totalorder %s31, 0
      %p373 = por %p371, %p372
      %s374 = ssub.s32 %s25, %s32
      %p375 = scmp.eq.s32.totalorder %s374, 0
      %s377 = sadd.s32 %s376, 1
      %s378 = scalar_select %p375, %s376, %s377
      %p381 = pneg %p375
      %p382 = scmp.eq.s32.totalorder %s25, 1
      %p383 = por %p381, %p382
      %p384 = scmp.ne.s32.totalorder %s376, %s379
      %p385 = scmp.eq.s32.totalorder %s25, 0
      %p386 = por %p384, %p385
      %p387 = scmp.ne.s32.totalorder %s376, %s379
      %p388 = scmp.eq.s32.totalorder %s30, 1
      %p389 = por %p387, %p388
      %p390 = scmp.ne.s32.totalorder %s379, %s380
      %p391 = scmp.eq.s32.totalorder %s30, 0
      %p392 = por %p390, %p391
      %p393 = scmp.ne.s32.totalorder %s379, %s380
      %p394 = scmp.eq.s32.totalorder %s31, 1
      %p395 = por %p393, %p394
      %p397 = scmp.ne.s32.totalorder %s380, %s396
      %p398 = scmp.eq.s32.totalorder %s31, 0
      %p399 = por %p397, %p398
      %p400 = scmp.le.s32.totalorder 1, %s25
      %p401 = scmp.lt.s32.totalorder %s25, 3
      %p402 = pnand %p400, %p401
      %p403 = pneg %p402
      // Predicated region
      $region9: #{tdiscriminator_forward.1} parent=5 // pred_check
        _
      $region10: #{tdiscriminator_forward.1} parent=5 // pred_check_branch
        %405 = sbr.rel (%p402) target = $region12
      $region11: #{tdiscriminator_forward.1} parent=5 // pred_region
        %s406 = ssub.s32 %s25, 1
        // Predicated region
        $region13: #{tdiscriminator_forward.1} parent=11 // pred_check
          %p407 = pneg %p72
        $region14: #{tdiscriminator_forward.1} parent=11 // pred_check_branch
          %409 = sbr.rel (%p407) target = $region16
        $region15: #{tdiscriminator_forward.1} parent=11 // pred_region
          %411 = vsyncadd [#allocation3], 0
          %s412 = sshll.u32 %s1, 4
          %s413 = int_to_ptr.hbm [resolvable:$true] %s412
          %s414 = sshll.u32 [#allocation2], 4
          %s415 = int_to_ptr.vmem [resolvable:$true] %s414
          %420 = dma.hbm_to_vmem [thread:$0]  %s413, 6144, %s415, [#allocation3], 64, 64, 4
        $region16: #{tdiscriminator_forward.1} parent=11 // pred_fallthru
          _
        // Predicated region
        $region17: #{tdiscriminator_forward.1} parent=11 // pred_check
          %p421 = pneg %p93
        $region18: #{tdiscriminator_forward.1} parent=11 // pred_check_branch
          %423 = sbr.rel (%p421) target = $region20
        $region19: #{tdiscriminator_forward.1} parent=11 // pred_region
          _
        $region20: #{tdiscriminator_forward.1} parent=11 // pred_fallthru
          _
        // Predicated region
        $region21: #{tdiscriminator_forward.1} parent=11 // pred_check
          %p424 = pneg %p114
        $region22: #{tdiscriminator_forward.1} parent=11 // pred_check_branch
          %426 = sbr.rel (%p424) target = $region24
        $region23: #{tdiscriminator_forward.1} parent=11 // pred_region
          _
        $region24: #{tdiscriminator_forward.1} parent=11 // pred_fallthru
          _
        // Predicated region
        $region25: #{tdiscriminator_forward.1} parent=11 // pred_check
          %p427 = pneg %p135
        $region26: #{tdiscriminator_forward.1} parent=11 // pred_check_branch
          %429 = sbr.rel (%p427) target = $region28
        $region27: #{tdiscriminator_forward.1} parent=11 // pred_region
          _
        $region28: #{tdiscriminator_forward.1} parent=11 // pred_fallthru
          _
        // Predicated region
        $region29: #{tdiscriminator_forward.1} parent=11 // pred_check
          %p430 = pneg %p156
        $region30: #{tdiscriminator_forward.1} parent=11 // pred_check_branch
          %432 = sbr.rel (%p430) target = $region32
        $region31: #{tdiscriminator_forward.1} parent=11 // pred_region
          %434 = vsyncadd [#allocation5], 0
          %s435 = sshll.u32 %s5, 4
          %s436 = int_to_ptr.hbm [resolvable:$true] %s435
          %s437 = sshll.u32 [#allocation4], 4
          %s438 = int_to_ptr.vmem [resolvable:$true] %s437
          %443 = dma.hbm_to_vmem [thread:$0]  %s436, 24576, %s438, [#allocation5], 384, 384, 24
        $region32: #{tdiscriminator_forward.1} parent=11 // pred_fallthru
          _
        // Predicated region
        $region33: #{tdiscriminator_forward.1} parent=11 // pred_check
          %p444 = pneg %p177
        $region34: #{tdiscriminator_forward.1} parent=11 // pred_check_branch
          %446 = sbr.rel (%p444) target = $region36
        $region35: #{tdiscriminator_forward.1} parent=11 // pred_region
          %448 = vsyncadd [#allocation5], 0
          %s449 = sshll.u32 %s6, 4
          %s450 = int_to_ptr.hbm [resolvable:$true] %s449
          %s451 = sshll.u32 [#allocation6], 4
          %s452 = int_to_ptr.vmem [resolvable:$true] %s451
          %457 = dma.hbm_to_vmem [thread:$0]  %s450, 8192, %s452, [#allocation5], 64, 64, 4
        $region36: #{tdiscriminator_forward.1} parent=11 // pred_fallthru
          _
        // Predicated region
        $region37: #{tdiscriminator_forward.1} parent=11 // pred_check
          %p458 = pneg %p198
        $region38: #{tdiscriminator_forward.1} parent=11 // pred_check_branch
          %460 = sbr.rel (%p458) target = $region40
        $region39: #{tdiscriminator_forward.1} parent=11 // pred_region
          _
        $region40: #{tdiscriminator_forward.1} parent=11 // pred_fallthru
          _
        // Predicated region
        $region41: #{tdiscriminator_forward.1} parent=11 // pred_check
          %p461 = pneg %p219
        $region42: #{tdiscriminator_forward.1} parent=11 // pred_check_branch
          %463 = sbr.rel (%p461) target = $region44
        $region43: #{tdiscriminator_forward.1} parent=11 // pred_region
          _
        $region44: #{tdiscriminator_forward.1} parent=11 // pred_fallthru
          _
        // Predicated region
        $region45: #{tdiscriminator_forward.1} parent=11 // pred_check
          %p464 = pneg %p240
        $region46: #{tdiscriminator_forward.1} parent=11 // pred_check_branch
          %466 = sbr.rel (%p464) target = $region48
        $region47: #{tdiscriminator_forward.1} parent=11 // pred_region
          _
        $region48: #{tdiscriminator_forward.1} parent=11 // pred_fallthru
          _
        // Predicated region
        $region49: #{tdiscriminator_forward.1} parent=11 // pred_check
          %p467 = pneg %p261
        $region50: #{tdiscriminator_forward.1} parent=11 // pred_check_branch
          %469 = sbr.rel (%p467) target = $region52
        $region51: #{tdiscriminator_forward.1} parent=11 // pred_region
          %471 = vsyncadd [#allocation8], 0
          %s472 = sshll.u32 %s10, 4
          %s473 = int_to_ptr.hbm [resolvable:$true] %s472
          %s474 = sshll.u32 [#allocation7], 4
          %s475 = int_to_ptr.vmem [resolvable:$true] %s474
          %480 = dma.hbm_to_vmem [thread:$0]  %s473, 4096, %s475, [#allocation8], 64, 64, 4
        $region52: #{tdiscriminator_forward.1} parent=11 // pred_fallthru
          _
        // Predicated region
        $region53: #{tdiscriminator_forward.1} parent=11 // pred_check
          %p481 = pneg %p282
        $region54: #{tdiscriminator_forward.1} parent=11 // pred_check_branch
          %483 = sbr.rel (%p481) target = $region56
        $region55: #{tdiscriminator_forward.1} parent=11 // pred_region
          _
        $region56: #{tdiscriminator_forward.1} parent=11 // pred_fallthru
          _
        // Predicated region
        $region57: #{tdiscriminator_forward.1} parent=11 // pred_check
          %p484 = pneg %p303
        $region58: #{tdiscriminator_forward.1} parent=11 // pred_check_branch
          %486 = sbr.rel (%p484) target = $region60
        $region59: #{tdiscriminator_forward.1} parent=11 // pred_region
          %488 = vsyncadd [#allocation8], 0
          %s489 = sshll.u32 %s12, 4
          %s490 = int_to_ptr.hbm [resolvable:$true] %s489
          %s491 = sshll.u32 [#allocation9], 4
          %s492 = int_to_ptr.vmem [resolvable:$true] %s491
          %497 = dma.hbm_to_vmem [thread:$0]  %s490, 4096, %s492, [#allocation8], 64, 64, 4
        $region60: #{tdiscriminator_forward.1} parent=11 // pred_fallthru
          _
        // Predicated region
        $region61: #{tdiscriminator_forward.1} parent=11 // pred_check
          %p498 = pneg %p324
        $region62: #{tdiscriminator_forward.1} parent=11 // pred_check_branch
          %500 = sbr.rel (%p498) target = $region64
        $region63: #{tdiscriminator_forward.1} parent=11 // pred_region
          _
        $region64: #{tdiscriminator_forward.1} parent=11 // pred_fallthru
          _
        // Predicated region
        $region65: #{tdiscriminator_forward.1} parent=11 // pred_check
          %p501 = pneg %p345
        $region66: #{tdiscriminator_forward.1} parent=11 // pred_check_branch
          %503 = sbr.rel (%p501) target = $region68
        $region67: #{tdiscriminator_forward.1} parent=11 // pred_region
          _
        $region68: #{tdiscriminator_forward.1} parent=11 // pred_fallthru
          _
        // Predicated region
        $region69: #{tdiscriminator_forward.1} parent=11 // pred_check
          %p504 = pneg %p366
        $region70: #{tdiscriminator_forward.1} parent=11 // pred_check_branch
          %506 = sbr.rel (%p504) target = $region72
        $region71: #{tdiscriminator_forward.1} parent=11 // pred_region
          _
        $region72: #{tdiscriminator_forward.1} parent=11 // pred_fallthru
          _
      $region12: #{tdiscriminator_forward.1} parent=5 // pred_fallthru
        _
      %p507 = scmp.lt.s32.totalorder %s25, 2
      // Predicated region
      $region73: #{tdiscriminator_forward.1} parent=5 // pred_check
        %p508 = pneg %p507
      $region74: #{tdiscriminator_forward.1} parent=5 // pred_check_branch
        %510 = sbr.rel (%p508) target = $region76
      $region75: #{tdiscriminator_forward.1} parent=5 // pred_region
        // Predicated region
        $region77: #{tdiscriminator_forward.1} parent=75 // pred_check
          %p511 = pneg %p45
        $region78: #{tdiscriminator_forward.1} parent=75 // pred_check_branch
          %513 = sbr.rel (%p511) target = $region80
        $region79: #{tdiscriminator_forward.1} parent=75 // pred_region
          %p514 = scmp.lt.s32.totalorder %s25, 1
          %s515 = scalar_select %p514, %s25, 1
          %s516 = smul.addr %s515, 6
          %s517 = smul.addr %s516, 4
          %s518 = scalar_lea.vmem %s0, %s517
        $region80: #{tdiscriminator_forward.1} parent=75 // pred_fallthru
          _
      $region76: #{tdiscriminator_forward.1} parent=5 // pred_fallthru
        _
      %p519 = scmp.le.s32.totalorder 1, %s25
      %p520 = scmp.lt.s32.totalorder %s25, 3
      %p521 = pnand %p519, %p520
      %p522 = pneg %p521
      // Predicated region
      $region81: #{tdiscriminator_forward.1} parent=5 // pred_check
        _
      $region82: #{tdiscriminator_forward.1} parent=5 // pred_check_branch
        %524 = sbr.rel (%p521) target = $region84
      $region83: #{tdiscriminator_forward.1} parent=5 // pred_region
        %s525 = ssub.s32 %s25, 1
        // Predicated region
        $region85: #{tdiscriminator_forward.1} parent=83 // pred_check
          %p526 = pneg %p72
        $region86: #{tdiscriminator_forward.1} parent=83 // pred_check_branch
          %528 = sbr.rel (%p526) target = $region88
        $region87: #{tdiscriminator_forward.1} parent=83 // pred_region
          %530 = dma.done [#allocation3], 6144
        $region88: #{tdiscriminator_forward.1} parent=83 // pred_fallthru
          _
        // Predicated region
        $region89: #{tdiscriminator_forward.1} parent=83 // pred_check
          %p531 = pneg %p156
        $region90: #{tdiscriminator_forward.1} parent=83 // pred_check_branch
          %533 = sbr.rel (%p531) target = $region92
        $region91: #{tdiscriminator_forward.1} parent=83 // pred_region
          %535 = dma.done [#allocation5], 24576
        $region92: #{tdiscriminator_forward.1} parent=83 // pred_fallthru
          _
        // Predicated region
        $region93: #{tdiscriminator_forward.1} parent=83 // pred_check
          %p536 = pneg %p177
        $region94: #{tdiscriminator_forward.1} parent=83 // pred_check_branch
          %538 = sbr.rel (%p536) target = $region96
        $region95: #{tdiscriminator_forward.1} parent=83 // pred_region
          %540 = dma.done [#allocation5], 8192
        $region96: #{tdiscriminator_forward.1} parent=83 // pred_fallthru
          _
        // Predicated region
        $region97: #{tdiscriminator_forward.1} parent=83 // pred_check
          %p541 = pneg %p261
        $region98: #{tdiscriminator_forward.1} parent=83 // pred_check_branch
          %543 = sbr.rel (%p541) target = $region100
        $region99: #{tdiscriminator_forward.1} parent=83 // pred_region
          %545 = dma.done [#allocation8], 4096
        $region100: #{tdiscriminator_forward.1} parent=83 // pred_fallthru
          _
        // Predicated region
        $region101: #{tdiscriminator_forward.1} parent=83 // pred_check
          %p546 = pneg %p303
        $region102: #{tdiscriminator_forward.1} parent=83 // pred_check_branch
          %548 = sbr.rel (%p546) target = $region104
        $region103: #{tdiscriminator_forward.1} parent=83 // pred_region
          %550 = dma.done [#allocation8], 4096
        $region104: #{tdiscriminator_forward.1} parent=83 // pred_fallthru
          _
        %p551 = scmp.lt.s32.totalorder %s30, 1
        %s552 = scalar_select %p551, %s30, 1
        %s553 = smul.addr %s552, 6
        %s554 = smul.addr %s553, 4
        %s555 = scalar_lea.vmem %s0, %s554
        %p556 = pneg %p51
        %p557 = pneg %p48
        %p558 = pneg %p72
        %p559 = pneg %p69
        %p560 = pneg %p93
        %p561 = pneg %p90
        %p562 = pneg %p114
        %p563 = pneg %p111
        %p564 = pneg %p135
        %p565 = pneg %p132
        %p566 = pneg %p156
        %p567 = pneg %p153
        %p568 = pneg %p177
        %p569 = pneg %p174
        %p570 = pneg %p198
        %p571 = pneg %p195
        %p572 = pneg %p219
        %p573 = pneg %p216
        %p574 = pneg %p240
        %p575 = pneg %p237
        %p576 = pneg %p261
        %p577 = pneg %p258
        %p578 = pneg %p282
        %p579 = pneg %p279
        %p580 = pneg %p303
        %p581 = pneg %p300
        %p582 = pneg %p324
        %p583 = pneg %p321
        %p584 = pneg %p345
        %p585 = pneg %p342
        %p586 = pneg %p366
        %p587 = pneg %p363
        %p588 = pneg %p392
        %p589 = pneg %p389
        %p590 = scmp.lt.s32.totalorder %s30, 1
        %s591 = scalar_select %p590, %s30, 1
        %s592 = smul.addr %s591, 8
        %s593 = scalar_lea.vmem %s16, %s592
        %p594 = scmp.lt.s32.totalorder %s30, 1
        %s595 = scalar_select %p594, %s30, 1
        %s596 = smul.addr %s595, 6
        %s597 = smul.addr %s596, 4
        %s598 = scalar_lea.vmem %s0, %s597
        %p599 = scmp.lt.s32.totalorder %s30, 1
        %s600 = scalar_select %p599, %s30, 1
        %s601 = smul.addr %s600, 8
        %s602 = scalar_lea.vmem %s16, %s601
        %v604 = vld [vmem:[%s598] sm:$0xff]
        %v605 = vld [vmem:[%s598 + $0x8] sm:$0xff]
        %v606 = vld [vmem:[%s598 + $0x10] sm:$0xff]
        %v607 = vld [vmem:[#allocation2] sm:$0xf]
        %v608 = vld [vmem:[#allocation2 + $0x4] sm:$0xf]
        %v609 = vld [vmem:[#allocation2 + $0x8] sm:$0xf]
        %v610 = vld [vmem:[#allocation2 + $0xc] sm:$0xf]
        %v611 = vld [vmem:[#allocation2 + $0x10] sm:$0xf]
        %v612 = vld [vmem:[#allocation2 + $0x14] sm:$0xf]
        %v613 = vld [vmem:[#allocation2 + $0x18] sm:$0xf]
        %v614 = vld [vmem:[#allocation2 + $0x1c] sm:$0xf]
        %v615 = vld [vmem:[#allocation2 + $0x20] sm:$0xf]
        %v616 = vld [vmem:[#allocation2 + $0x24] sm:$0xf]
        %v617 = vld [vmem:[#allocation2 + $0x28] sm:$0xf]
        %v618 = vld [vmem:[#allocation2 + $0x2c] sm:$0xf]
        %v619 = vld [vmem:[#allocation2 + $0x30] sm:$0xf]
        %v620 = vld [vmem:[#allocation2 + $0x34] sm:$0xf]
        %v621 = vld [vmem:[#allocation2 + $0x38] sm:$0xf]
        %v622 = vld [vmem:[#allocation2 + $0x3c] sm:$0xf]
        %v623 = vld [vmem:[#allocation2 + $0x40] sm:$0xf]
        %v624 = vld [vmem:[#allocation2 + $0x44] sm:$0xf]
        %v625 = vld [vmem:[#allocation2 + $0x48] sm:$0xf]
        %v626 = vld [vmem:[#allocation2 + $0x4c] sm:$0xf]
        %v627 = vld [vmem:[#allocation2 + $0x50] sm:$0xf]
        %v628 = vld [vmem:[#allocation2 + $0x54] sm:$0xf]
        %v629 = vld [vmem:[#allocation2 + $0x58] sm:$0xf]
        %v630 = vld [vmem:[#allocation2 + $0x5c] sm:$0xf]
        %v631 = vld [vmem:[#allocation2 + $0x60] sm:$0xf]
        %v632 = vld [vmem:[#allocation2 + $0x64] sm:$0xf]
        %v633 = vld [vmem:[#allocation2 + $0x68] sm:$0xf]
        %v634 = vld [vmem:[#allocation2 + $0x6c] sm:$0xf]
        %v635 = vld [vmem:[#allocation2 + $0x70] sm:$0xf]
        %v636 = vld [vmem:[#allocation2 + $0x74] sm:$0xf]
        %v637 = vld [vmem:[#allocation2 + $0x78] sm:$0xf]
        %v638 = vld [vmem:[#allocation2 + $0x7c] sm:$0xf]
        %v639 = vld [vmem:[#allocation2 + $0x80] sm:$0xf]
        %v640 = vld [vmem:[#allocation2 + $0x84] sm:$0xf]
        %v641 = vld [vmem:[#allocation2 + $0x88] sm:$0xf]
        %v642 = vld [vmem:[#allocation2 + $0x8c] sm:$0xf]
        %v643 = vld [vmem:[#allocation2 + $0x90] sm:$0xf]
        %v644 = vld [vmem:[#allocation2 + $0x94] sm:$0xf]
        %v645 = vld [vmem:[#allocation2 + $0x98] sm:$0xf]
        %v646 = vld [vmem:[#allocation2 + $0x9c] sm:$0xf]
        %v647 = vld [vmem:[#allocation2 + $0xa0] sm:$0xf]
        %v648 = vld [vmem:[#allocation2 + $0xa4] sm:$0xf]
        %v649 = vld [vmem:[#allocation2 + $0xa8] sm:$0xf]
        %v650 = vld [vmem:[#allocation2 + $0xac] sm:$0xf]
        %v651 = vld [vmem:[#allocation2 + $0xb0] sm:$0xf]
        %v652 = vld [vmem:[#allocation2 + $0xb4] sm:$0xf]
        %v653 = vld [vmem:[#allocation2 + $0xb8] sm:$0xf]
        %v654 = vld [vmem:[#allocation2 + $0xbc] sm:$0xf]
        %v655 = vld [vmem:[#allocation2 + $0xc0] sm:$0xf]
        %v656 = vld [vmem:[#allocation2 + $0xc4] sm:$0xf]
        %v657 = vld [vmem:[#allocation2 + $0xc8] sm:$0xf]
        %v658 = vld [vmem:[#allocation2 + $0xcc] sm:$0xf]
        %v659 = vld [vmem:[#allocation2 + $0xd0] sm:$0xf]
        %v660 = vld [vmem:[#allocation2 + $0xd4] sm:$0xf]
        %v661 = vld [vmem:[#allocation2 + $0xd8] sm:$0xf]
        %v662 = vld [vmem:[#allocation2 + $0xdc] sm:$0xf]
        %v663 = vld [vmem:[#allocation2 + $0xe0] sm:$0xf]
        %v664 = vld [vmem:[#allocation2 + $0xe4] sm:$0xf]
        %v665 = vld [vmem:[#allocation2 + $0xe8] sm:$0xf]
        %v666 = vld [vmem:[#allocation2 + $0xec] sm:$0xf]
        %v667 = vld [vmem:[#allocation2 + $0xf0] sm:$0xf]
        %v668 = vld [vmem:[#allocation2 + $0xf4] sm:$0xf]
        %v669 = vld [vmem:[#allocation2 + $0xf8] sm:$0xf]
        %v670 = vld [vmem:[#allocation2 + $0xfc] sm:$0xf]
        %v671 = vld [vmem:[#allocation2 + $0x100] sm:$0xf]
        %v672 = vld [vmem:[#allocation2 + $0x104] sm:$0xf]
        %v673 = vld [vmem:[#allocation2 + $0x108] sm:$0xf]
        %v674 = vld [vmem:[#allocation2 + $0x10c] sm:$0xf]
        %v675 = vld [vmem:[#allocation2 + $0x110] sm:$0xf]
        %v676 = vld [vmem:[#allocation2 + $0x114] sm:$0xf]
        %v677 = vld [vmem:[#allocation2 + $0x118] sm:$0xf]
        %v678 = vld [vmem:[#allocation2 + $0x11c] sm:$0xf]
        %v679 = vld [vmem:[#allocation2 + $0x120] sm:$0xf]
        %v680 = vld [vmem:[#allocation2 + $0x124] sm:$0xf]
        %v681 = vld [vmem:[#allocation2 + $0x128] sm:$0xf]
        %v682 = vld [vmem:[#allocation2 + $0x12c] sm:$0xf]
        %v683 = vld [vmem:[#allocation2 + $0x130] sm:$0xf]
        %v684 = vld [vmem:[#allocation2 + $0x134] sm:$0xf]
        %v685 = vld [vmem:[#allocation2 + $0x138] sm:$0xf]
        %v686 = vld [vmem:[#allocation2 + $0x13c] sm:$0xf]
        %v687 = vld [vmem:[#allocation2 + $0x140] sm:$0xf]
        %v688 = vld [vmem:[#allocation2 + $0x144] sm:$0xf]
        %v689 = vld [vmem:[#allocation2 + $0x148] sm:$0xf]
        %v690 = vld [vmem:[#allocation2 + $0x14c] sm:$0xf]
        %v691 = vld [vmem:[#allocation2 + $0x150] sm:$0xf]
        %v692 = vld [vmem:[#allocation2 + $0x154] sm:$0xf]
        %v693 = vld [vmem:[#allocation2 + $0x158] sm:$0xf]
        %v694 = vld [vmem:[#allocation2 + $0x15c] sm:$0xf]
        %v695 = vld [vmem:[#allocation2 + $0x160] sm:$0xf]
        %v696 = vld [vmem:[#allocation2 + $0x164] sm:$0xf]
        %v697 = vld [vmem:[#allocation2 + $0x168] sm:$0xf]
        %v698 = vld [vmem:[#allocation2 + $0x16c] sm:$0xf]
        %v699 = vld [vmem:[#allocation2 + $0x170] sm:$0xf]
        %v700 = vld [vmem:[#allocation2 + $0x174] sm:$0xf]
        %v701 = vld [vmem:[#allocation2 + $0x178] sm:$0xf]
        %v702 = vld [vmem:[#allocation2 + $0x17c] sm:$0xf]
        %v703 = vld [vmem:[%s2] sm:$0x1]
        %v705 = vperm.slane %v703, 0
        %v710 = vunpack.c.l.b16 %v604
        %v711 = vunpack.c.h.b16 %v604
        %v712 = vunpack.c.l.b16 %v605
        %v713 = vunpack.c.h.b16 %v605
        %v714 = vunpack.c.l.b16 %v606
        %v715 = vunpack.c.h.b16 %v606
        %v716 = vpack.c.b16 %v710, %v710
        %v717 = vpack.c.b16 %v711, %v711
        %v718 = vpack.c.b16 %v712, %v712
        %v719 = vpack.c.b16 %v713, %v713
        %v720 = vpack.c.b16 %v714, %v714
        %v721 = vpack.c.b16 %v715, %v715
        %v824 = vunpack.c.l.b16 %v607
        %v825 = vunpack.c.l.b16 %v608
        %v826 = vunpack.c.l.b16 %v609
        %v827 = vunpack.c.l.b16 %v610
        %v828 = vunpack.c.l.b16 %v611
        %v829 = vunpack.c.l.b16 %v612
        %v830 = vunpack.c.l.b16 %v613
        %v831 = vunpack.c.l.b16 %v614
        %v832 = vunpack.c.l.b16 %v615
        %v833 = vunpack.c.l.b16 %v616
        %v834 = vunpack.c.l.b16 %v617
        %v835 = vunpack.c.l.b16 %v618
        %v836 = vunpack.c.l.b16 %v619
        %v837 = vunpack.c.l.b16 %v620
        %v838 = vunpack.c.l.b16 %v621
        %v839 = vunpack.c.l.b16 %v622
        %v840 = vunpack.c.l.b16 %v623
        %v841 = vunpack.c.l.b16 %v624
        %v842 = vunpack.c.l.b16 %v625
        %v843 = vunpack.c.l.b16 %v626
        %v844 = vunpack.c.l.b16 %v627
        %v845 = vunpack.c.l.b16 %v628
        %v846 = vunpack.c.l.b16 %v629
        %v847 = vunpack.c.l.b16 %v630
        %v848 = vunpack.c.l.b16 %v631
        %v849 = vunpack.c.l.b16 %v632
        %v850 = vunpack.c.l.b16 %v633
        %v851 = vunpack.c.l.b16 %v634
        %v852 = vunpack.c.l.b16 %v635
        %v853 = vunpack.c.l.b16 %v636
        %v854 = vunpack.c.l.b16 %v637
        %v855 = vunpack.c.l.b16 %v638
        %v856 = vunpack.c.l.b16 %v639
        %v857 = vunpack.c.l.b16 %v640
        %v858 = vunpack.c.l.b16 %v641
        %v859 = vunpack.c.l.b16 %v642
        %v860 = vunpack.c.l.b16 %v643
        %v861 = vunpack.c.l.b16 %v644
        %v862 = vunpack.c.l.b16 %v645
        %v863 = vunpack.c.l.b16 %v646
        %v864 = vunpack.c.l.b16 %v647
        %v865 = vunpack.c.l.b16 %v648
        %v866 = vunpack.c.l.b16 %v649
        %v867 = vunpack.c.l.b16 %v650
        %v868 = vunpack.c.l.b16 %v651
        %v869 = vunpack.c.l.b16 %v652
        %v870 = vunpack.c.l.b16 %v653
        %v871 = vunpack.c.l.b16 %v654
        %v872 = vunpack.c.l.b16 %v655
        %v873 = vunpack.c.l.b16 %v656
        %v874 = vunpack.c.l.b16 %v657
        %v875 = vunpack.c.l.b16 %v658
        %v876 = vunpack.c.l.b16 %v659
        %v877 = vunpack.c.l.b16 %v660
        %v878 = vunpack.c.l.b16 %v661
        %v879 = vunpack.c.l.b16 %v662
        %v880 = vunpack.c.l.b16 %v663
        %v881 = vunpack.c.l.b16 %v664
        %v882 = vunpack.c.l.b16 %v665
        %v883 = vunpack.c.l.b16 %v666
        %v884 = vunpack.c.l.b16 %v667
        %v885 = vunpack.c.l.b16 %v668
        %v886 = vunpack.c.l.b16 %v669
        %v887 = vunpack.c.l.b16 %v670
        %v888 = vunpack.c.l.b16 %v671
        %v889 = vunpack.c.l.b16 %v672
        %v890 = vunpack.c.l.b16 %v673
        %v891 = vunpack.c.l.b16 %v674
        %v892 = vunpack.c.l.b16 %v675
        %v893 = vunpack.c.l.b16 %v676
        %v894 = vunpack.c.l.b16 %v677
        %v895 = vunpack.c.l.b16 %v678
        %v896 = vunpack.c.l.b16 %v679
        %v897 = vunpack.c.l.b16 %v680
        %v898 = vunpack.c.l.b16 %v681
        %v899 = vunpack.c.l.b16 %v682
        %v900 = vunpack.c.l.b16 %v683
        %v901 = vunpack.c.l.b16 %v684
        %v902 = vunpack.c.l.b16 %v685
        %v903 = vunpack.c.l.b16 %v686
        %v904 = vunpack.c.l.b16 %v687
        %v905 = vunpack.c.l.b16 %v688
        %v906 = vunpack.c.l.b16 %v689
        %v907 = vunpack.c.l.b16 %v690
        %v908 = vunpack.c.l.b16 %v691
        %v909 = vunpack.c.l.b16 %v692
        %v910 = vunpack.c.l.b16 %v693
        %v911 = vunpack.c.l.b16 %v694
        %v912 = vunpack.c.l.b16 %v695
        %v913 = vunpack.c.l.b16 %v696
        %v914 = vunpack.c.l.b16 %v697
        %v915 = vunpack.c.l.b16 %v698
        %v916 = vunpack.c.l.b16 %v699
        %v917 = vunpack.c.l.b16 %v700
        %v918 = vunpack.c.l.b16 %v701
        %v919 = vunpack.c.l.b16 %v702
        %v920 = vpack.c.b16 %v825, %v824
        %v921 = vpack.c.b16 %v827, %v826
        %v922 = vpack.c.b16 %v829, %v828
        %v923 = vpack.c.b16 %v831, %v830
        %v924 = vpack.c.b16 %v833, %v832
        %v925 = vpack.c.b16 %v835, %v834
        %v926 = vpack.c.b16 %v837, %v836
        %v927 = vpack.c.b16 %v839, %v838
        %v928 = vpack.c.b16 %v841, %v840
        %v929 = vpack.c.b16 %v843, %v842
        %v930 = vpack.c.b16 %v845, %v844
        %v931 = vpack.c.b16 %v847, %v846
        %v932 = vpack.c.b16 %v849, %v848
        %v933 = vpack.c.b16 %v851, %v850
        %v934 = vpack.c.b16 %v853, %v852
        %v935 = vpack.c.b16 %v855, %v854
        %v936 = vpack.c.b16 %v857, %v856
        %v937 = vpack.c.b16 %v859, %v858
        %v938 = vpack.c.b16 %v861, %v860
        %v939 = vpack.c.b16 %v863, %v862
        %v940 = vpack.c.b16 %v865, %v864
        %v941 = vpack.c.b16 %v867, %v866
        %v942 = vpack.c.b16 %v869, %v868
        %v943 = vpack.c.b16 %v871, %v870
        %v944 = vpack.c.b16 %v873, %v872
        %v945 = vpack.c.b16 %v875, %v874
        %v946 = vpack.c.b16 %v877, %v876
        %v947 = vpack.c.b16 %v879, %v878
        %v948 = vpack.c.b16 %v881, %v880
        %v949 = vpack.c.b16 %v883, %v882
        %v950 = vpack.c.b16 %v885, %v884
        %v951 = vpack.c.b16 %v887, %v886
        %v952 = vpack.c.b16 %v889, %v888
        %v953 = vpack.c.b16 %v891, %v890
        %v954 = vpack.c.b16 %v893, %v892
        %v955 = vpack.c.b16 %v895, %v894
        %v956 = vpack.c.b16 %v897, %v896
        %v957 = vpack.c.b16 %v899, %v898
        %v958 = vpack.c.b16 %v901, %v900
        %v959 = vpack.c.b16 %v903, %v902
        %v960 = vpack.c.b16 %v905, %v904
        %v961 = vpack.c.b16 %v907, %v906
        %v962 = vpack.c.b16 %v909, %v908
        %v963 = vpack.c.b16 %v911, %v910
        %v964 = vpack.c.b16 %v913, %v912
        %v965 = vpack.c.b16 %v915, %v914
        %v966 = vpack.c.b16 %v917, %v916
        %v967 = vpack.c.b16 %v919, %v918
        %1016 = vmatpush.bf16.msra.mxu0 %v927
        %1017 = vmatpush.bf16.msra.mxu0 %v926
        %1018 = vmatpush.bf16.msra.mxu0 %v925
        %1019 = vmatpush.bf16.msra.mxu0 %v924
        %1020 = vmatpush.bf16.msra.mxu0 %v923
        %1021 = vmatpush.bf16.msra.mxu0 %v922
        %1022 = vmatpush.bf16.msra.mxu0 %v921
        %1023 = vmatpush.bf16.msra.mxu0 %v920
        %1024 = vmatmul.bf16.gmra.mxu0 %v716
        %v1025 = vpop.f32.mrf.mxu0
        %v1026 = vadd.f32 %v705, %v1025
        %v1027 = vpop.f32.mrf.mxu0
        %1028 = vdwg.mxu0
        %1029 = vmatpush.bf16.msra.mxu0 %v935
        %1030 = vmatpush.bf16.msra.mxu0 %v934
        %1031 = vmatpush.bf16.msra.mxu0 %v933
        %1032 = vmatpush.bf16.msra.mxu0 %v932
        %1033 = vmatpush.bf16.msra.mxu0 %v931
        %1034 = vmatpush.bf16.msra.mxu0 %v930
        %1035 = vmatpush.bf16.msra.mxu0 %v929
        %1036 = vmatpush.bf16.msra.mxu0 %v928
        %1037 = vmatmul.bf16.gmra.mxu0 %v717
        %v1038 = vpop.f32.mrf.mxu0
        %v1039 = vadd.f32 %v1026, %v1038
        %v1040 = vpop.f32.mrf.mxu0
        %1041 = vdwg.mxu0
        %1042 = vmatpush.bf16.msra.mxu0 %v943
        %1043 = vmatpush.bf16.msra.mxu0 %v942
        %1044 = vmatpush.bf16.msra.mxu0 %v941
        %1045 = vmatpush.bf16.msra.mxu0 %v940
        %1046 = vmatpush.bf16.msra.mxu0 %v939
        %1047 = vmatpush.bf16.msra.mxu0 %v938
        %1048 = vmatpush.bf16.msra.mxu0 %v937
        %1049 = vmatpush.bf16.msra.mxu0 %v936
        %1050 = vmatmul.bf16.gmra.mxu0 %v718
        %v1051 = vpop.f32.mrf.mxu0
        %v1052 = vadd.f32 %v1039, %v1051
        %v1053 = vpop.f32.mrf.mxu0
        %1054 = vdwg.mxu0
        %1055 = vmatpush.bf16.msra.mxu0 %v951
        %1056 = vmatpush.bf16.msra.mxu0 %v950
        %1057 = vmatpush.bf16.msra.mxu0 %v949
        %1058 = vmatpush.bf16.msra.mxu0 %v948
        %1059 = vmatpush.bf16.msra.mxu0 %v947
        %1060 = vmatpush.bf16.msra.mxu0 %v946
        %1061 = vmatpush.bf16.msra.mxu0 %v945
        %1062 = vmatpush.bf16.msra.mxu0 %v944
        %1063 = vmatmul.bf16.gmra.mxu0 %v719
        %v1064 = vpop.f32.mrf.mxu0
        %v1065 = vadd.f32 %v1052, %v1064
        %v1066 = vpop.f32.mrf.mxu0
        %1067 = vdwg.mxu0
        %1068 = vmatpush.bf16.msra.mxu0 %v959
        %1069 = vmatpush.bf16.msra.mxu0 %v958
        %1070 = vmatpush.bf16.msra.mxu0 %v957
        %1071 = vmatpush.bf16.msra.mxu0 %v956
        %1072 = vmatpush.bf16.msra.mxu0 %v955
        %1073 = vmatpush.bf16.msra.mxu0 %v954
        %1074 = vmatpush.bf16.msra.mxu0 %v953
        %1075 = vmatpush.bf16.msra.mxu0 %v952
        %1076 = vmatmul.bf16.gmra.mxu0 %v720
        %v1077 = vpop.f32.mrf.mxu0
        %v1078 = vadd.f32 %v1065, %v1077
        %v1079 = vpop.f32.mrf.mxu0
        %1080 = vdwg.mxu0
        %1081 = vmatpush.bf16.msra.mxu0 %v967
        %1082 = vmatpush.bf16.msra.mxu0 %v966
        %1083 = vmatpush.bf16.msra.mxu0 %v965
        %1084 = vmatpush.bf16.msra.mxu0 %v964
        %1085 = vmatpush.bf16.msra.mxu0 %v963
        %1086 = vmatpush.bf16.msra.mxu0 %v962
        %1087 = vmatpush.bf16.msra.mxu0 %v961
        %1088 = vmatpush.bf16.msra.mxu0 %v960
        %1089 = vmatmul.bf16.gmra.mxu0 %v721
        %v1090 = vpop.f32.mrf.mxu0
        %v1091 = vadd.f32 %v1078, %v1090
        %v1092 = vpop.f32.mrf.mxu0
        %1093 = vdwg.mxu0
        %v1094 = vld [vmem:[%s3] sm:$0x1]
        %v1095 = vld [vmem:[%s4] sm:$0x1]
        %1096 = vadd.xlane.f32.xlu0 %v1091
        %v1097 = vpop.xlane.xlu0 %1096
        %v1098 = vrcp.pop 128.0
        %v1099 = vmul.f32 128.0, %v1098
        %v1100 = vsub.f32 1.0, %v1099
        %v1101 = vmul.f32 %v1098, %v1100
        %v1102 = vadd.f32 %v1098, %v1101
        %vm1103 = vweird.f32 %v1098
        %v1104 = vsel %vm1103, %v1098, %v1102
        %v1105 = vmul.f32 %v1097, %v1104
        %v1106 = vsub.f32 %v1091, %v1105
        %v1107 = vmul.f32 %v1106, %v1106
        %1108 = vadd.xlane.f32.xlu0 %v1107
        %v1109 = vpop.xlane.xlu0 %1108
        %v1110 = vmul.f32 %v1109, %v1104
        %v1111 = vadd.f32 %v1110, 1e-05
        %v1112 = vrsqrt.pop %v1111
        %v1113 = vmul.f32 %v1112, %v1111
        %v1114 = vmul.f32 %v1113, %v1112
        %v1115 = vmul.f32 0.5, %v1114
        %v1116 = vsub.f32 1.5, %v1115
        %v1117 = vmul.f32 %v1112, %v1116
        %vm1118 = vweird.f32 %v1111
        %vm1119 = vweird.f32 %v1112
        %vm1120 = vmor %vm1118, %vm1119
        %v1121 = vsel %vm1120, %v1112, %v1117
        %v1122 = vmul.f32 %v1106, %v1121
        %v1123 = vperm.slane %v1094, 0
        %v1124 = vmul.f32 %v1122, %v1123
        %v1125 = vperm.slane %v1095, 0
        %v1126 = vadd.f32 %v1124, %v1125
        %v1127 = vpack.c.bf16 %v1126, %v1126
        %v1128 = vld [vmem:[#allocation4] sm:$0xff]
        %v1129 = vld [vmem:[#allocation4 + $0x8] sm:$0xff]
        %v1130 = vld [vmem:[#allocation4 + $0x10] sm:$0xff]
        %v1131 = vld [vmem:[#allocation4 + $0x18] sm:$0xff]
        %v1132 = vld [vmem:[#allocation4 + $0x20] sm:$0xff]
        %v1133 = vld [vmem:[#allocation4 + $0x28] sm:$0xff]
        %v1134 = vld [vmem:[#allocation4 + $0x30] sm:$0xff]
        %v1135 = vld [vmem:[#allocation4 + $0x38] sm:$0xff]
        %v1136 = vld [vmem:[#allocation4 + $0x40] sm:$0xff]
        %v1137 = vld [vmem:[#allocation4 + $0x48] sm:$0xff]
        %v1138 = vld [vmem:[#allocation4 + $0x50] sm:$0xff]
        %v1139 = vld [vmem:[#allocation4 + $0x58] sm:$0xff]
        %v1140 = vld [vmem:[#allocation4 + $0x60] sm:$0xff]
        %v1141 = vld [vmem:[#allocation4 + $0x68] sm:$0xff]
        %v1142 = vld [vmem:[#allocation4 + $0x70] sm:$0xff]
        %v1143 = vld [vmem:[#allocation4 + $0x78] sm:$0xff]
        %v1144 = vld [vmem:[#allocation4 + $0x80] sm:$0xff]
        %v1145 = vld [vmem:[#allocation4 + $0x88] sm:$0xff]
        %v1146 = vld [vmem:[#allocation4 + $0x90] sm:$0xff]
        %v1147 = vld [vmem:[#allocation4 + $0x98] sm:$0xff]
        %v1148 = vld [vmem:[#allocation4 + $0xa0] sm:$0xff]
        %v1149 = vld [vmem:[#allocation4 + $0xa8] sm:$0xff]
        %v1150 = vld [vmem:[#allocation4 + $0xb0] sm:$0xff]
        %v1151 = vld [vmem:[#allocation4 + $0xb8] sm:$0xff]
        %v1152 = vld [vmem:[#allocation4 + $0xc0] sm:$0xff]
        %v1153 = vld [vmem:[#allocation4 + $0xc8] sm:$0xff]
        %v1154 = vld [vmem:[#allocation4 + $0xd0] sm:$0xff]
        %v1155 = vld [vmem:[#allocation4 + $0xd8] sm:$0xff]
        %v1156 = vld [vmem:[#allocation4 + $0xe0] sm:$0xff]
        %v1157 = vld [vmem:[#allocation4 + $0xe8] sm:$0xff]
        %v1158 = vld [vmem:[#allocation4 + $0xf0] sm:$0xff]
        %v1159 = vld [vmem:[#allocation4 + $0xf8] sm:$0xff]
        %v1160 = vld [vmem:[#allocation4 + $0x100] sm:$0xff]
        %v1161 = vld [vmem:[#allocation4 + $0x108] sm:$0xff]
        %v1162 = vld [vmem:[#allocation4 + $0x110] sm:$0xff]
        %v1163 = vld [vmem:[#allocation4 + $0x118] sm:$0xff]
        %v1164 = vld [vmem:[#allocation4 + $0x120] sm:$0xff]
        %v1165 = vld [vmem:[#allocation4 + $0x128] sm:$0xff]
        %v1166 = vld [vmem:[#allocation4 + $0x130] sm:$0xff]
        %v1167 = vld [vmem:[#allocation4 + $0x138] sm:$0xff]
        %v1168 = vld [vmem:[#allocation4 + $0x140] sm:$0xff]
        %v1169 = vld [vmem:[#allocation4 + $0x148] sm:$0xff]
        %v1170 = vld [vmem:[#allocation4 + $0x150] sm:$0xff]
        %v1171 = vld [vmem:[#allocation4 + $0x158] sm:$0xff]
        %v1172 = vld [vmem:[#allocation4 + $0x160] sm:$0xff]
        %v1173 = vld [vmem:[#allocation4 + $0x168] sm:$0xff]
        %v1174 = vld [vmem:[#allocation4 + $0x170] sm:$0xff]
        %v1175 = vld [vmem:[#allocation4 + $0x178] sm:$0xff]
        %v1224 = vunpack.c.l.b16 %v1128
        %v1225 = vunpack.c.h.b16 %v1128
        %v1226 = vunpack.c.l.b16 %v1129
        %v1227 = vunpack.c.h.b16 %v1129
        %v1228 = vunpack.c.l.b16 %v1130
        %v1229 = vunpack.c.h.b16 %v1130
        %v1230 = vunpack.c.l.b16 %v1131
        %v1231 = vunpack.c.h.b16 %v1131
        %v1232 = vunpack.c.l.b16 %v1132
        %v1233 = vunpack.c.h.b16 %v1132
        %v1234 = vunpack.c.l.b16 %v1133
        %v1235 = vunpack.c.h.b16 %v1133
        %v1236 = vunpack.c.l.b16 %v1134
        %v1237 = vunpack.c.h.b16 %v1134
        %v1238 = vunpack.c.l.b16 %v1135
        %v1239 = vunpack.c.h.b16 %v1135
        %v1240 = vunpack.c.l.b16 %v1136
        %v1241 = vunpack.c.h.b16 %v1136
        %v1242 = vunpack.c.l.b16 %v1137
        %v1243 = vunpack.c.h.b16 %v1137
        %v1244 = vunpack.c.l.b16 %v1138
        %v1245 = vunpack.c.h.b16 %v1138
        %v1246 = vunpack.c.l.b16 %v1139
        %v1247 = vunpack.c.h.b16 %v1139
        %v1248 = vunpack.c.l.b16 %v1140
        %v1249 = vunpack.c.h.b16 %v1140
        %v1250 = vunpack.c.l.b16 %v1141
        %v1251 = vunpack.c.h.b16 %v1141
        %v1252 = vunpack.c.l.b16 %v1142
        %v1253 = vunpack.c.h.b16 %v1142
        %v1254 = vunpack.c.l.b16 %v1143
        %v1255 = vunpack.c.h.b16 %v1143
        %v1256 = vunpack.c.l.b16 %v1144
        %v1257 = vunpack.c.h.b16 %v1144
        %v1258 = vunpack.c.l.b16 %v1145
        %v1259 = vunpack.c.h.b16 %v1145
        %v1260 = vunpack.c.l.b16 %v1146
        %v1261 = vunpack.c.h.b16 %v1146
        %v1262 = vunpack.c.l.b16 %v1147
        %v1263 = vunpack.c.h.b16 %v1147
        %v1264 = vunpack.c.l.b16 %v1148
        %v1265 = vunpack.c.h.b16 %v1148
        %v1266 = vunpack.c.l.b16 %v1149
        %v1267 = vunpack.c.h.b16 %v1149
        %v1268 = vunpack.c.l.b16 %v1150
        %v1269 = vunpack.c.h.b16 %v1150
        %v1270 = vunpack.c.l.b16 %v1151
        %v1271 = vunpack.c.h.b16 %v1151
        %v1272 = vunpack.c.l.b16 %v1152
        %v1273 = vunpack.c.h.b16 %v1152
        %v1274 = vunpack.c.l.b16 %v1153
        %v1275 = vunpack.c.h.b16 %v1153
        %v1276 = vunpack.c.l.b16 %v1154
        %v1277 = vunpack.c.h.b16 %v1154
        %v1278 = vunpack.c.l.b16 %v1155
        %v1279 = vunpack.c.h.b16 %v1155
        %v1280 = vunpack.c.l.b16 %v1156
        %v1281 = vunpack.c.h.b16 %v1156
        %v1282 = vunpack.c.l.b16 %v1157
        %v1283 = vunpack.c.h.b16 %v1157
        %v1284 = vunpack.c.l.b16 %v1158
        %v1285 = vunpack.c.h.b16 %v1158
        %v1286 = vunpack.c.l.b16 %v1159
        %v1287 = vunpack.c.h.b16 %v1159
        %v1288 = vunpack.c.l.b16 %v1160
        %v1289 = vunpack.c.h.b16 %v1160
        %v1290 = vunpack.c.l.b16 %v1161
        %v1291 = vunpack.c.h.b16 %v1161
        %v1292 = vunpack.c.l.b16 %v1162
        %v1293 = vunpack.c.h.b16 %v1162
        %v1294 = vunpack.c.l.b16 %v1163
        %v1295 = vunpack.c.h.b16 %v1163
        %v1296 = vunpack.c.l.b16 %v1164
        %v1297 = vunpack.c.h.b16 %v1164
        %v1298 = vunpack.c.l.b16 %v1165
        %v1299 = vunpack.c.h.b16 %v1165
        %v1300 = vunpack.c.l.b16 %v1166
        %v1301 = vunpack.c.h.b16 %v1166
        %v1302 = vunpack.c.l.b16 %v1167
        %v1303 = vunpack.c.h.b16 %v1167
        %v1304 = vunpack.c.l.b16 %v1168
        %v1305 = vunpack.c.h.b16 %v1168
        %v1306 = vunpack.c.l.b16 %v1169
        %v1307 = vunpack.c.h.b16 %v1169
        %v1308 = vunpack.c.l.b16 %v1170
        %v1309 = vunpack.c.h.b16 %v1170
        %v1310 = vunpack.c.l.b16 %v1171
        %v1311 = vunpack.c.h.b16 %v1171
        %v1312 = vunpack.c.l.b16 %v1172
        %v1313 = vunpack.c.h.b16 %v1172
        %v1314 = vunpack.c.l.b16 %v1173
        %v1315 = vunpack.c.h.b16 %v1173
        %v1316 = vunpack.c.l.b16 %v1174
        %v1317 = vunpack.c.h.b16 %v1174
        %v1318 = vunpack.c.l.b16 %v1175
        %v1319 = vunpack.c.h.b16 %v1175
        %v1320 = vpack.c.b16 %v1230, %v1224
        %v1321 = vpack.c.b16 %v1231, %v1225
        %v1322 = vpack.c.b16 %v1232, %v1226
        %v1323 = vpack.c.b16 %v1233, %v1227
        %v1324 = vpack.c.b16 %v1234, %v1228
        %v1325 = vpack.c.b16 %v1235, %v1229
        %v1326 = vpack.c.b16 %v1242, %v1236
        %v1327 = vpack.c.b16 %v1243, %v1237
        %v1328 = vpack.c.b16 %v1244, %v1238
        %v1329 = vpack.c.b16 %v1245, %v1239
        %v1330 = vpack.c.b16 %v1246, %v1240
        %v1331 = vpack.c.b16 %v1247, %v1241
        %v1332 = vpack.c.b16 %v1254, %v1248
        %v1333 = vpack.c.b16 %v1255, %v1249
        %v1334 = vpack.c.b16 %v1256, %v1250
        %v1335 = vpack.c.b16 %v1257, %v1251
        %v1336 = vpack.c.b16 %v1258, %v1252
        %v1337 = vpack.c.b16 %v1259, %v1253
        %v1338 = vpack.c.b16 %v1266, %v1260
        %v1339 = vpack.c.b16 %v1267, %v1261
        %v1340 = vpack.c.b16 %v1268, %v1262
        %v1341 = vpack.c.b16 %v1269, %v1263
        %v1342 = vpack.c.b16 %v1270, %v1264
        %v1343 = vpack.c.b16 %v1271, %v1265
        %v1344 = vpack.c.b16 %v1278, %v1272
        %v1345 = vpack.c.b16 %v1279, %v1273
        %v1346 = vpack.c.b16 %v1280, %v1274
        %v1347 = vpack.c.b16 %v1281, %v1275
        %v1348 = vpack.c.b16 %v1282, %v1276
        %v1349 = vpack.c.b16 %v1283, %v1277
        %v1350 = vpack.c.b16 %v1290, %v1284
        %v1351 = vpack.c.b16 %v1291, %v1285
        %v1352 = vpack.c.b16 %v1292, %v1286
        %v1353 = vpack.c.b16 %v1293, %v1287
        %v1354 = vpack.c.b16 %v1294, %v1288
        %v1355 = vpack.c.b16 %v1295, %v1289
        %v1356 = vpack.c.b16 %v1302, %v1296
        %v1357 = vpack.c.b16 %v1303, %v1297
        %v1358 = vpack.c.b16 %v1304, %v1298
        %v1359 = vpack.c.b16 %v1305, %v1299
        %v1360 = vpack.c.b16 %v1306, %v1300
        %v1361 = vpack.c.b16 %v1307, %v1301
        %v1362 = vpack.c.b16 %v1314, %v1308
        %v1363 = vpack.c.b16 %v1315, %v1309
        %v1364 = vpack.c.b16 %v1316, %v1310
        %v1365 = vpack.c.b16 %v1317, %v1311
        %v1366 = vpack.c.b16 %v1318, %v1312
        %v1367 = vpack.c.b16 %v1319, %v1313
        %1416 = vmatpush.bf16.msra.mxu0 %v1362
        %1417 = vmatpush.bf16.msra.mxu0 %v1356
        %1418 = vmatpush.bf16.msra.mxu0 %v1350
        %1419 = vmatpush.bf16.msra.mxu0 %v1344
        %1420 = vmatpush.bf16.msra.mxu0 %v1338
        %1421 = vmatpush.bf16.msra.mxu0 %v1332
        %1422 = vmatpush.bf16.msra.mxu0 %v1326
        %1423 = vmatpush.bf16.msra.mxu0 %v1320
        %1424 = vmatmul.bf16.gmra.mxu0 %v1127
        %v1425 = vpop.f32.mrf.mxu0
        %v1426 = vadd.f32 0.0, %v1425
        %v1427 = vpop.f32.mrf.mxu0
        %1428 = vdwg.mxu0
        %1429 = vmatpush.bf16.msra.mxu0 %v1363
        %1430 = vmatpush.bf16.msra.mxu0 %v1357
        %1431 = vmatpush.bf16.msra.mxu0 %v1351
        %1432 = vmatpush.bf16.msra.mxu0 %v1345
        %1433 = vmatpush.bf16.msra.mxu0 %v1339
        %1434 = vmatpush.bf16.msra.mxu0 %v1333
        %1435 = vmatpush.bf16.msra.mxu0 %v1327
        %1436 = vmatpush.bf16.msra.mxu0 %v1321
        %1437 = vmatmul.bf16.gmra.mxu0 %v1127
        %v1438 = vpop.f32.mrf.mxu0
        %v1439 = vadd.f32 0.0, %v1438
        %v1440 = vpop.f32.mrf.mxu0
        %1441 = vdwg.mxu0
        %1442 = vmatpush.bf16.msra.mxu0 %v1364
        %1443 = vmatpush.bf16.msra.mxu0 %v1358
        %1444 = vmatpush.bf16.msra.mxu0 %v1352
        %1445 = vmatpush.bf16.msra.mxu0 %v1346
        %1446 = vmatpush.bf16.msra.mxu0 %v1340
        %1447 = vmatpush.bf16.msra.mxu0 %v1334
        %1448 = vmatpush.bf16.msra.mxu0 %v1328
        %1449 = vmatpush.bf16.msra.mxu0 %v1322
        %1450 = vmatmul.bf16.gmra.mxu0 %v1127
        %v1451 = vpop.f32.mrf.mxu0
        %v1452 = vadd.f32 0.0, %v1451
        %v1453 = vpop.f32.mrf.mxu0
        %1454 = vdwg.mxu0
        %1455 = vmatpush.bf16.msra.mxu0 %v1365
        %1456 = vmatpush.bf16.msra.mxu0 %v1359
        %1457 = vmatpush.bf16.msra.mxu0 %v1353
        %1458 = vmatpush.bf16.msra.mxu0 %v1347
        %1459 = vmatpush.bf16.msra.mxu0 %v1341
        %1460 = vmatpush.bf16.msra.mxu0 %v1335
        %1461 = vmatpush.bf16.msra.mxu0 %v1329
        %1462 = vmatpush.bf16.msra.mxu0 %v1323
        %1463 = vmatmul.bf16.gmra.mxu0 %v1127
        %v1464 = vpop.f32.mrf.mxu0
        %v1465 = vadd.f32 0.0, %v1464
        %v1466 = vpop.f32.mrf.mxu0
        %1467 = vdwg.mxu0
        %1468 = vmatpush.bf16.msra.mxu0 %v1366
        %1469 = vmatpush.bf16.msra.mxu0 %v1360
        %1470 = vmatpush.bf16.msra.mxu0 %v1354
        %1471 = vmatpush.bf16.msra.mxu0 %v1348
        %1472 = vmatpush.bf16.msra.mxu0 %v1342
        %1473 = vmatpush.bf16.msra.mxu0 %v1336
        %1474 = vmatpush.bf16.msra.mxu0 %v1330
        %1475 = vmatpush.bf16.msra.mxu0 %v1324
        %1476 = vmatmul.bf16.gmra.mxu0 %v1127
        %v1477 = vpop.f32.mrf.mxu0
        %v1478 = vadd.f32 0.0, %v1477
        %v1479 = vpop.f32.mrf.mxu0
        %1480 = vdwg.mxu0
        %1481 = vmatpush.bf16.msra.mxu0 %v1367
        %1482 = vmatpush.bf16.msra.mxu0 %v1361
        %1483 = vmatpush.bf16.msra.mxu0 %v1355
        %1484 = vmatpush.bf16.msra.mxu0 %v1349
        %1485 = vmatpush.bf16.msra.mxu0 %v1343
        %1486 = vmatpush.bf16.msra.mxu0 %v1337
        %1487 = vmatpush.bf16.msra.mxu0 %v1331
        %1488 = vmatpush.bf16.msra.mxu0 %v1325
        %1489 = vmatmul.bf16.gmra.mxu0 %v1127
        %v1490 = vpop.f32.mrf.mxu0
        %v1491 = vadd.f32 0.0, %v1490
        %v1492 = vpop.f32.mrf.mxu0
        %1493 = vdwg.mxu0
        %v1494 = vpack.c.bf16 %v1426, %v1426
        %v1495 = vpack.c.bf16 %v1452, %v1452
        %v1496 = vpack.c.bf16 %v1478, %v1478
        %1497 = vmatpush.bf16.xpose.msra.mxu0 0
        %1498 = vmatpush.bf16.xpose.msra.mxu0 0
        %1499 = vmatpush.bf16.xpose.msra.mxu0 0
        %1500 = vmatpush.bf16.xpose.msra.mxu0 0
        %1501 = vmatpush.bf16.xpose.msra.mxu0 0
        %1502 = vmatpush.bf16.xpose.msra.mxu0 0
        %1503 = vmatpush.bf16.xpose.msra.mxu0 0
        %1504 = vmatpush.bf16.xpose.msra.mxu0 %v1495
        %1505 = vmatmul.bf16.gmra.mxu0 %v1494
        %v1506 = vpop.f32.mrf.mxu0
        %v1507 = vadd.f32 0.0, %v1506
        %v1508 = vpop.f32.mrf.mxu0
        %1509 = vdwg.mxu0
        %vm1510 = vcmask 64512
        %v1511 = vsel %vm1510, %v1507, -inf
        %1512 = vmax.xlane.f32.xlu0 %v1511
        %v1513 = vpop.xlane.xlu0 %1512
        %v1514 = vsub.f32 %v1507, %v1513
        %v1515 = vmul.f32 %v1514, 1.442695
        %v1516 = vpow.pop %v1515
        %v1517 = vsel %vm1510, %v1516, 0.0
        %1518 = vadd.xlane.f32.xlu0 %v1517
        %v1519 = vpop.xlane.xlu0 %1518
        %v1520 = vrcp.pop %v1519
        %v1521 = vmul.f32 %v1516, %v1520
        %v1522 = vpack.c.bf16 %v1521, %v1521
        %v1524 = vsel %vm1510, %v1522, 0
        %vm1526 = vcmask 1043456
        %v1528 = vsel %vm1526, %v1496, 0
        %1530 = vmatpush.bf16.msra.mxu0 0
        %1531 = vmatpush.bf16.msra.mxu0 0
        %1532 = vmatpush.bf16.msra.mxu0 0
        %1533 = vmatpush.bf16.msra.mxu0 0
        %1534 = vmatpush.bf16.msra.mxu0 0
        %1535 = vmatpush.bf16.msra.mxu0 0
        %1536 = vmatpush.bf16.msra.mxu0 0
        %1537 = vmatpush.bf16.msra.mxu0 %v1528
        %1538 = vmatmul.bf16.gmra.mxu0 %v1524
        %v1539 = vpop.f32.mrf.mxu0
        %v1540 = vadd.f32 0.0, %v1539
        %v1541 = vpop.f32.mrf.mxu0
        %1542 = vdwg.mxu0
        %v1543 = vld [vmem:[#allocation6] sm:$0xf]
        %v1544 = vld [vmem:[#allocation6 + $0x4] sm:$0xf]
        %v1545 = vld [vmem:[#allocation6 + $0x8] sm:$0xf]
        %v1546 = vld [vmem:[#allocation6 + $0xc] sm:$0xf]
        %v1547 = vld [vmem:[#allocation6 + $0x10] sm:$0xf]
        %v1548 = vld [vmem:[#allocation6 + $0x14] sm:$0xf]
        %v1549 = vld [vmem:[#allocation6 + $0x18] sm:$0xf]
        %v1550 = vld [vmem:[#allocation6 + $0x1c] sm:$0xf]
        %v1551 = vld [vmem:[#allocation6 + $0x20] sm:$0xf]
        %v1552 = vld [vmem:[#allocation6 + $0x24] sm:$0xf]
        %v1553 = vld [vmem:[#allocation6 + $0x28] sm:$0xf]
        %v1554 = vld [vmem:[#allocation6 + $0x2c] sm:$0xf]
        %v1555 = vld [vmem:[#allocation6 + $0x30] sm:$0xf]
        %v1556 = vld [vmem:[#allocation6 + $0x34] sm:$0xf]
        %v1557 = vld [vmem:[#allocation6 + $0x38] sm:$0xf]
        %v1558 = vld [vmem:[#allocation6 + $0x3c] sm:$0xf]
        %v1559 = vpack.c.bf16 %v1540, %v1540
        %v1576 = vunpack.c.l.b16 %v1543
        %v1577 = vunpack.c.l.b16 %v1544
        %v1578 = vunpack.c.l.b16 %v1545
        %v1579 = vunpack.c.l.b16 %v1546
        %v1580 = vunpack.c.l.b16 %v1547
        %v1581 = vunpack.c.l.b16 %v1548
        %v1582 = vunpack.c.l.b16 %v1549
        %v1583 = vunpack.c.l.b16 %v1550
        %v1584 = vunpack.c.l.b16 %v1551
        %v1585 = vunpack.c.l.b16 %v1552
        %v1586 = vunpack.c.l.b16 %v1553
        %v1587 = vunpack.c.l.b16 %v1554
        %v1588 = vunpack.c.l.b16 %v1555
        %v1589 = vunpack.c.l.b16 %v1556
        %v1590 = vunpack.c.l.b16 %v1557
        %v1591 = vunpack.c.l.b16 %v1558
        %v1592 = vpack.c.b16 %v1577, %v1576
        %v1593 = vpack.c.b16 %v1579, %v1578
        %v1594 = vpack.c.b16 %v1581, %v1580
        %v1595 = vpack.c.b16 %v1583, %v1582
        %v1596 = vpack.c.b16 %v1585, %v1584
        %v1597 = vpack.c.b16 %v1587, %v1586
        %v1598 = vpack.c.b16 %v1589, %v1588
        %v1599 = vpack.c.b16 %v1591, %v1590
        %1608 = vmatpush.bf16.msra.mxu0 %v1599
        %1609 = vmatpush.bf16.msra.mxu0 %v1598
        %1610 = vmatpush.bf16.msra.mxu0 %v1597
        %1611 = vmatpush.bf16.msra.mxu0 %v1596
        %1612 = vmatpush.bf16.msra.mxu0 %v1595
        %1613 = vmatpush.bf16.msra.mxu0 %v1594
        %1614 = vmatpush.bf16.msra.mxu0 %v1593
        %1615 = vmatpush.bf16.msra.mxu0 %v1592
        %1616 = vmatmul.bf16.gmra.mxu0 %v1559
        %v1617 = vpop.f32.mrf.mxu0
        %v1618 = vadd.f32 0.0, %v1617
        %v1619 = vpop.f32.mrf.mxu0
        %1620 = vdwg.mxu0
        %v1621 = vadd.f32 %v1091, %v1618
        %v1622 = vpack.c.bf16 %v1439, %v1439
        %v1623 = vpack.c.bf16 %v1465, %v1465
        %v1624 = vpack.c.bf16 %v1491, %v1491
        %1625 = vmatpush.bf16.xpose.msra.mxu0 0
        %1626 = vmatpush.bf16.xpose.msra.mxu0 0
        %1627 = vmatpush.bf16.xpose.msra.mxu0 0
        %1628 = vmatpush.bf16.xpose.msra.mxu0 0
        %1629 = vmatpush.bf16.xpose.msra.mxu0 0
        %1630 = vmatpush.bf16.xpose.msra.mxu0 0
        %1631 = vmatpush.bf16.xpose.msra.mxu0 0
        %1632 = vmatpush.bf16.xpose.msra.mxu0 %v1623
        %1633 = vmatmul.bf16.gmra.mxu0 %v1622
        %v1634 = vpop.f32.mrf.mxu0
        %v1635 = vadd.f32 0.0, %v1634
        %v1636 = vpop.f32.mrf.mxu0
        %1637 = vdwg.mxu0
        %v1638 = vsel %vm1510, %v1635, -inf
        %1639 = vmax.xlane.f32.xlu0 %v1638
        %v1640 = vpop.xlane.xlu0 %1639
        %v1641 = vsub.f32 %v1635, %v1640
        %v1642 = vmul.f32 %v1641, 1.442695
        %v1643 = vpow.pop %v1642
        %v1644 = vsel %vm1510, %v1643, 0.0
        %1645 = vadd.xlane.f32.xlu0 %v1644
        %v1646 = vpop.xlane.xlu0 %1645
        %v1647 = vrcp.pop %v1646
        %v1648 = vmul.f32 %v1643, %v1647
        %v1649 = vpack.c.bf16 %v1648, %v1648
        %v1651 = vsel %vm1510, %v1649, 0
        %v1654 = vsel %vm1526, %v1624, 0
        %1656 = vmatpush.bf16.msra.mxu0 0
        %1657 = vmatpush.bf16.msra.mxu0 0
        %1658 = vmatpush.bf16.msra.mxu0 0
        %1659 = vmatpush.bf16.msra.mxu0 0
        %1660 = vmatpush.bf16.msra.mxu0 0
        %1661 = vmatpush.bf16.msra.mxu0 0
        %1662 = vmatpush.bf16.msra.mxu0 0
        %1663 = vmatpush.bf16.msra.mxu0 %v1654
        %1664 = vmatmul.bf16.gmra.mxu0 %v1651
        %v1665 = vpop.f32.mrf.mxu0
        %v1666 = vadd.f32 0.0, %v1665
        %v1667 = vpop.f32.mrf.mxu0
        %1668 = vdwg.mxu0
        %v1669 = vld [vmem:[#allocation6 + $0x40] sm:$0xf]
        %v1670 = vld [vmem:[#allocation6 + $0x44] sm:$0xf]
        %v1671 = vld [vmem:[#allocation6 + $0x48] sm:$0xf]
        %v1672 = vld [vmem:[#allocation6 + $0x4c] sm:$0xf]
        %v1673 = vld [vmem:[#allocation6 + $0x50] sm:$0xf]
        %v1674 = vld [vmem:[#allocation6 + $0x54] sm:$0xf]
        %v1675 = vld [vmem:[#allocation6 + $0x58] sm:$0xf]
        %v1676 = vld [vmem:[#allocation6 + $0x5c] sm:$0xf]
        %v1677 = vld [vmem:[#allocation6 + $0x60] sm:$0xf]
        %v1678 = vld [vmem:[#allocation6 + $0x64] sm:$0xf]
        %v1679 = vld [vmem:[#allocation6 + $0x68] sm:$0xf]
        %v1680 = vld [vmem:[#allocation6 + $0x6c] sm:$0xf]
        %v1681 = vld [vmem:[#allocation6 + $0x70] sm:$0xf]
        %v1682 = vld [vmem:[#allocation6 + $0x74] sm:$0xf]
        %v1683 = vld [vmem:[#allocation6 + $0x78] sm:$0xf]
        %v1684 = vld [vmem:[#allocation6 + $0x7c] sm:$0xf]
        %v1685 = vpack.c.bf16 %v1666, %v1666
        %v1702 = vunpack.c.l.b16 %v1669
        %v1703 = vunpack.c.l.b16 %v1670
        %v1704 = vunpack.c.l.b16 %v1671
        %v1705 = vunpack.c.l.b16 %v1672
        %v1706 = vunpack.c.l.b16 %v1673
        %v1707 = vunpack.c.l.b16 %v1674
        %v1708 = vunpack.c.l.b16 %v1675
        %v1709 = vunpack.c.l.b16 %v1676
        %v1710 = vunpack.c.l.b16 %v1677
        %v1711 = vunpack.c.l.b16 %v1678
        %v1712 = vunpack.c.l.b16 %v1679
        %v1713 = vunpack.c.l.b16 %v1680
        %v1714 = vunpack.c.l.b16 %v1681
        %v1715 = vunpack.c.l.b16 %v1682
        %v1716 = vunpack.c.l.b16 %v1683
        %v1717 = vunpack.c.l.b16 %v1684
        %v1718 = vpack.c.b16 %v1703, %v1702
        %v1719 = vpack.c.b16 %v1705, %v1704
        %v1720 = vpack.c.b16 %v1707, %v1706
        %v1721 = vpack.c.b16 %v1709, %v1708
        %v1722 = vpack.c.b16 %v1711, %v1710
        %v1723 = vpack.c.b16 %v1713, %v1712
        %v1724 = vpack.c.b16 %v1715, %v1714
        %v1725 = vpack.c.b16 %v1717, %v1716
        %1734 = vmatpush.bf16.msra.mxu0 %v1725
        %1735 = vmatpush.bf16.msra.mxu0 %v1724
        %1736 = vmatpush.bf16.msra.mxu0 %v1723
        %1737 = vmatpush.bf16.msra.mxu0 %v1722
        %1738 = vmatpush.bf16.msra.mxu0 %v1721
        %1739 = vmatpush.bf16.msra.mxu0 %v1720
        %1740 = vmatpush.bf16.msra.mxu0 %v1719
        %1741 = vmatpush.bf16.msra.mxu0 %v1718
        %1742 = vmatmul.bf16.gmra.mxu0 %v1685
        %v1743 = vpop.f32.mrf.mxu0
        %v1744 = vadd.f32 0.0, %v1743
        %v1745 = vpop.f32.mrf.mxu0
        %1746 = vdwg.mxu0
        %v1747 = vadd.f32 %v1621, %v1744
        %v1748 = vld [vmem:[%s7] sm:$0x1]
        %v1749 = vperm.slane %v1748, 0
        %v1750 = vadd.f32 %v1747, %v1749
        %v1751 = vld [vmem:[%s8] sm:$0x1]
        %v1752 = vld [vmem:[%s9] sm:$0x1]
        %1753 = vadd.xlane.f32.xlu0 %v1750
        %v1754 = vpop.xlane.xlu0 %1753
        %v1755 = vmul.f32 %v1754, %v1104
        %v1756 = vsub.f32 %v1750, %v1755
        %v1757 = vmul.f32 %v1756, %v1756
        %1758 = vadd.xlane.f32.xlu0 %v1757
        %v1759 = vpop.xlane.xlu0 %1758
        %v1760 = vmul.f32 %v1759, %v1104
        %v1761 = vadd.f32 %v1760, 1e-05
        %v1762 = vrsqrt.pop %v1761
        %v1763 = vmul.f32 %v1762, %v1761
        %v1764 = vmul.f32 %v1763, %v1762
        %v1765 = vmul.f32 0.5, %v1764
        %v1766 = vsub.f32 1.5, %v1765
        %v1767 = vmul.f32 %v1762, %v1766
        %vm1768 = vweird.f32 %v1761
        %vm1769 = vweird.f32 %v1762
        %vm1770 = vmor %vm1768, %vm1769
        %v1771 = vsel %vm1770, %v1762, %v1767
        %v1772 = vmul.f32 %v1756, %v1771
        %v1773 = vperm.slane %v1751, 0
        %v1774 = vmul.f32 %v1772, %v1773
        %v1775 = vperm.slane %v1752, 0
        %v1776 = vadd.f32 %v1774, %v1775
        %v1777 = vpack.c.bf16 %v1776, %v1776
        %v1778 = vld [vmem:[#allocation7] sm:$0xf]
        %v1779 = vld [vmem:[#allocation7 + $0x4] sm:$0xf]
        %v1780 = vld [vmem:[#allocation7 + $0x8] sm:$0xf]
        %v1781 = vld [vmem:[#allocation7 + $0xc] sm:$0xf]
        %v1782 = vld [vmem:[#allocation7 + $0x10] sm:$0xf]
        %v1783 = vld [vmem:[#allocation7 + $0x14] sm:$0xf]
        %v1784 = vld [vmem:[#allocation7 + $0x18] sm:$0xf]
        %v1785 = vld [vmem:[#allocation7 + $0x1c] sm:$0xf]
        %v1786 = vld [vmem:[#allocation7 + $0x20] sm:$0xf]
        %v1787 = vld [vmem:[#allocation7 + $0x24] sm:$0xf]
        %v1788 = vld [vmem:[#allocation7 + $0x28] sm:$0xf]
        %v1789 = vld [vmem:[#allocation7 + $0x2c] sm:$0xf]
        %v1790 = vld [vmem:[#allocation7 + $0x30] sm:$0xf]
        %v1791 = vld [vmem:[#allocation7 + $0x34] sm:$0xf]
        %v1792 = vld [vmem:[#allocation7 + $0x38] sm:$0xf]
        %v1793 = vld [vmem:[#allocation7 + $0x3c] sm:$0xf]
        %v1794 = vld [vmem:[%s11] sm:$0x1]
        %v1795 = vperm.slane %v1794, 0
        %v1812 = vunpack.c.l.b16 %v1778
        %v1813 = vunpack.c.l.b16 %v1779
        %v1814 = vunpack.c.l.b16 %v1780
        %v1815 = vunpack.c.l.b16 %v1781
        %v1816 = vunpack.c.l.b16 %v1782
        %v1817 = vunpack.c.l.b16 %v1783
        %v1818 = vunpack.c.l.b16 %v1784
        %v1819 = vunpack.c.l.b16 %v1785
        %v1820 = vunpack.c.l.b16 %v1786
        %v1821 = vunpack.c.l.b16 %v1787
        %v1822 = vunpack.c.l.b16 %v1788
        %v1823 = vunpack.c.l.b16 %v1789
        %v1824 = vunpack.c.l.b16 %v1790
        %v1825 = vunpack.c.l.b16 %v1791
        %v1826 = vunpack.c.l.b16 %v1792
        %v1827 = vunpack.c.l.b16 %v1793
        %v1828 = vpack.c.b16 %v1813, %v1812
        %v1829 = vpack.c.b16 %v1815, %v1814
        %v1830 = vpack.c.b16 %v1817, %v1816
        %v1831 = vpack.c.b16 %v1819, %v1818
        %v1832 = vpack.c.b16 %v1821, %v1820
        %v1833 = vpack.c.b16 %v1823, %v1822
        %v1834 = vpack.c.b16 %v1825, %v1824
        %v1835 = vpack.c.b16 %v1827, %v1826
        %1844 = vmatpush.bf16.msra.mxu0 %v1835
        %1845 = vmatpush.bf16.msra.mxu0 %v1834
        %1846 = vmatpush.bf16.msra.mxu0 %v1833
        %1847 = vmatpush.bf16.msra.mxu0 %v1832
        %1848 = vmatpush.bf16.msra.mxu0 %v1831
        %1849 = vmatpush.bf16.msra.mxu0 %v1830
        %1850 = vmatpush.bf16.msra.mxu0 %v1829
        %1851 = vmatpush.bf16.msra.mxu0 %v1828
        %1852 = vmatmul.bf16.gmra.mxu0 %v1777
        %v1853 = vpop.f32.mrf.mxu0
        %v1854 = vadd.f32 %v1795, %v1853
        %v1855 = vpop.f32.mrf.mxu0
        %1856 = vdwg.mxu0
        %v1857 = vmul.f32 %v1854, %v1854
        %v1858 = vmul.f32 %v1854, %v1857
        %v1859 = vmul.f32 %v1858, 0.044715
        %v1860 = vadd.f32 %v1854, %v1859
        %v1861 = vmul.f32 %v1860, 0.7978846
        %v1862 = vtanh.pop %v1861
        %v1863 = vadd.f32 %v1862, 1.0
        %v1864 = vmul.f32 %v1863, 0.5
        %v1865 = vmul.f32 %v1854, %v1864
        %v1866 = vld [vmem:[#allocation9] sm:$0xf]
        %v1867 = vld [vmem:[#allocation9 + $0x4] sm:$0xf]
        %v1868 = vld [vmem:[#allocation9 + $0x8] sm:$0xf]
        %v1869 = vld [vmem:[#allocation9 + $0xc] sm:$0xf]
        %v1870 = vld [vmem:[#allocation9 + $0x10] sm:$0xf]
        %v1871 = vld [vmem:[#allocation9 + $0x14] sm:$0xf]
        %v1872 = vld [vmem:[#allocation9 + $0x18] sm:$0xf]
        %v1873 = vld [vmem:[#allocation9 + $0x1c] sm:$0xf]
        %v1874 = vld [vmem:[#allocation9 + $0x20] sm:$0xf]
        %v1875 = vld [vmem:[#allocation9 + $0x24] sm:$0xf]
        %v1876 = vld [vmem:[#allocation9 + $0x28] sm:$0xf]
        %v1877 = vld [vmem:[#allocation9 + $0x2c] sm:$0xf]
        %v1878 = vld [vmem:[#allocation9 + $0x30] sm:$0xf]
        %v1879 = vld [vmem:[#allocation9 + $0x34] sm:$0xf]
        %v1880 = vld [vmem:[#allocation9 + $0x38] sm:$0xf]
        %v1881 = vld [vmem:[#allocation9 + $0x3c] sm:$0xf]
        %v1882 = vpack.c.bf16 %v1865, %v1865
        %v1899 = vunpack.c.l.b16 %v1866
        %v1900 = vunpack.c.l.b16 %v1867
        %v1901 = vunpack.c.l.b16 %v1868
        %v1902 = vunpack.c.l.b16 %v1869
        %v1903 = vunpack.c.l.b16 %v1870
        %v1904 = vunpack.c.l.b16 %v1871
        %v1905 = vunpack.c.l.b16 %v1872
        %v1906 = vunpack.c.l.b16 %v1873
        %v1907 = vunpack.c.l.b16 %v1874
        %v1908 = vunpack.c.l.b16 %v1875
        %v1909 = vunpack.c.l.b16 %v1876
        %v1910 = vunpack.c.l.b16 %v1877
        %v1911 = vunpack.c.l.b16 %v1878
        %v1912 = vunpack.c.l.b16 %v1879
        %v1913 = vunpack.c.l.b16 %v1880
        %v1914 = vunpack.c.l.b16 %v1881
        %v1915 = vpack.c.b16 %v1900, %v1899
        %v1916 = vpack.c.b16 %v1902, %v1901
        %v1917 = vpack.c.b16 %v1904, %v1903
        %v1918 = vpack.c.b16 %v1906, %v1905
        %v1919 = vpack.c.b16 %v1908, %v1907
        %v1920 = vpack.c.b16 %v1910, %v1909
        %v1921 = vpack.c.b16 %v1912, %v1911
        %v1922 = vpack.c.b16 %v1914, %v1913
        %1931 = vmatpush.bf16.msra.mxu0 %v1922
        %1932 = vmatpush.bf16.msra.mxu0 %v1921
        %1933 = vmatpush.bf16.msra.mxu0 %v1920
        %1934 = vmatpush.bf16.msra.mxu0 %v1919
        %1935 = vmatpush.bf16.msra.mxu0 %v1918
        %1936 = vmatpush.bf16.msra.mxu0 %v1917
        %1937 = vmatpush.bf16.msra.mxu0 %v1916
        %1938 = vmatpush.bf16.msra.mxu0 %v1915
        %1939 = vmatmul.bf16.gmra.mxu0 %v1882
        %v1940 = vpop.f32.mrf.mxu0
        %v1941 = vadd.f32 0.0, %v1940
        %v1942 = vpop.f32.mrf.mxu0
        %1943 = vdwg.mxu0
        %v1944 = vadd.f32 %v1750, %v1941
        %v1945 = vld [vmem:[%s13] sm:$0x1]
        %v1946 = vperm.slane %v1945, 0
        %v1947 = vadd.f32 %v1944, %v1946
        %v1948 = vld [vmem:[%s3 + $0x1] sm:$0x1]
        %v1949 = vld [vmem:[%s4 + $0x1] sm:$0x1]
        %1950 = vadd.xlane.f32.xlu0 %v1947
        %v1951 = vpop.xlane.xlu0 %1950
        %v1952 = vmul.f32 %v1951, %v1104
        %v1953 = vsub.f32 %v1947, %v1952
        %v1954 = vmul.f32 %v1953, %v1953
        %1955 = vadd.xlane.f32.xlu0 %v1954
        %v1956 = vpop.xlane.xlu0 %1955
        %v1957 = vmul.f32 %v1956, %v1104
        %v1958 = vadd.f32 %v1957, 1e-05
        %v1959 = vrsqrt.pop %v1958
        %v1960 = vmul.f32 %v1959, %v1958
        %v1961 = vmul.f32 %v1960, %v1959
        %v1962 = vmul.f32 0.5, %v1961
        %v1963 = vsub.f32 1.5, %v1962
        %v1964 = vmul.f32 %v1959, %v1963
        %vm1965 = vweird.f32 %v1958
        %vm1966 = vweird.f32 %v1959
        %vm1967 = vmor %vm1965, %vm1966
        %v1968 = vsel %vm1967, %v1959, %v1964
        %v1969 = vmul.f32 %v1953, %v1968
        %v1970 = vperm.slane %v1948, 0
        %v1971 = vmul.f32 %v1969, %v1970
        %v1972 = vperm.slane %v1949, 0
        %v1973 = vadd.f32 %v1971, %v1972
        %v1974 = vpack.c.bf16 %v1973, %v1973
        %s1975 = scalar_lea.vmem [#allocation4], 384
        %v1976 = vld [vmem:[%s1975] sm:$0xff]
        %v1977 = vld [vmem:[%s1975 + $0x8] sm:$0xff]
        %v1978 = vld [vmem:[%s1975 + $0x10] sm:$0xff]
        %v1979 = vld [vmem:[%s1975 + $0x18] sm:$0xff]
        %v1980 = vld [vmem:[%s1975 + $0x20] sm:$0xff]
        %v1981 = vld [vmem:[%s1975 + $0x28] sm:$0xff]
        %v1982 = vld [vmem:[%s1975 + $0x30] sm:$0xff]
        %v1983 = vld [vmem:[%s1975 + $0x38] sm:$0xff]
        %v1984 = vld [vmem:[%s1975 + $0x40] sm:$0xff]
        %v1985 = vld [vmem:[%s1975 + $0x48] sm:$0xff]
        %v1986 = vld [vmem:[%s1975 + $0x50] sm:$0xff]
        %v1987 = vld [vmem:[%s1975 + $0x58] sm:$0xff]
        %v1988 = vld [vmem:[%s1975 + $0x60] sm:$0xff]
        %v1989 = vld [vmem:[%s1975 + $0x68] sm:$0xff]
        %v1990 = vld [vmem:[%s1975 + $0x70] sm:$0xff]
        %v1991 = vld [vmem:[%s1975 + $0x78] sm:$0xff]
        %v1992 = vld [vmem:[%s1975 + $0x80] sm:$0xff]
        %v1993 = vld [vmem:[%s1975 + $0x88] sm:$0xff]
        %v1994 = vld [vmem:[%s1975 + $0x90] sm:$0xff]
        %v1995 = vld [vmem:[%s1975 + $0x98] sm:$0xff]
        %v1996 = vld [vmem:[%s1975 + $0xa0] sm:$0xff]
        %v1997 = vld [vmem:[%s1975 + $0xa8] sm:$0xff]
        %v1998 = vld [vmem:[%s1975 + $0xb0] sm:$0xff]
        %v1999 = vld [vmem:[%s1975 + $0xb8] sm:$0xff]
        %v2000 = vld [vmem:[%s1975 + $0xc0] sm:$0xff]
        %v2001 = vld [vmem:[%s1975 + $0xc8] sm:$0xff]
        %v2002 = vld [vmem:[%s1975 + $0xd0] sm:$0xff]
        %v2003 = vld [vmem:[%s1975 + $0xd8] sm:$0xff]
        %v2004 = vld [vmem:[%s1975 + $0xe0] sm:$0xff]
        %v2005 = vld [vmem:[%s1975 + $0xe8] sm:$0xff]
        %v2006 = vld [vmem:[%s1975 + $0xf0] sm:$0xff]
        %v2007 = vld [vmem:[%s1975 + $0xf8] sm:$0xff]
        %v2008 = vld [vmem:[%s1975 + $0x100] sm:$0xff]
        %v2009 = vld [vmem:[%s1975 + $0x108] sm:$0xff]
        %v2010 = vld [vmem:[%s1975 + $0x110] sm:$0xff]
        %v2011 = vld [vmem:[%s1975 + $0x118] sm:$0xff]
        %v2012 = vld [vmem:[%s1975 + $0x120] sm:$0xff]
        %v2013 = vld [vmem:[%s1975 + $0x128] sm:$0xff]
        %v2014 = vld [vmem:[%s1975 + $0x130] sm:$0xff]
        %v2015 = vld [vmem:[%s1975 + $0x138] sm:$0xff]
        %v2016 = vld [vmem:[%s1975 + $0x140] sm:$0xff]
        %v2017 = vld [vmem:[%s1975 + $0x148] sm:$0xff]
        %v2018 = vld [vmem:[%s1975 + $0x150] sm:$0xff]
        %v2019 = vld [vmem:[%s1975 + $0x158] sm:$0xff]
        %v2020 = vld [vmem:[%s1975 + $0x160] sm:$0xff]
        %v2021 = vld [vmem:[%s1975 + $0x168] sm:$0xff]
        %v2022 = vld [vmem:[%s1975 + $0x170] sm:$0xff]
        %v2023 = vld [vmem:[%s1975 + $0x178] sm:$0xff]
        %v2072 = vunpack.c.l.b16 %v1976
        %v2073 = vunpack.c.h.b16 %v1976
        %v2074 = vunpack.c.l.b16 %v1977
        %v2075 = vunpack.c.h.b16 %v1977
        %v2076 = vunpack.c.l.b16 %v1978
        %v2077 = vunpack.c.h.b16 %v1978
        %v2078 = vunpack.c.l.b16 %v1979
        %v2079 = vunpack.c.h.b16 %v1979
        %v2080 = vunpack.c.l.b16 %v1980
        %v2081 = vunpack.c.h.b16 %v1980
        %v2082 = vunpack.c.l.b16 %v1981
        %v2083 = vunpack.c.h.b16 %v1981
        %v2084 = vunpack.c.l.b16 %v1982
        %v2085 = vunpack.c.h.b16 %v1982
        %v2086 = vunpack.c.l.b16 %v1983
        %v2087 = vunpack.c.h.b16 %v1983
        %v2088 = vunpack.c.l.b16 %v1984
        %v2089 = vunpack.c.h.b16 %v1984
        %v2090 = vunpack.c.l.b16 %v1985
        %v2091 = vunpack.c.h.b16 %v1985
        %v2092 = vunpack.c.l.b16 %v1986
        %v2093 = vunpack.c.h.b16 %v1986
        %v2094 = vunpack.c.l.b16 %v1987
        %v2095 = vunpack.c.h.b16 %v1987
        %v2096 = vunpack.c.l.b16 %v1988
        %v2097 = vunpack.c.h.b16 %v1988
        %v2098 = vunpack.c.l.b16 %v1989
        %v2099 = vunpack.c.h.b16 %v1989
        %v2100 = vunpack.c.l.b16 %v1990
        %v2101 = vunpack.c.h.b16 %v1990
        %v2102 = vunpack.c.l.b16 %v1991
        %v2103 = vunpack.c.h.b16 %v1991
        %v2104 = vunpack.c.l.b16 %v1992
        %v2105 = vunpack.c.h.b16 %v1992
        %v2106 = vunpack.c.l.b16 %v1993
        %v2107 = vunpack.c.h.b16 %v1993
        %v2108 = vunpack.c.l.b16 %v1994
        %v2109 = vunpack.c.h.b16 %v1994
        %v2110 = vunpack.c.l.b16 %v1995
        %v2111 = vunpack.c.h.b16 %v1995
        %v2112 = vunpack.c.l.b16 %v1996
        %v2113 = vunpack.c.h.b16 %v1996
        %v2114 = vunpack.c.l.b16 %v1997
        %v2115 = vunpack.c.h.b16 %v1997
        %v2116 = vunpack.c.l.b16 %v1998
        %v2117 = vunpack.c.h.b16 %v1998
        %v2118 = vunpack.c.l.b16 %v1999
        %v2119 = vunpack.c.h.b16 %v1999
        %v2120 = vunpack.c.l.b16 %v2000
        %v2121 = vunpack.c.h.b16 %v2000
        %v2122 = vunpack.c.l.b16 %v2001
        %v2123 = vunpack.c.h.b16 %v2001
        %v2124 = vunpack.c.l.b16 %v2002
        %v2125 = vunpack.c.h.b16 %v2002
        %v2126 = vunpack.c.l.b16 %v2003
        %v2127 = vunpack.c.h.b16 %v2003
        %v2128 = vunpack.c.l.b16 %v2004
        %v2129 = vunpack.c.h.b16 %v2004
        %v2130 = vunpack.c.l.b16 %v2005
        %v2131 = vunpack.c.h.b16 %v2005
        %v2132 = vunpack.c.l.b16 %v2006
        %v2133 = vunpack.c.h.b16 %v2006
        %v2134 = vunpack.c.l.b16 %v2007
        %v2135 = vunpack.c.h.b16 %v2007
        %v2136 = vunpack.c.l.b16 %v2008
        %v2137 = vunpack.c.h.b16 %v2008
        %v2138 = vunpack.c.l.b16 %v2009
        %v2139 = vunpack.c.h.b16 %v2009
        %v2140 = vunpack.c.l.b16 %v2010
        %v2141 = vunpack.c.h.b16 %v2010
        %v2142 = vunpack.c.l.b16 %v2011
        %v2143 = vunpack.c.h.b16 %v2011
        %v2144 = vunpack.c.l.b16 %v2012
        %v2145 = vunpack.c.h.b16 %v2012
        %v2146 = vunpack.c.l.b16 %v2013
        %v2147 = vunpack.c.h.b16 %v2013
        %v2148 = vunpack.c.l.b16 %v2014
        %v2149 = vunpack.c.h.b16 %v2014
        %v2150 = vunpack.c.l.b16 %v2015
        %v2151 = vunpack.c.h.b16 %v2015
        %v2152 = vunpack.c.l.b16 %v2016
        %v2153 = vunpack.c.h.b16 %v2016
        %v2154 = vunpack.c.l.b16 %v2017
        %v2155 = vunpack.c.h.b16 %v2017
        %v2156 = vunpack.c.l.b16 %v2018
        %v2157 = vunpack.c.h.b16 %v2018
        %v2158 = vunpack.c.l.b16 %v2019
        %v2159 = vunpack.c.h.b16 %v2019
        %v2160 = vunpack.c.l.b16 %v2020
        %v2161 = vunpack.c.h.b16 %v2020
        %v2162 = vunpack.c.l.b16 %v2021
        %v2163 = vunpack.c.h.b16 %v2021
        %v2164 = vunpack.c.l.b16 %v2022
        %v2165 = vunpack.c.h.b16 %v2022
        %v2166 = vunpack.c.l.b16 %v2023
        %v2167 = vunpack.c.h.b16 %v2023
        %v2168 = vpack.c.b16 %v2078, %v2072
        %v2169 = vpack.c.b16 %v2079, %v2073
        %v2170 = vpack.c.b16 %v2080, %v2074
        %v2171 = vpack.c.b16 %v2081, %v2075
        %v2172 = vpack.c.b16 %v2082, %v2076
        %v2173 = vpack.c.b16 %v2083, %v2077
        %v2174 = vpack.c.b16 %v2090, %v2084
        %v2175 = vpack.c.b16 %v2091, %v2085
        %v2176 = vpack.c.b16 %v2092, %v2086
        %v2177 = vpack.c.b16 %v2093, %v2087
        %v2178 = vpack.c.b16 %v2094, %v2088
        %v2179 = vpack.c.b16 %v2095, %v2089
        %v2180 = vpack.c.b16 %v2102, %v2096
        %v2181 = vpack.c.b16 %v2103, %v2097
        %v2182 = vpack.c.b16 %v2104, %v2098
        %v2183 = vpack.c.b16 %v2105, %v2099
        %v2184 = vpack.c.b16 %v2106, %v2100
        %v2185 = vpack.c.b16 %v2107, %v2101
        %v2186 = vpack.c.b16 %v2114, %v2108
        %v2187 = vpack.c.b16 %v2115, %v2109
        %v2188 = vpack.c.b16 %v2116, %v2110
        %v2189 = vpack.c.b16 %v2117, %v2111
        %v2190 = vpack.c.b16 %v2118, %v2112
        %v2191 = vpack.c.b16 %v2119, %v2113
        %v2192 = vpack.c.b16 %v2126, %v2120
        %v2193 = vpack.c.b16 %v2127, %v2121
        %v2194 = vpack.c.b16 %v2128, %v2122
        %v2195 = vpack.c.b16 %v2129, %v2123
        %v2196 = vpack.c.b16 %v2130, %v2124
        %v2197 = vpack.c.b16 %v2131, %v2125
        %v2198 = vpack.c.b16 %v2138, %v2132
        %v2199 = vpack.c.b16 %v2139, %v2133
        %v2200 = vpack.c.b16 %v2140, %v2134
        %v2201 = vpack.c.b16 %v2141, %v2135
        %v2202 = vpack.c.b16 %v2142, %v2136
        %v2203 = vpack.c.b16 %v2143, %v2137
        %v2204 = vpack.c.b16 %v2150, %v2144
        %v2205 = vpack.c.b16 %v2151, %v2145
        %v2206 = vpack.c.b16 %v2152, %v2146
        %v2207 = vpack.c.b16 %v2153, %v2147
        %v2208 = vpack.c.b16 %v2154, %v2148
        %v2209 = vpack.c.b16 %v2155, %v2149
        %v2210 = vpack.c.b16 %v2162, %v2156
        %v2211 = vpack.c.b16 %v2163, %v2157
        %v2212 = vpack.c.b16 %v2164, %v2158
        %v2213 = vpack.c.b16 %v2165, %v2159
        %v2214 = vpack.c.b16 %v2166, %v2160
        %v2215 = vpack.c.b16 %v2167, %v2161
        %2264 = vmatpush.bf16.msra.mxu0 %v2210
        %2265 = vmatpush.bf16.msra.mxu0 %v2204
        %2266 = vmatpush.bf16.msra.mxu0 %v2198
        %2267 = vmatpush.bf16.msra.mxu0 %v2192
        %2268 = vmatpush.bf16.msra.mxu0 %v2186
        %2269 = vmatpush.bf16.msra.mxu0 %v2180
        %2270 = vmatpush.bf16.msra.mxu0 %v2174
        %2271 = vmatpush.bf16.msra.mxu0 %v2168
        %2272 = vmatmul.bf16.gmra.mxu0 %v1974
        %v2273 = vpop.f32.mrf.mxu0
        %v2274 = vadd.f32 0.0, %v2273
        %v2275 = vpop.f32.mrf.mxu0
        %2276 = vdwg.mxu0
        %2277 = vmatpush.bf16.msra.mxu0 %v2211
        %2278 = vmatpush.bf16.msra.mxu0 %v2205
        %2279 = vmatpush.bf16.msra.mxu0 %v2199
        %2280 = vmatpush.bf16.msra.mxu0 %v2193
        %2281 = vmatpush.bf16.msra.mxu0 %v2187
        %2282 = vmatpush.bf16.msra.mxu0 %v2181
        %2283 = vmatpush.bf16.msra.mxu0 %v2175
        %2284 = vmatpush.bf16.msra.mxu0 %v2169
        %2285 = vmatmul.bf16.gmra.mxu0 %v1974
        %v2286 = vpop.f32.mrf.mxu0
        %v2287 = vadd.f32 0.0, %v2286
        %v2288 = vpop.f32.mrf.mxu0
        %2289 = vdwg.mxu0
        %2290 = vmatpush.bf16.msra.mxu0 %v2212
        %2291 = vmatpush.bf16.msra.mxu0 %v2206
        %2292 = vmatpush.bf16.msra.mxu0 %v2200
        %2293 = vmatpush.bf16.msra.mxu0 %v2194
        %2294 = vmatpush.bf16.msra.mxu0 %v2188
        %2295 = vmatpush.bf16.msra.mxu0 %v2182
        %2296 = vmatpush.bf16.msra.mxu0 %v2176
        %2297 = vmatpush.bf16.msra.mxu0 %v2170
        %2298 = vmatmul.bf16.gmra.mxu0 %v1974
        %v2299 = vpop.f32.mrf.mxu0
        %v2300 = vadd.f32 0.0, %v2299
        %v2301 = vpop.f32.mrf.mxu0
        %2302 = vdwg.mxu0
        %2303 = vmatpush.bf16.msra.mxu0 %v2213
        %2304 = vmatpush.bf16.msra.mxu0 %v2207
        %2305 = vmatpush.bf16.msra.mxu0 %v2201
        %2306 = vmatpush.bf16.msra.mxu0 %v2195
        %2307 = vmatpush.bf16.msra.mxu0 %v2189
        %2308 = vmatpush.bf16.msra.mxu0 %v2183
        %2309 = vmatpush.bf16.msra.mxu0 %v2177
        %2310 = vmatpush.bf16.msra.mxu0 %v2171
        %2311 = vmatmul.bf16.gmra.mxu0 %v1974
        %v2312 = vpop.f32.mrf.mxu0
        %v2313 = vadd.f32 0.0, %v2312
        %v2314 = vpop.f32.mrf.mxu0
        %2315 = vdwg.mxu0
        %2316 = vmatpush.bf16.msra.mxu0 %v2214
        %2317 = vmatpush.bf16.msra.mxu0 %v2208
        %2318 = vmatpush.bf16.msra.mxu0 %v2202
        %2319 = vmatpush.bf16.msra.mxu0 %v2196
        %2320 = vmatpush.bf16.msra.mxu0 %v2190
        %2321 = vmatpush.bf16.msra.mxu0 %v2184
        %2322 = vmatpush.bf16.msra.mxu0 %v2178
        %2323 = vmatpush.bf16.msra.mxu0 %v2172
        %2324 = vmatmul.bf16.gmra.mxu0 %v1974
        %v2325 = vpop.f32.mrf.mxu0
        %v2326 = vadd.f32 0.0, %v2325
        %v2327 = vpop.f32.mrf.mxu0
        %2328 = vdwg.mxu0
        %2329 = vmatpush.bf16.msra.mxu0 %v2215
        %2330 = vmatpush.bf16.msra.mxu0 %v2209
        %2331 = vmatpush.bf16.msra.mxu0 %v2203
        %2332 = vmatpush.bf16.msra.mxu0 %v2197
        %2333 = vmatpush.bf16.msra.mxu0 %v2191
        %2334 = vmatpush.bf16.msra.mxu0 %v2185
        %2335 = vmatpush.bf16.msra.mxu0 %v2179
        %2336 = vmatpush.bf16.msra.mxu0 %v2173
        %2337 = vmatmul.bf16.gmra.mxu0 %v1974
        %v2338 = vpop.f32.mrf.mxu0
        %v2339 = vadd.f32 0.0, %v2338
        %v2340 = vpop.f32.mrf.mxu0
        %2341 = vdwg.mxu0
        %v2342 = vpack.c.bf16 %v2274, %v2274
        %v2343 = vpack.c.bf16 %v2300, %v2300
        %v2344 = vpack.c.bf16 %v2326, %v2326
        %2345 = vmatpush.bf16.xpose.msra.mxu0 0
        %2346 = vmatpush.bf16.xpose.msra.mxu0 0
        %2347 = vmatpush.bf16.xpose.msra.mxu0 0
        %2348 = vmatpush.bf16.xpose.msra.mxu0 0
        %2349 = vmatpush.bf16.xpose.msra.mxu0 0
        %2350 = vmatpush.bf16.xpose.msra.mxu0 0
        %2351 = vmatpush.bf16.xpose.msra.mxu0 0
        %2352 = vmatpush.bf16.xpose.msra.mxu0 %v2343
        %2353 = vmatmul.bf16.gmra.mxu0 %v2342
        %v2354 = vpop.f32.mrf.mxu0
        %v2355 = vadd.f32 0.0, %v2354
        %v2356 = vpop.f32.mrf.mxu0
        %2357 = vdwg.mxu0
        %v2358 = vsel %vm1510, %v2355, -inf
        %2359 = vmax.xlane.f32.xlu0 %v2358
        %v2360 = vpop.xlane.xlu0 %2359
        %v2361 = vsub.f32 %v2355, %v2360
        %v2362 = vmul.f32 %v2361, 1.442695
        %v2363 = vpow.pop %v2362
        %v2364 = vsel %vm1510, %v2363, 0.0
        %2365 = vadd.xlane.f32.xlu0 %v2364
        %v2366 = vpop.xlane.xlu0 %2365
        %v2367 = vrcp.pop %v2366
        %v2368 = vmul.f32 %v2363, %v2367
        %v2369 = vpack.c.bf16 %v2368, %v2368
        %v2371 = vsel %vm1510, %v2369, 0
        %v2374 = vsel %vm1526, %v2344, 0
        %2376 = vmatpush.bf16.msra.mxu0 0
        %2377 = vmatpush.bf16.msra.mxu0 0
        %2378 = vmatpush.bf16.msra.mxu0 0
        %2379 = vmatpush.bf16.msra.mxu0 0
        %2380 = vmatpush.bf16.msra.mxu0 0
        %2381 = vmatpush.bf16.msra.mxu0 0
        %2382 = vmatpush.bf16.msra.mxu0 0
        %2383 = vmatpush.bf16.msra.mxu0 %v2374
        %2384 = vmatmul.bf16.gmra.mxu0 %v2371
        %v2385 = vpop.f32.mrf.mxu0
        %v2386 = vadd.f32 0.0, %v2385
        %v2387 = vpop.f32.mrf.mxu0
        %2388 = vdwg.mxu0
        %s2389 = scalar_lea.vmem [#allocation6], 128
        %v2390 = vld [vmem:[%s2389] sm:$0xf]
        %v2391 = vld [vmem:[%s2389 + $0x4] sm:$0xf]
        %v2392 = vld [vmem:[%s2389 + $0x8] sm:$0xf]
        %v2393 = vld [vmem:[%s2389 + $0xc] sm:$0xf]
        %v2394 = vld [vmem:[%s2389 + $0x10] sm:$0xf]
        %v2395 = vld [vmem:[%s2389 + $0x14] sm:$0xf]
        %v2396 = vld [vmem:[%s2389 + $0x18] sm:$0xf]
        %v2397 = vld [vmem:[%s2389 + $0x1c] sm:$0xf]
        %v2398 = vld [vmem:[%s2389 + $0x20] sm:$0xf]
        %v2399 = vld [vmem:[%s2389 + $0x24] sm:$0xf]
        %v2400 = vld [vmem:[%s2389 + $0x28] sm:$0xf]
        %v2401 = vld [vmem:[%s2389 + $0x2c] sm:$0xf]
        %v2402 = vld [vmem:[%s2389 + $0x30] sm:$0xf]
        %v2403 = vld [vmem:[%s2389 + $0x34] sm:$0xf]
        %v2404 = vld [vmem:[%s2389 + $0x38] sm:$0xf]
        %v2405 = vld [vmem:[%s2389 + $0x3c] sm:$0xf]
        %v2406 = vpack.c.bf16 %v2386, %v2386
        %v2423 = vunpack.c.l.b16 %v2390
        %v2424 = vunpack.c.l.b16 %v2391
        %v2425 = vunpack.c.l.b16 %v2392
        %v2426 = vunpack.c.l.b16 %v2393
        %v2427 = vunpack.c.l.b16 %v2394
        %v2428 = vunpack.c.l.b16 %v2395
        %v2429 = vunpack.c.l.b16 %v2396
        %v2430 = vunpack.c.l.b16 %v2397
        %v2431 = vunpack.c.l.b16 %v2398
        %v2432 = vunpack.c.l.b16 %v2399
        %v2433 = vunpack.c.l.b16 %v2400
        %v2434 = vunpack.c.l.b16 %v2401
        %v2435 = vunpack.c.l.b16 %v2402
        %v2436 = vunpack.c.l.b16 %v2403
        %v2437 = vunpack.c.l.b16 %v2404
        %v2438 = vunpack.c.l.b16 %v2405
        %v2439 = vpack.c.b16 %v2424, %v2423
        %v2440 = vpack.c.b16 %v2426, %v2425
        %v2441 = vpack.c.b16 %v2428, %v2427
        %v2442 = vpack.c.b16 %v2430, %v2429
        %v2443 = vpack.c.b16 %v2432, %v2431
        %v2444 = vpack.c.b16 %v2434, %v2433
        %v2445 = vpack.c.b16 %v2436, %v2435
        %v2446 = vpack.c.b16 %v2438, %v2437
        %2455 = vmatpush.bf16.msra.mxu0 %v2446
        %2456 = vmatpush.bf16.msra.mxu0 %v2445
        %2457 = vmatpush.bf16.msra.mxu0 %v2444
        %2458 = vmatpush.bf16.msra.mxu0 %v2443
        %2459 = vmatpush.bf16.msra.mxu0 %v2442
        %2460 = vmatpush.bf16.msra.mxu0 %v2441
        %2461 = vmatpush.bf16.msra.mxu0 %v2440
        %2462 = vmatpush.bf16.msra.mxu0 %v2439
        %2463 = vmatmul.bf16.gmra.mxu0 %v2406
        %v2464 = vpop.f32.mrf.mxu0
        %v2465 = vadd.f32 0.0, %v2464
        %v2466 = vpop.f32.mrf.mxu0
        %2467 = vdwg.mxu0
        %v2468 = vadd.f32 %v1947, %v2465
        %v2469 = vpack.c.bf16 %v2287, %v2287
        %v2470 = vpack.c.bf16 %v2313, %v2313
        %v2471 = vpack.c.bf16 %v2339, %v2339
        %2472 = vmatpush.bf16.xpose.msra.mxu0 0
        %2473 = vmatpush.bf16.xpose.msra.mxu0 0
        %2474 = vmatpush.bf16.xpose.msra.mxu0 0
        %2475 = vmatpush.bf16.xpose.msra.mxu0 0
        %2476 = vmatpush.bf16.xpose.msra.mxu0 0
        %2477 = vmatpush.bf16.xpose.msra.mxu0 0
        %2478 = vmatpush.bf16.xpose.msra.mxu0 0
        %2479 = vmatpush.bf16.xpose.msra.mxu0 %v2470
        %2480 = vmatmul.bf16.gmra.mxu0 %v2469
        %v2481 = vpop.f32.mrf.mxu0
        %v2482 = vadd.f32 0.0, %v2481
        %v2483 = vpop.f32.mrf.mxu0
        %2484 = vdwg.mxu0
        %v2485 = vsel %vm1510, %v2482, -inf
        %2486 = vmax.xlane.f32.xlu0 %v2485
        %v2487 = vpop.xlane.xlu0 %2486
        %v2488 = vsub.f32 %v2482, %v2487
        %v2489 = vmul.f32 %v2488, 1.442695
        %v2490 = vpow.pop %v2489
        %v2491 = vsel %vm1510, %v2490, 0.0
        %2492 = vadd.xlane.f32.xlu0 %v2491
        %v2493 = vpop.xlane.xlu0 %2492
        %v2494 = vrcp.pop %v2493
        %v2495 = vmul.f32 %v2490, %v2494
        %v2496 = vpack.c.bf16 %v2495, %v2495
        %v2498 = vsel %vm1510, %v2496, 0
        %v2501 = vsel %vm1526, %v2471, 0
        %2503 = vmatpush.bf16.msra.mxu0 0
        %2504 = vmatpush.bf16.msra.mxu0 0
        %2505 = vmatpush.bf16.msra.mxu0 0
        %2506 = vmatpush.bf16.msra.mxu0 0
        %2507 = vmatpush.bf16.msra.mxu0 0
        %2508 = vmatpush.bf16.msra.mxu0 0
        %2509 = vmatpush.bf16.msra.mxu0 0
        %2510 = vmatpush.bf16.msra.mxu0 %v2501
        %2511 = vmatmul.bf16.gmra.mxu0 %v2498
        %v2512 = vpop.f32.mrf.mxu0
        %v2513 = vadd.f32 0.0, %v2512
        %v2514 = vpop.f32.mrf.mxu0
        %2515 = vdwg.mxu0
        %v2516 = vld [vmem:[%s2389 + $0x40] sm:$0xf]
        %v2517 = vld [vmem:[%s2389 + $0x44] sm:$0xf]
        %v2518 = vld [vmem:[%s2389 + $0x48] sm:$0xf]
        %v2519 = vld [vmem:[%s2389 + $0x4c] sm:$0xf]
        %v2520 = vld [vmem:[%s2389 + $0x50] sm:$0xf]
        %v2521 = vld [vmem:[%s2389 + $0x54] sm:$0xf]
        %v2522 = vld [vmem:[%s2389 + $0x58] sm:$0xf]
        %v2523 = vld [vmem:[%s2389 + $0x5c] sm:$0xf]
        %v2524 = vld [vmem:[%s2389 + $0x60] sm:$0xf]
        %v2525 = vld [vmem:[%s2389 + $0x64] sm:$0xf]
        %v2526 = vld [vmem:[%s2389 + $0x68] sm:$0xf]
        %v2527 = vld [vmem:[%s2389 + $0x6c] sm:$0xf]
        %v2528 = vld [vmem:[%s2389 + $0x70] sm:$0xf]
        %v2529 = vld [vmem:[%s2389 + $0x74] sm:$0xf]
        %v2530 = vld [vmem:[%s2389 + $0x78] sm:$0xf]
        %v2531 = vld [vmem:[%s2389 + $0x7c] sm:$0xf]
        %v2532 = vpack.c.bf16 %v2513, %v2513
        %v2549 = vunpack.c.l.b16 %v2516
        %v2550 = vunpack.c.l.b16 %v2517
        %v2551 = vunpack.c.l.b16 %v2518
        %v2552 = vunpack.c.l.b16 %v2519
        %v2553 = vunpack.c.l.b16 %v2520
        %v2554 = vunpack.c.l.b16 %v2521
        %v2555 = vunpack.c.l.b16 %v2522
        %v2556 = vunpack.c.l.b16 %v2523
        %v2557 = vunpack.c.l.b16 %v2524
        %v2558 = vunpack.c.l.b16 %v2525
        %v2559 = vunpack.c.l.b16 %v2526
        %v2560 = vunpack.c.l.b16 %v2527
        %v2561 = vunpack.c.l.b16 %v2528
        %v2562 = vunpack.c.l.b16 %v2529
        %v2563 = vunpack.c.l.b16 %v2530
        %v2564 = vunpack.c.l.b16 %v2531
        %v2565 = vpack.c.b16 %v2550, %v2549
        %v2566 = vpack.c.b16 %v2552, %v2551
        %v2567 = vpack.c.b16 %v2554, %v2553
        %v2568 = vpack.c.b16 %v2556, %v2555
        %v2569 = vpack.c.b16 %v2558, %v2557
        %v2570 = vpack.c.b16 %v2560, %v2559
        %v2571 = vpack.c.b16 %v2562, %v2561
        %v2572 = vpack.c.b16 %v2564, %v2563
        %2581 = vmatpush.bf16.msra.mxu0 %v2572
        %2582 = vmatpush.bf16.msra.mxu0 %v2571
        %2583 = vmatpush.bf16.msra.mxu0 %v2570
        %2584 = vmatpush.bf16.msra.mxu0 %v2569
        %2585 = vmatpush.bf16.msra.mxu0 %v2568
        %2586 = vmatpush.bf16.msra.mxu0 %v2567
        %2587 = vmatpush.bf16.msra.mxu0 %v2566
        %2588 = vmatpush.bf16.msra.mxu0 %v2565
        %2589 = vmatmul.bf16.gmra.mxu0 %v2532
        %v2590 = vpop.f32.mrf.mxu0
        %v2591 = vadd.f32 0.0, %v2590
        %v2592 = vpop.f32.mrf.mxu0
        %2593 = vdwg.mxu0
        %v2594 = vadd.f32 %v2468, %v2591
        %v2595 = vld [vmem:[%s7 + $0x1] sm:$0x1]
        %v2596 = vperm.slane %v2595, 0
        %v2597 = vadd.f32 %v2594, %v2596
        %v2598 = vld [vmem:[%s8 + $0x1] sm:$0x1]
        %v2599 = vld [vmem:[%s9 + $0x1] sm:$0x1]
        %2600 = vadd.xlane.f32.xlu0 %v2597
        %v2601 = vpop.xlane.xlu0 %2600
        %v2602 = vmul.f32 %v2601, %v1104
        %v2603 = vsub.f32 %v2597, %v2602
        %v2604 = vmul.f32 %v2603, %v2603
        %2605 = vadd.xlane.f32.xlu0 %v2604
        %v2606 = vpop.xlane.xlu0 %2605
        %v2607 = vmul.f32 %v2606, %v1104
        %v2608 = vadd.f32 %v2607, 1e-05
        %v2609 = vrsqrt.pop %v2608
        %v2610 = vmul.f32 %v2609, %v2608
        %v2611 = vmul.f32 %v2610, %v2609
        %v2612 = vmul.f32 0.5, %v2611
        %v2613 = vsub.f32 1.5, %v2612
        %v2614 = vmul.f32 %v2609, %v2613
        %vm2615 = vweird.f32 %v2608
        %vm2616 = vweird.f32 %v2609
        %vm2617 = vmor %vm2615, %vm2616
        %v2618 = vsel %vm2617, %v2609, %v2614
        %v2619 = vmul.f32 %v2603, %v2618
        %v2620 = vperm.slane %v2598, 0
        %v2621 = vmul.f32 %v2619, %v2620
        %v2622 = vperm.slane %v2599, 0
        %v2623 = vadd.f32 %v2621, %v2622
        %v2624 = vpack.c.bf16 %v2623, %v2623
        %s2625 = scalar_lea.vmem [#allocation7], 64
        %v2626 = vld [vmem:[%s2625] sm:$0xf]
        %v2627 = vld [vmem:[%s2625 + $0x4] sm:$0xf]
        %v2628 = vld [vmem:[%s2625 + $0x8] sm:$0xf]
        %v2629 = vld [vmem:[%s2625 + $0xc] sm:$0xf]
        %v2630 = vld [vmem:[%s2625 + $0x10] sm:$0xf]
        %v2631 = vld [vmem:[%s2625 + $0x14] sm:$0xf]
        %v2632 = vld [vmem:[%s2625 + $0x18] sm:$0xf]
        %v2633 = vld [vmem:[%s2625 + $0x1c] sm:$0xf]
        %v2634 = vld [vmem:[%s2625 + $0x20] sm:$0xf]
        %v2635 = vld [vmem:[%s2625 + $0x24] sm:$0xf]
        %v2636 = vld [vmem:[%s2625 + $0x28] sm:$0xf]
        %v2637 = vld [vmem:[%s2625 + $0x2c] sm:$0xf]
        %v2638 = vld [vmem:[%s2625 + $0x30] sm:$0xf]
        %v2639 = vld [vmem:[%s2625 + $0x34] sm:$0xf]
        %v2640 = vld [vmem:[%s2625 + $0x38] sm:$0xf]
        %v2641 = vld [vmem:[%s2625 + $0x3c] sm:$0xf]
        %v2642 = vld [vmem:[%s11 + $0x1] sm:$0x1]
        %v2643 = vperm.slane %v2642, 0
        %v2660 = vunpack.c.l.b16 %v2626
        %v2661 = vunpack.c.l.b16 %v2627
        %v2662 = vunpack.c.l.b16 %v2628
        %v2663 = vunpack.c.l.b16 %v2629
        %v2664 = vunpack.c.l.b16 %v2630
        %v2665 = vunpack.c.l.b16 %v2631
        %v2666 = vunpack.c.l.b16 %v2632
        %v2667 = vunpack.c.l.b16 %v2633
        %v2668 = vunpack.c.l.b16 %v2634
        %v2669 = vunpack.c.l.b16 %v2635
        %v2670 = vunpack.c.l.b16 %v2636
        %v2671 = vunpack.c.l.b16 %v2637
        %v2672 = vunpack.c.l.b16 %v2638
        %v2673 = vunpack.c.l.b16 %v2639
        %v2674 = vunpack.c.l.b16 %v2640
        %v2675 = vunpack.c.l.b16 %v2641
        %v2676 = vpack.c.b16 %v2661, %v2660
        %v2677 = vpack.c.b16 %v2663, %v2662
        %v2678 = vpack.c.b16 %v2665, %v2664
        %v2679 = vpack.c.b16 %v2667, %v2666
        %v2680 = vpack.c.b16 %v2669, %v2668
        %v2681 = vpack.c.b16 %v2671, %v2670
        %v2682 = vpack.c.b16 %v2673, %v2672
        %v2683 = vpack.c.b16 %v2675, %v2674
        %2692 = vmatpush.bf16.msra.mxu0 %v2683
        %2693 = vmatpush.bf16.msra.mxu0 %v2682
        %2694 = vmatpush.bf16.msra.mxu0 %v2681
        %2695 = vmatpush.bf16.msra.mxu0 %v2680
        %2696 = vmatpush.bf16.msra.mxu0 %v2679
        %2697 = vmatpush.bf16.msra.mxu0 %v2678
        %2698 = vmatpush.bf16.msra.mxu0 %v2677
        %2699 = vmatpush.bf16.msra.mxu0 %v2676
        %2700 = vmatmul.bf16.gmra.mxu0 %v2624
        %v2701 = vpop.f32.mrf.mxu0
        %v2702 = vadd.f32 %v2643, %v2701
        %v2703 = vpop.f32.mrf.mxu0
        %2704 = vdwg.mxu0
        %v2705 = vmul.f32 %v2702, %v2702
        %v2706 = vmul.f32 %v2702, %v2705
        %v2707 = vmul.f32 %v2706, 0.044715
        %v2708 = vadd.f32 %v2702, %v2707
        %v2709 = vmul.f32 %v2708, 0.7978846
        %v2710 = vtanh.pop %v2709
        %v2711 = vadd.f32 %v2710, 1.0
        %v2712 = vmul.f32 %v2711, 0.5
        %v2713 = vmul.f32 %v2702, %v2712
        %s2714 = scalar_lea.vmem [#allocation9], 64
        %v2715 = vld [vmem:[%s2714] sm:$0xf]
        %v2716 = vld [vmem:[%s2714 + $0x4] sm:$0xf]
        %v2717 = vld [vmem:[%s2714 + $0x8] sm:$0xf]
        %v2718 = vld [vmem:[%s2714 + $0xc] sm:$0xf]
        %v2719 = vld [vmem:[%s2714 + $0x10] sm:$0xf]
        %v2720 = vld [vmem:[%s2714 + $0x14] sm:$0xf]
        %v2721 = vld [vmem:[%s2714 + $0x18] sm:$0xf]
        %v2722 = vld [vmem:[%s2714 + $0x1c] sm:$0xf]
        %v2723 = vld [vmem:[%s2714 + $0x20] sm:$0xf]
        %v2724 = vld [vmem:[%s2714 + $0x24] sm:$0xf]
        %v2725 = vld [vmem:[%s2714 + $0x28] sm:$0xf]
        %v2726 = vld [vmem:[%s2714 + $0x2c] sm:$0xf]
        %v2727 = vld [vmem:[%s2714 + $0x30] sm:$0xf]
        %v2728 = vld [vmem:[%s2714 + $0x34] sm:$0xf]
        %v2729 = vld [vmem:[%s2714 + $0x38] sm:$0xf]
        %v2730 = vld [vmem:[%s2714 + $0x3c] sm:$0xf]
        %v2731 = vpack.c.bf16 %v2713, %v2713
        %v2748 = vunpack.c.l.b16 %v2715
        %v2749 = vunpack.c.l.b16 %v2716
        %v2750 = vunpack.c.l.b16 %v2717
        %v2751 = vunpack.c.l.b16 %v2718
        %v2752 = vunpack.c.l.b16 %v2719
        %v2753 = vunpack.c.l.b16 %v2720
        %v2754 = vunpack.c.l.b16 %v2721
        %v2755 = vunpack.c.l.b16 %v2722
        %v2756 = vunpack.c.l.b16 %v2723
        %v2757 = vunpack.c.l.b16 %v2724
        %v2758 = vunpack.c.l.b16 %v2725
        %v2759 = vunpack.c.l.b16 %v2726
        %v2760 = vunpack.c.l.b16 %v2727
        %v2761 = vunpack.c.l.b16 %v2728
        %v2762 = vunpack.c.l.b16 %v2729
        %v2763 = vunpack.c.l.b16 %v2730
        %v2764 = vpack.c.b16 %v2749, %v2748
        %v2765 = vpack.c.b16 %v2751, %v2750
        %v2766 = vpack.c.b16 %v2753, %v2752
        %v2767 = vpack.c.b16 %v2755, %v2754
        %v2768 = vpack.c.b16 %v2757, %v2756
        %v2769 = vpack.c.b16 %v2759, %v2758
        %v2770 = vpack.c.b16 %v2761, %v2760
        %v2771 = vpack.c.b16 %v2763, %v2762
        %2780 = vmatpush.bf16.msra.mxu0 %v2771
        %2781 = vmatpush.bf16.msra.mxu0 %v2770
        %2782 = vmatpush.bf16.msra.mxu0 %v2769
        %2783 = vmatpush.bf16.msra.mxu0 %v2768
        %2784 = vmatpush.bf16.msra.mxu0 %v2767
        %2785 = vmatpush.bf16.msra.mxu0 %v2766
        %2786 = vmatpush.bf16.msra.mxu0 %v2765
        %2787 = vmatpush.bf16.msra.mxu0 %v2764
        %2788 = vmatmul.bf16.gmra.mxu0 %v2731
        %v2789 = vpop.f32.mrf.mxu0
        %v2790 = vadd.f32 0.0, %v2789
        %v2791 = vpop.f32.mrf.mxu0
        %2792 = vdwg.mxu0
        %v2793 = vadd.f32 %v2597, %v2790
        %v2794 = vld [vmem:[%s13 + $0x1] sm:$0x1]
        %v2795 = vperm.slane %v2794, 0
        %v2796 = vadd.f32 %v2793, %v2795
        %v2797 = vld [vmem:[%s3 + $0x2] sm:$0x1]
        %v2798 = vld [vmem:[%s4 + $0x2] sm:$0x1]
        %2799 = vadd.xlane.f32.xlu0 %v2796
        %v2800 = vpop.xlane.xlu0 %2799
        %v2801 = vmul.f32 %v2800, %v1104
        %v2802 = vsub.f32 %v2796, %v2801
        %v2803 = vmul.f32 %v2802, %v2802
        %2804 = vadd.xlane.f32.xlu0 %v2803
        %v2805 = vpop.xlane.xlu0 %2804
        %v2806 = vmul.f32 %v2805, %v1104
        %v2807 = vadd.f32 %v2806, 1e-05
        %v2808 = vrsqrt.pop %v2807
        %v2809 = vmul.f32 %v2808, %v2807
        %v2810 = vmul.f32 %v2809, %v2808
        %v2811 = vmul.f32 0.5, %v2810
        %v2812 = vsub.f32 1.5, %v2811
        %v2813 = vmul.f32 %v2808, %v2812
        %vm2814 = vweird.f32 %v2807
        %vm2815 = vweird.f32 %v2808
        %vm2816 = vmor %vm2814, %vm2815
        %v2817 = vsel %vm2816, %v2808, %v2813
        %v2818 = vmul.f32 %v2802, %v2817
        %v2819 = vperm.slane %v2797, 0
        %v2820 = vmul.f32 %v2818, %v2819
        %v2821 = vperm.slane %v2798, 0
        %v2822 = vadd.f32 %v2820, %v2821
        %v2823 = vpack.c.bf16 %v2822, %v2822
        %s2824 = scalar_lea.vmem [#allocation4], 768
        %v2825 = vld [vmem:[%s2824] sm:$0xff]
        %v2826 = vld [vmem:[%s2824 + $0x8] sm:$0xff]
        %v2827 = vld [vmem:[%s2824 + $0x10] sm:$0xff]
        %v2828 = vld [vmem:[%s2824 + $0x18] sm:$0xff]
        %v2829 = vld [vmem:[%s2824 + $0x20] sm:$0xff]
        %v2830 = vld [vmem:[%s2824 + $0x28] sm:$0xff]
        %v2831 = vld [vmem:[%s2824 + $0x30] sm:$0xff]
        %v2832 = vld [vmem:[%s2824 + $0x38] sm:$0xff]
        %v2833 = vld [vmem:[%s2824 + $0x40] sm:$0xff]
        %v2834 = vld [vmem:[%s2824 + $0x48] sm:$0xff]
        %v2835 = vld [vmem:[%s2824 + $0x50] sm:$0xff]
        %v2836 = vld [vmem:[%s2824 + $0x58] sm:$0xff]
        %v2837 = vld [vmem:[%s2824 + $0x60] sm:$0xff]
        %v2838 = vld [vmem:[%s2824 + $0x68] sm:$0xff]
        %v2839 = vld [vmem:[%s2824 + $0x70] sm:$0xff]
        %v2840 = vld [vmem:[%s2824 + $0x78] sm:$0xff]
        %v2841 = vld [vmem:[%s2824 + $0x80] sm:$0xff]
        %v2842 = vld [vmem:[%s2824 + $0x88] sm:$0xff]
        %v2843 = vld [vmem:[%s2824 + $0x90] sm:$0xff]
        %v2844 = vld [vmem:[%s2824 + $0x98] sm:$0xff]
        %v2845 = vld [vmem:[%s2824 + $0xa0] sm:$0xff]
        %v2846 = vld [vmem:[%s2824 + $0xa8] sm:$0xff]
        %v2847 = vld [vmem:[%s2824 + $0xb0] sm:$0xff]
        %v2848 = vld [vmem:[%s2824 + $0xb8] sm:$0xff]
        %v2849 = vld [vmem:[%s2824 + $0xc0] sm:$0xff]
        %v2850 = vld [vmem:[%s2824 + $0xc8] sm:$0xff]
        %v2851 = vld [vmem:[%s2824 + $0xd0] sm:$0xff]
        %v2852 = vld [vmem:[%s2824 + $0xd8] sm:$0xff]
        %v2853 = vld [vmem:[%s2824 + $0xe0] sm:$0xff]
        %v2854 = vld [vmem:[%s2824 + $0xe8] sm:$0xff]
        %v2855 = vld [vmem:[%s2824 + $0xf0] sm:$0xff]
        %v2856 = vld [vmem:[%s2824 + $0xf8] sm:$0xff]
        %v2857 = vld [vmem:[%s2824 + $0x100] sm:$0xff]
        %v2858 = vld [vmem:[%s2824 + $0x108] sm:$0xff]
        %v2859 = vld [vmem:[%s2824 + $0x110] sm:$0xff]
        %v2860 = vld [vmem:[%s2824 + $0x118] sm:$0xff]
        %v2861 = vld [vmem:[%s2824 + $0x120] sm:$0xff]
        %v2862 = vld [vmem:[%s2824 + $0x128] sm:$0xff]
        %v2863 = vld [vmem:[%s2824 + $0x130] sm:$0xff]
        %v2864 = vld [vmem:[%s2824 + $0x138] sm:$0xff]
        %v2865 = vld [vmem:[%s2824 + $0x140] sm:$0xff]
        %v2866 = vld [vmem:[%s2824 + $0x148] sm:$0xff]
        %v2867 = vld [vmem:[%s2824 + $0x150] sm:$0xff]
        %v2868 = vld [vmem:[%s2824 + $0x158] sm:$0xff]
        %v2869 = vld [vmem:[%s2824 + $0x160] sm:$0xff]
        %v2870 = vld [vmem:[%s2824 + $0x168] sm:$0xff]
        %v2871 = vld [vmem:[%s2824 + $0x170] sm:$0xff]
        %v2872 = vld [vmem:[%s2824 + $0x178] sm:$0xff]
        %v2921 = vunpack.c.l.b16 %v2825
        %v2922 = vunpack.c.h.b16 %v2825
        %v2923 = vunpack.c.l.b16 %v2826
        %v2924 = vunpack.c.h.b16 %v2826
        %v2925 = vunpack.c.l.b16 %v2827
        %v2926 = vunpack.c.h.b16 %v2827
        %v2927 = vunpack.c.l.b16 %v2828
        %v2928 = vunpack.c.h.b16 %v2828
        %v2929 = vunpack.c.l.b16 %v2829
        %v2930 = vunpack.c.h.b16 %v2829
        %v2931 = vunpack.c.l.b16 %v2830
        %v2932 = vunpack.c.h.b16 %v2830
        %v2933 = vunpack.c.l.b16 %v2831
        %v2934 = vunpack.c.h.b16 %v2831
        %v2935 = vunpack.c.l.b16 %v2832
        %v2936 = vunpack.c.h.b16 %v2832
        %v2937 = vunpack.c.l.b16 %v2833
        %v2938 = vunpack.c.h.b16 %v2833
        %v2939 = vunpack.c.l.b16 %v2834
        %v2940 = vunpack.c.h.b16 %v2834
        %v2941 = vunpack.c.l.b16 %v2835
        %v2942 = vunpack.c.h.b16 %v2835
        %v2943 = vunpack.c.l.b16 %v2836
        %v2944 = vunpack.c.h.b16 %v2836
        %v2945 = vunpack.c.l.b16 %v2837
        %v2946 = vunpack.c.h.b16 %v2837
        %v2947 = vunpack.c.l.b16 %v2838
        %v2948 = vunpack.c.h.b16 %v2838
        %v2949 = vunpack.c.l.b16 %v2839
        %v2950 = vunpack.c.h.b16 %v2839
        %v2951 = vunpack.c.l.b16 %v2840
        %v2952 = vunpack.c.h.b16 %v2840
        %v2953 = vunpack.c.l.b16 %v2841
        %v2954 = vunpack.c.h.b16 %v2841
        %v2955 = vunpack.c.l.b16 %v2842
        %v2956 = vunpack.c.h.b16 %v2842
        %v2957 = vunpack.c.l.b16 %v2843
        %v2958 = vunpack.c.h.b16 %v2843
        %v2959 = vunpack.c.l.b16 %v2844
        %v2960 = vunpack.c.h.b16 %v2844
        %v2961 = vunpack.c.l.b16 %v2845
        %v2962 = vunpack.c.h.b16 %v2845
        %v2963 = vunpack.c.l.b16 %v2846
        %v2964 = vunpack.c.h.b16 %v2846
        %v2965 = vunpack.c.l.b16 %v2847
        %v2966 = vunpack.c.h.b16 %v2847
        %v2967 = vunpack.c.l.b16 %v2848
        %v2968 = vunpack.c.h.b16 %v2848
        %v2969 = vunpack.c.l.b16 %v2849
        %v2970 = vunpack.c.h.b16 %v2849
        %v2971 = vunpack.c.l.b16 %v2850
        %v2972 = vunpack.c.h.b16 %v2850
        %v2973 = vunpack.c.l.b16 %v2851
        %v2974 = vunpack.c.h.b16 %v2851
        %v2975 = vunpack.c.l.b16 %v2852
        %v2976 = vunpack.c.h.b16 %v2852
        %v2977 = vunpack.c.l.b16 %v2853
        %v2978 = vunpack.c.h.b16 %v2853
        %v2979 = vunpack.c.l.b16 %v2854
        %v2980 = vunpack.c.h.b16 %v2854
        %v2981 = vunpack.c.l.b16 %v2855
        %v2982 = vunpack.c.h.b16 %v2855
        %v2983 = vunpack.c.l.b16 %v2856
        %v2984 = vunpack.c.h.b16 %v2856
        %v2985 = vunpack.c.l.b16 %v2857
        %v2986 = vunpack.c.h.b16 %v2857
        %v2987 = vunpack.c.l.b16 %v2858
        %v2988 = vunpack.c.h.b16 %v2858
        %v2989 = vunpack.c.l.b16 %v2859
        %v2990 = vunpack.c.h.b16 %v2859
        %v2991 = vunpack.c.l.b16 %v2860
        %v2992 = vunpack.c.h.b16 %v2860
        %v2993 = vunpack.c.l.b16 %v2861
        %v2994 = vunpack.c.h.b16 %v2861
        %v2995 = vunpack.c.l.b16 %v2862
        %v2996 = vunpack.c.h.b16 %v2862
        %v2997 = vunpack.c.l.b16 %v2863
        %v2998 = vunpack.c.h.b16 %v2863
        %v2999 = vunpack.c.l.b16 %v2864
        %v3000 = vunpack.c.h.b16 %v2864
        %v3001 = vunpack.c.l.b16 %v2865
        %v3002 = vunpack.c.h.b16 %v2865
        %v3003 = vunpack.c.l.b16 %v2866
        %v3004 = vunpack.c.h.b16 %v2866
        %v3005 = vunpack.c.l.b16 %v2867
        %v3006 = vunpack.c.h.b16 %v2867
        %v3007 = vunpack.c.l.b16 %v2868
        %v3008 = vunpack.c.h.b16 %v2868
        %v3009 = vunpack.c.l.b16 %v2869
        %v3010 = vunpack.c.h.b16 %v2869
        %v3011 = vunpack.c.l.b16 %v2870
        %v3012 = vunpack.c.h.b16 %v2870
        %v3013 = vunpack.c.l.b16 %v2871
        %v3014 = vunpack.c.h.b16 %v2871
        %v3015 = vunpack.c.l.b16 %v2872
        %v3016 = vunpack.c.h.b16 %v2872
        %v3017 = vpack.c.b16 %v2927, %v2921
        %v3018 = vpack.c.b16 %v2928, %v2922
        %v3019 = vpack.c.b16 %v2929, %v2923
        %v3020 = vpack.c.b16 %v2930, %v2924
        %v3021 = vpack.c.b16 %v2931, %v2925
        %v3022 = vpack.c.b16 %v2932, %v2926
        %v3023 = vpack.c.b16 %v2939, %v2933
        %v3024 = vpack.c.b16 %v2940, %v2934
        %v3025 = vpack.c.b16 %v2941, %v2935
        %v3026 = vpack.c.b16 %v2942, %v2936
        %v3027 = vpack.c.b16 %v2943, %v2937
        %v3028 = vpack.c.b16 %v2944, %v2938
        %v3029 = vpack.c.b16 %v2951, %v2945
        %v3030 = vpack.c.b16 %v2952, %v2946
        %v3031 = vpack.c.b16 %v2953, %v2947
        %v3032 = vpack.c.b16 %v2954, %v2948
        %v3033 = vpack.c.b16 %v2955, %v2949
        %v3034 = vpack.c.b16 %v2956, %v2950
        %v3035 = vpack.c.b16 %v2963, %v2957
        %v3036 = vpack.c.b16 %v2964, %v2958
        %v3037 = vpack.c.b16 %v2965, %v2959
        %v3038 = vpack.c.b16 %v2966, %v2960
        %v3039 = vpack.c.b16 %v2967, %v2961
        %v3040 = vpack.c.b16 %v2968, %v2962
        %v3041 = vpack.c.b16 %v2975, %v2969
        %v3042 = vpack.c.b16 %v2976, %v2970
        %v3043 = vpack.c.b16 %v2977, %v2971
        %v3044 = vpack.c.b16 %v2978, %v2972
        %v3045 = vpack.c.b16 %v2979, %v2973
        %v3046 = vpack.c.b16 %v2980, %v2974
        %v3047 = vpack.c.b16 %v2987, %v2981
        %v3048 = vpack.c.b16 %v2988, %v2982
        %v3049 = vpack.c.b16 %v2989, %v2983
        %v3050 = vpack.c.b16 %v2990, %v2984
        %v3051 = vpack.c.b16 %v2991, %v2985
        %v3052 = vpack.c.b16 %v2992, %v2986
        %v3053 = vpack.c.b16 %v2999, %v2993
        %v3054 = vpack.c.b16 %v3000, %v2994
        %v3055 = vpack.c.b16 %v3001, %v2995
        %v3056 = vpack.c.b16 %v3002, %v2996
        %v3057 = vpack.c.b16 %v3003, %v2997
        %v3058 = vpack.c.b16 %v3004, %v2998
        %v3059 = vpack.c.b16 %v3011, %v3005
        %v3060 = vpack.c.b16 %v3012, %v3006
        %v3061 = vpack.c.b16 %v3013, %v3007
        %v3062 = vpack.c.b16 %v3014, %v3008
        %v3063 = vpack.c.b16 %v3015, %v3009
        %v3064 = vpack.c.b16 %v3016, %v3010
        %3113 = vmatpush.bf16.msra.mxu0 %v3059
        %3114 = vmatpush.bf16.msra.mxu0 %v3053
        %3115 = vmatpush.bf16.msra.mxu0 %v3047
        %3116 = vmatpush.bf16.msra.mxu0 %v3041
        %3117 = vmatpush.bf16.msra.mxu0 %v3035
        %3118 = vmatpush.bf16.msra.mxu0 %v3029
        %3119 = vmatpush.bf16.msra.mxu0 %v3023
        %3120 = vmatpush.bf16.msra.mxu0 %v3017
        %3121 = vmatmul.bf16.gmra.mxu0 %v2823
        %v3122 = vpop.f32.mrf.mxu0
        %v3123 = vadd.f32 0.0, %v3122
        %v3124 = vpop.f32.mrf.mxu0
        %3125 = vdwg.mxu0
        %3126 = vmatpush.bf16.msra.mxu0 %v3060
        %3127 = vmatpush.bf16.msra.mxu0 %v3054
        %3128 = vmatpush.bf16.msra.mxu0 %v3048
        %3129 = vmatpush.bf16.msra.mxu0 %v3042
        %3130 = vmatpush.bf16.msra.mxu0 %v3036
        %3131 = vmatpush.bf16.msra.mxu0 %v3030
        %3132 = vmatpush.bf16.msra.mxu0 %v3024
        %3133 = vmatpush.bf16.msra.mxu0 %v3018
        %3134 = vmatmul.bf16.gmra.mxu0 %v2823
        %v3135 = vpop.f32.mrf.mxu0
        %v3136 = vadd.f32 0.0, %v3135
        %v3137 = vpop.f32.mrf.mxu0
        %3138 = vdwg.mxu0
        %3139 = vmatpush.bf16.msra.mxu0 %v3061
        %3140 = vmatpush.bf16.msra.mxu0 %v3055
        %3141 = vmatpush.bf16.msra.mxu0 %v3049
        %3142 = vmatpush.bf16.msra.mxu0 %v3043
        %3143 = vmatpush.bf16.msra.mxu0 %v3037
        %3144 = vmatpush.bf16.msra.mxu0 %v3031
        %3145 = vmatpush.bf16.msra.mxu0 %v3025
        %3146 = vmatpush.bf16.msra.mxu0 %v3019
        %3147 = vmatmul.bf16.gmra.mxu0 %v2823
        %v3148 = vpop.f32.mrf.mxu0
        %v3149 = vadd.f32 0.0, %v3148
        %v3150 = vpop.f32.mrf.mxu0
        %3151 = vdwg.mxu0
        %3152 = vmatpush.bf16.msra.mxu0 %v3062
        %3153 = vmatpush.bf16.msra.mxu0 %v3056
        %3154 = vmatpush.bf16.msra.mxu0 %v3050
        %3155 = vmatpush.bf16.msra.mxu0 %v3044
        %3156 = vmatpush.bf16.msra.mxu0 %v3038
        %3157 = vmatpush.bf16.msra.mxu0 %v3032
        %3158 = vmatpush.bf16.msra.mxu0 %v3026
        %3159 = vmatpush.bf16.msra.mxu0 %v3020
        %3160 = vmatmul.bf16.gmra.mxu0 %v2823
        %v3161 = vpop.f32.mrf.mxu0
        %v3162 = vadd.f32 0.0, %v3161
        %v3163 = vpop.f32.mrf.mxu0
        %3164 = vdwg.mxu0
        %3165 = vmatpush.bf16.msra.mxu0 %v3063
        %3166 = vmatpush.bf16.msra.mxu0 %v3057
        %3167 = vmatpush.bf16.msra.mxu0 %v3051
        %3168 = vmatpush.bf16.msra.mxu0 %v3045
        %3169 = vmatpush.bf16.msra.mxu0 %v3039
        %3170 = vmatpush.bf16.msra.mxu0 %v3033
        %3171 = vmatpush.bf16.msra.mxu0 %v3027
        %3172 = vmatpush.bf16.msra.mxu0 %v3021
        %3173 = vmatmul.bf16.gmra.mxu0 %v2823
        %v3174 = vpop.f32.mrf.mxu0
        %v3175 = vadd.f32 0.0, %v3174
        %v3176 = vpop.f32.mrf.mxu0
        %3177 = vdwg.mxu0
        %3178 = vmatpush.bf16.msra.mxu0 %v3064
        %3179 = vmatpush.bf16.msra.mxu0 %v3058
        %3180 = vmatpush.bf16.msra.mxu0 %v3052
        %3181 = vmatpush.bf16.msra.mxu0 %v3046
        %3182 = vmatpush.bf16.msra.mxu0 %v3040
        %3183 = vmatpush.bf16.msra.mxu0 %v3034
        %3184 = vmatpush.bf16.msra.mxu0 %v3028
        %3185 = vmatpush.bf16.msra.mxu0 %v3022
        %3186 = vmatmul.bf16.gmra.mxu0 %v2823
        %v3187 = vpop.f32.mrf.mxu0
        %v3188 = vadd.f32 0.0, %v3187
        %v3189 = vpop.f32.mrf.mxu0
        %3190 = vdwg.mxu0
        %v3191 = vpack.c.bf16 %v3123, %v3123
        %v3192 = vpack.c.bf16 %v3149, %v3149
        %v3193 = vpack.c.bf16 %v3175, %v3175
        %3194 = vmatpush.bf16.xpose.msra.mxu0 0
        %3195 = vmatpush.bf16.xpose.msra.mxu0 0
        %3196 = vmatpush.bf16.xpose.msra.mxu0 0
        %3197 = vmatpush.bf16.xpose.msra.mxu0 0
        %3198 = vmatpush.bf16.xpose.msra.mxu0 0
        %3199 = vmatpush.bf16.xpose.msra.mxu0 0
        %3200 = vmatpush.bf16.xpose.msra.mxu0 0
        %3201 = vmatpush.bf16.xpose.msra.mxu0 %v3192
        %3202 = vmatmul.bf16.gmra.mxu0 %v3191
        %v3203 = vpop.f32.mrf.mxu0
        %v3204 = vadd.f32 0.0, %v3203
        %v3205 = vpop.f32.mrf.mxu0
        %3206 = vdwg.mxu0
        %v3207 = vsel %vm1510, %v3204, -inf
        %3208 = vmax.xlane.f32.xlu0 %v3207
        %v3209 = vpop.xlane.xlu0 %3208
        %v3210 = vsub.f32 %v3204, %v3209
        %v3211 = vmul.f32 %v3210, 1.442695
        %v3212 = vpow.pop %v3211
        %v3213 = vsel %vm1510, %v3212, 0.0
        %3214 = vadd.xlane.f32.xlu0 %v3213
        %v3215 = vpop.xlane.xlu0 %3214
        %v3216 = vrcp.pop %v3215
        %v3217 = vmul.f32 %v3212, %v3216
        %v3218 = vpack.c.bf16 %v3217, %v3217
        %v3220 = vsel %vm1510, %v3218, 0
        %v3223 = vsel %vm1526, %v3193, 0
        %3225 = vmatpush.bf16.msra.mxu0 0
        %3226 = vmatpush.bf16.msra.mxu0 0
        %3227 = vmatpush.bf16.msra.mxu0 0
        %3228 = vmatpush.bf16.msra.mxu0 0
        %3229 = vmatpush.bf16.msra.mxu0 0
        %3230 = vmatpush.bf16.msra.mxu0 0
        %3231 = vmatpush.bf16.msra.mxu0 0
        %3232 = vmatpush.bf16.msra.mxu0 %v3223
        %3233 = vmatmul.bf16.gmra.mxu0 %v3220
        %v3234 = vpop.f32.mrf.mxu0
        %v3235 = vadd.f32 0.0, %v3234
        %v3236 = vpop.f32.mrf.mxu0
        %3237 = vdwg.mxu0
        %s3238 = scalar_lea.vmem [#allocation6], 256
        %v3239 = vld [vmem:[%s3238] sm:$0xf]
        %v3240 = vld [vmem:[%s3238 + $0x4] sm:$0xf]
        %v3241 = vld [vmem:[%s3238 + $0x8] sm:$0xf]
        %v3242 = vld [vmem:[%s3238 + $0xc] sm:$0xf]
        %v3243 = vld [vmem:[%s3238 + $0x10] sm:$0xf]
        %v3244 = vld [vmem:[%s3238 + $0x14] sm:$0xf]
        %v3245 = vld [vmem:[%s3238 + $0x18] sm:$0xf]
        %v3246 = vld [vmem:[%s3238 + $0x1c] sm:$0xf]
        %v3247 = vld [vmem:[%s3238 + $0x20] sm:$0xf]
        %v3248 = vld [vmem:[%s3238 + $0x24] sm:$0xf]
        %v3249 = vld [vmem:[%s3238 + $0x28] sm:$0xf]
        %v3250 = vld [vmem:[%s3238 + $0x2c] sm:$0xf]
        %v3251 = vld [vmem:[%s3238 + $0x30] sm:$0xf]
        %v3252 = vld [vmem:[%s3238 + $0x34] sm:$0xf]
        %v3253 = vld [vmem:[%s3238 + $0x38] sm:$0xf]
        %v3254 = vld [vmem:[%s3238 + $0x3c] sm:$0xf]
        %v3255 = vpack.c.bf16 %v3235, %v3235
        %v3272 = vunpack.c.l.b16 %v3239
        %v3273 = vunpack.c.l.b16 %v3240
        %v3274 = vunpack.c.l.b16 %v3241
        %v3275 = vunpack.c.l.b16 %v3242
        %v3276 = vunpack.c.l.b16 %v3243
        %v3277 = vunpack.c.l.b16 %v3244
        %v3278 = vunpack.c.l.b16 %v3245
        %v3279 = vunpack.c.l.b16 %v3246
        %v3280 = vunpack.c.l.b16 %v3247
        %v3281 = vunpack.c.l.b16 %v3248
        %v3282 = vunpack.c.l.b16 %v3249
        %v3283 = vunpack.c.l.b16 %v3250
        %v3284 = vunpack.c.l.b16 %v3251
        %v3285 = vunpack.c.l.b16 %v3252
        %v3286 = vunpack.c.l.b16 %v3253
        %v3287 = vunpack.c.l.b16 %v3254
        %v3288 = vpack.c.b16 %v3273, %v3272
        %v3289 = vpack.c.b16 %v3275, %v3274
        %v3290 = vpack.c.b16 %v3277, %v3276
        %v3291 = vpack.c.b16 %v3279, %v3278
        %v3292 = vpack.c.b16 %v3281, %v3280
        %v3293 = vpack.c.b16 %v3283, %v3282
        %v3294 = vpack.c.b16 %v3285, %v3284
        %v3295 = vpack.c.b16 %v3287, %v3286
        %3304 = vmatpush.bf16.msra.mxu0 %v3295
        %3305 = vmatpush.bf16.msra.mxu0 %v3294
        %3306 = vmatpush.bf16.msra.mxu0 %v3293
        %3307 = vmatpush.bf16.msra.mxu0 %v3292
        %3308 = vmatpush.bf16.msra.mxu0 %v3291
        %3309 = vmatpush.bf16.msra.mxu0 %v3290
        %3310 = vmatpush.bf16.msra.mxu0 %v3289
        %3311 = vmatpush.bf16.msra.mxu0 %v3288
        %3312 = vmatmul.bf16.gmra.mxu0 %v3255
        %v3313 = vpop.f32.mrf.mxu0
        %v3314 = vadd.f32 0.0, %v3313
        %v3315 = vpop.f32.mrf.mxu0
        %3316 = vdwg.mxu0
        %v3317 = vadd.f32 %v2796, %v3314
        %v3318 = vpack.c.bf16 %v3136, %v3136
        %v3319 = vpack.c.bf16 %v3162, %v3162
        %v3320 = vpack.c.bf16 %v3188, %v3188
        %3321 = vmatpush.bf16.xpose.msra.mxu0 0
        %3322 = vmatpush.bf16.xpose.msra.mxu0 0
        %3323 = vmatpush.bf16.xpose.msra.mxu0 0
        %3324 = vmatpush.bf16.xpose.msra.mxu0 0
        %3325 = vmatpush.bf16.xpose.msra.mxu0 0
        %3326 = vmatpush.bf16.xpose.msra.mxu0 0
        %3327 = vmatpush.bf16.xpose.msra.mxu0 0
        %3328 = vmatpush.bf16.xpose.msra.mxu0 %v3319
        %3329 = vmatmul.bf16.gmra.mxu0 %v3318
        %v3330 = vpop.f32.mrf.mxu0
        %v3331 = vadd.f32 0.0, %v3330
        %v3332 = vpop.f32.mrf.mxu0
        %3333 = vdwg.mxu0
        %v3334 = vsel %vm1510, %v3331, -inf
        %3335 = vmax.xlane.f32.xlu0 %v3334
        %v3336 = vpop.xlane.xlu0 %3335
        %v3337 = vsub.f32 %v3331, %v3336
        %v3338 = vmul.f32 %v3337, 1.442695
        %v3339 = vpow.pop %v3338
        %v3340 = vsel %vm1510, %v3339, 0.0
        %3341 = vadd.xlane.f32.xlu0 %v3340
        %v3342 = vpop.xlane.xlu0 %3341
        %v3343 = vrcp.pop %v3342
        %v3344 = vmul.f32 %v3339, %v3343
        %v3345 = vpack.c.bf16 %v3344, %v3344
        %v3347 = vsel %vm1510, %v3345, 0
        %v3350 = vsel %vm1526, %v3320, 0
        %3352 = vmatpush.bf16.msra.mxu0 0
        %3353 = vmatpush.bf16.msra.mxu0 0
        %3354 = vmatpush.bf16.msra.mxu0 0
        %3355 = vmatpush.bf16.msra.mxu0 0
        %3356 = vmatpush.bf16.msra.mxu0 0
        %3357 = vmatpush.bf16.msra.mxu0 0
        %3358 = vmatpush.bf16.msra.mxu0 0
        %3359 = vmatpush.bf16.msra.mxu0 %v3350
        %3360 = vmatmul.bf16.gmra.mxu0 %v3347
        %v3361 = vpop.f32.mrf.mxu0
        %v3362 = vadd.f32 0.0, %v3361
        %v3363 = vpop.f32.mrf.mxu0
        %3364 = vdwg.mxu0
        %v3365 = vld [vmem:[%s3238 + $0x40] sm:$0xf]
        %v3366 = vld [vmem:[%s3238 + $0x44] sm:$0xf]
        %v3367 = vld [vmem:[%s3238 + $0x48] sm:$0xf]
        %v3368 = vld [vmem:[%s3238 + $0x4c] sm:$0xf]
        %v3369 = vld [vmem:[%s3238 + $0x50] sm:$0xf]
        %v3370 = vld [vmem:[%s3238 + $0x54] sm:$0xf]
        %v3371 = vld [vmem:[%s3238 + $0x58] sm:$0xf]
        %v3372 = vld [vmem:[%s3238 + $0x5c] sm:$0xf]
        %v3373 = vld [vmem:[%s3238 + $0x60] sm:$0xf]
        %v3374 = vld [vmem:[%s3238 + $0x64] sm:$0xf]
        %v3375 = vld [vmem:[%s3238 + $0x68] sm:$0xf]
        %v3376 = vld [vmem:[%s3238 + $0x6c] sm:$0xf]
        %v3377 = vld [vmem:[%s3238 + $0x70] sm:$0xf]
        %v3378 = vld [vmem:[%s3238 + $0x74] sm:$0xf]
        %v3379 = vld [vmem:[%s3238 + $0x78] sm:$0xf]
        %v3380 = vld [vmem:[%s3238 + $0x7c] sm:$0xf]
        %v3381 = vpack.c.bf16 %v3362, %v3362
        %v3398 = vunpack.c.l.b16 %v3365
        %v3399 = vunpack.c.l.b16 %v3366
        %v3400 = vunpack.c.l.b16 %v3367
        %v3401 = vunpack.c.l.b16 %v3368
        %v3402 = vunpack.c.l.b16 %v3369
        %v3403 = vunpack.c.l.b16 %v3370
        %v3404 = vunpack.c.l.b16 %v3371
        %v3405 = vunpack.c.l.b16 %v3372
        %v3406 = vunpack.c.l.b16 %v3373
        %v3407 = vunpack.c.l.b16 %v3374
        %v3408 = vunpack.c.l.b16 %v3375
        %v3409 = vunpack.c.l.b16 %v3376
        %v3410 = vunpack.c.l.b16 %v3377
        %v3411 = vunpack.c.l.b16 %v3378
        %v3412 = vunpack.c.l.b16 %v3379
        %v3413 = vunpack.c.l.b16 %v3380
        %v3414 = vpack.c.b16 %v3399, %v3398
        %v3415 = vpack.c.b16 %v3401, %v3400
        %v3416 = vpack.c.b16 %v3403, %v3402
        %v3417 = vpack.c.b16 %v3405, %v3404
        %v3418 = vpack.c.b16 %v3407, %v3406
        %v3419 = vpack.c.b16 %v3409, %v3408
        %v3420 = vpack.c.b16 %v3411, %v3410
        %v3421 = vpack.c.b16 %v3413, %v3412
        %3430 = vmatpush.bf16.msra.mxu0 %v3421
        %3431 = vmatpush.bf16.msra.mxu0 %v3420
        %3432 = vmatpush.bf16.msra.mxu0 %v3419
        %3433 = vmatpush.bf16.msra.mxu0 %v3418
        %3434 = vmatpush.bf16.msra.mxu0 %v3417
        %3435 = vmatpush.bf16.msra.mxu0 %v3416
        %3436 = vmatpush.bf16.msra.mxu0 %v3415
        %3437 = vmatpush.bf16.msra.mxu0 %v3414
        %3438 = vmatmul.bf16.gmra.mxu0 %v3381
        %v3439 = vpop.f32.mrf.mxu0
        %v3440 = vadd.f32 0.0, %v3439
        %v3441 = vpop.f32.mrf.mxu0
        %3442 = vdwg.mxu0
        %v3443 = vadd.f32 %v3317, %v3440
        %v3444 = vld [vmem:[%s7 + $0x2] sm:$0x1]
        %v3445 = vperm.slane %v3444, 0
        %v3446 = vadd.f32 %v3443, %v3445
        %v3447 = vld [vmem:[%s8 + $0x2] sm:$0x1]
        %v3448 = vld [vmem:[%s9 + $0x2] sm:$0x1]
        %3449 = vadd.xlane.f32.xlu0 %v3446
        %v3450 = vpop.xlane.xlu0 %3449
        %v3451 = vmul.f32 %v3450, %v1104
        %v3452 = vsub.f32 %v3446, %v3451
        %v3453 = vmul.f32 %v3452, %v3452
        %3454 = vadd.xlane.f32.xlu0 %v3453
        %v3455 = vpop.xlane.xlu0 %3454
        %v3456 = vmul.f32 %v3455, %v1104
        %v3457 = vadd.f32 %v3456, 1e-05
        %v3458 = vrsqrt.pop %v3457
        %v3459 = vmul.f32 %v3458, %v3457
        %v3460 = vmul.f32 %v3459, %v3458
        %v3461 = vmul.f32 0.5, %v3460
        %v3462 = vsub.f32 1.5, %v3461
        %v3463 = vmul.f32 %v3458, %v3462
        %vm3464 = vweird.f32 %v3457
        %vm3465 = vweird.f32 %v3458
        %vm3466 = vmor %vm3464, %vm3465
        %v3467 = vsel %vm3466, %v3458, %v3463
        %v3468 = vmul.f32 %v3452, %v3467
        %v3469 = vperm.slane %v3447, 0
        %v3470 = vmul.f32 %v3468, %v3469
        %v3471 = vperm.slane %v3448, 0
        %v3472 = vadd.f32 %v3470, %v3471
        %v3473 = vpack.c.bf16 %v3472, %v3472
        %s3474 = scalar_lea.vmem [#allocation7], 128
        %v3475 = vld [vmem:[%s3474] sm:$0xf]
        %v3476 = vld [vmem:[%s3474 + $0x4] sm:$0xf]
        %v3477 = vld [vmem:[%s3474 + $0x8] sm:$0xf]
        %v3478 = vld [vmem:[%s3474 + $0xc] sm:$0xf]
        %v3479 = vld [vmem:[%s3474 + $0x10] sm:$0xf]
        %v3480 = vld [vmem:[%s3474 + $0x14] sm:$0xf]
        %v3481 = vld [vmem:[%s3474 + $0x18] sm:$0xf]
        %v3482 = vld [vmem:[%s3474 + $0x1c] sm:$0xf]
        %v3483 = vld [vmem:[%s3474 + $0x20] sm:$0xf]
        %v3484 = vld [vmem:[%s3474 + $0x24] sm:$0xf]
        %v3485 = vld [vmem:[%s3474 + $0x28] sm:$0xf]
        %v3486 = vld [vmem:[%s3474 + $0x2c] sm:$0xf]
        %v3487 = vld [vmem:[%s3474 + $0x30] sm:$0xf]
        %v3488 = vld [vmem:[%s3474 + $0x34] sm:$0xf]
        %v3489 = vld [vmem:[%s3474 + $0x38] sm:$0xf]
        %v3490 = vld [vmem:[%s3474 + $0x3c] sm:$0xf]
        %v3491 = vld [vmem:[%s11 + $0x2] sm:$0x1]
        %v3492 = vperm.slane %v3491, 0
        %v3509 = vunpack.c.l.b16 %v3475
        %v3510 = vunpack.c.l.b16 %v3476
        %v3511 = vunpack.c.l.b16 %v3477
        %v3512 = vunpack.c.l.b16 %v3478
        %v3513 = vunpack.c.l.b16 %v3479
        %v3514 = vunpack.c.l.b16 %v3480
        %v3515 = vunpack.c.l.b16 %v3481
        %v3516 = vunpack.c.l.b16 %v3482
        %v3517 = vunpack.c.l.b16 %v3483
        %v3518 = vunpack.c.l.b16 %v3484
        %v3519 = vunpack.c.l.b16 %v3485
        %v3520 = vunpack.c.l.b16 %v3486
        %v3521 = vunpack.c.l.b16 %v3487
        %v3522 = vunpack.c.l.b16 %v3488
        %v3523 = vunpack.c.l.b16 %v3489
        %v3524 = vunpack.c.l.b16 %v3490
        %v3525 = vpack.c.b16 %v3510, %v3509
        %v3526 = vpack.c.b16 %v3512, %v3511
        %v3527 = vpack.c.b16 %v3514, %v3513
        %v3528 = vpack.c.b16 %v3516, %v3515
        %v3529 = vpack.c.b16 %v3518, %v3517
        %v3530 = vpack.c.b16 %v3520, %v3519
        %v3531 = vpack.c.b16 %v3522, %v3521
        %v3532 = vpack.c.b16 %v3524, %v3523
        %3541 = vmatpush.bf16.msra.mxu0 %v3532
        %3542 = vmatpush.bf16.msra.mxu0 %v3531
        %3543 = vmatpush.bf16.msra.mxu0 %v3530
        %3544 = vmatpush.bf16.msra.mxu0 %v3529
        %3545 = vmatpush.bf16.msra.mxu0 %v3528
        %3546 = vmatpush.bf16.msra.mxu0 %v3527
        %3547 = vmatpush.bf16.msra.mxu0 %v3526
        %3548 = vmatpush.bf16.msra.mxu0 %v3525
        %3549 = vmatmul.bf16.gmra.mxu0 %v3473
        %v3550 = vpop.f32.mrf.mxu0
        %v3551 = vadd.f32 %v3492, %v3550
        %v3552 = vpop.f32.mrf.mxu0
        %3553 = vdwg.mxu0
        %v3554 = vmul.f32 %v3551, %v3551
        %v3555 = vmul.f32 %v3551, %v3554
        %v3556 = vmul.f32 %v3555, 0.044715
        %v3557 = vadd.f32 %v3551, %v3556
        %v3558 = vmul.f32 %v3557, 0.7978846
        %v3559 = vtanh.pop %v3558
        %v3560 = vadd.f32 %v3559, 1.0
        %v3561 = vmul.f32 %v3560, 0.5
        %v3562 = vmul.f32 %v3551, %v3561
        %s3563 = scalar_lea.vmem [#allocation9], 128
        %v3564 = vld [vmem:[%s3563] sm:$0xf]
        %v3565 = vld [vmem:[%s3563 + $0x4] sm:$0xf]
        %v3566 = vld [vmem:[%s3563 + $0x8] sm:$0xf]
        %v3567 = vld [vmem:[%s3563 + $0xc] sm:$0xf]
        %v3568 = vld [vmem:[%s3563 + $0x10] sm:$0xf]
        %v3569 = vld [vmem:[%s3563 + $0x14] sm:$0xf]
        %v3570 = vld [vmem:[%s3563 + $0x18] sm:$0xf]
        %v3571 = vld [vmem:[%s3563 + $0x1c] sm:$0xf]
        %v3572 = vld [vmem:[%s3563 + $0x20] sm:$0xf]
        %v3573 = vld [vmem:[%s3563 + $0x24] sm:$0xf]
        %v3574 = vld [vmem:[%s3563 + $0x28] sm:$0xf]
        %v3575 = vld [vmem:[%s3563 + $0x2c] sm:$0xf]
        %v3576 = vld [vmem:[%s3563 + $0x30] sm:$0xf]
        %v3577 = vld [vmem:[%s3563 + $0x34] sm:$0xf]
        %v3578 = vld [vmem:[%s3563 + $0x38] sm:$0xf]
        %v3579 = vld [vmem:[%s3563 + $0x3c] sm:$0xf]
        %v3580 = vpack.c.bf16 %v3562, %v3562
        %v3597 = vunpack.c.l.b16 %v3564
        %v3598 = vunpack.c.l.b16 %v3565
        %v3599 = vunpack.c.l.b16 %v3566
        %v3600 = vunpack.c.l.b16 %v3567
        %v3601 = vunpack.c.l.b16 %v3568
        %v3602 = vunpack.c.l.b16 %v3569
        %v3603 = vunpack.c.l.b16 %v3570
        %v3604 = vunpack.c.l.b16 %v3571
        %v3605 = vunpack.c.l.b16 %v3572
        %v3606 = vunpack.c.l.b16 %v3573
        %v3607 = vunpack.c.l.b16 %v3574
        %v3608 = vunpack.c.l.b16 %v3575
        %v3609 = vunpack.c.l.b16 %v3576
        %v3610 = vunpack.c.l.b16 %v3577
        %v3611 = vunpack.c.l.b16 %v3578
        %v3612 = vunpack.c.l.b16 %v3579
        %v3613 = vpack.c.b16 %v3598, %v3597
        %v3614 = vpack.c.b16 %v3600, %v3599
        %v3615 = vpack.c.b16 %v3602, %v3601
        %v3616 = vpack.c.b16 %v3604, %v3603
        %v3617 = vpack.c.b16 %v3606, %v3605
        %v3618 = vpack.c.b16 %v3608, %v3607
        %v3619 = vpack.c.b16 %v3610, %v3609
        %v3620 = vpack.c.b16 %v3612, %v3611
        %3629 = vmatpush.bf16.msra.mxu0 %v3620
        %3630 = vmatpush.bf16.msra.mxu0 %v3619
        %3631 = vmatpush.bf16.msra.mxu0 %v3618
        %3632 = vmatpush.bf16.msra.mxu0 %v3617
        %3633 = vmatpush.bf16.msra.mxu0 %v3616
        %3634 = vmatpush.bf16.msra.mxu0 %v3615
        %3635 = vmatpush.bf16.msra.mxu0 %v3614
        %3636 = vmatpush.bf16.msra.mxu0 %v3613
        %3637 = vmatmul.bf16.gmra.mxu0 %v3580
        %v3638 = vpop.f32.mrf.mxu0
        %v3639 = vadd.f32 0.0, %v3638
        %v3640 = vpop.f32.mrf.mxu0
        %3641 = vdwg.mxu0
        %v3642 = vadd.f32 %v3446, %v3639
        %v3643 = vld [vmem:[%s13 + $0x2] sm:$0x1]
        %v3644 = vperm.slane %v3643, 0
        %v3645 = vadd.f32 %v3642, %v3644
        %v3646 = vld [vmem:[%s3 + $0x3] sm:$0x1]
        %v3647 = vld [vmem:[%s4 + $0x3] sm:$0x1]
        %3648 = vadd.xlane.f32.xlu0 %v3645
        %v3649 = vpop.xlane.xlu0 %3648
        %v3650 = vmul.f32 %v3649, %v1104
        %v3651 = vsub.f32 %v3645, %v3650
        %v3652 = vmul.f32 %v3651, %v3651
        %3653 = vadd.xlane.f32.xlu0 %v3652
        %v3654 = vpop.xlane.xlu0 %3653
        %v3655 = vmul.f32 %v3654, %v1104
        %v3656 = vadd.f32 %v3655, 1e-05
        %v3657 = vrsqrt.pop %v3656
        %v3658 = vmul.f32 %v3657, %v3656
        %v3659 = vmul.f32 %v3658, %v3657
        %v3660 = vmul.f32 0.5, %v3659
        %v3661 = vsub.f32 1.5, %v3660
        %v3662 = vmul.f32 %v3657, %v3661
        %vm3663 = vweird.f32 %v3656
        %vm3664 = vweird.f32 %v3657
        %vm3665 = vmor %vm3663, %vm3664
        %v3666 = vsel %vm3665, %v3657, %v3662
        %v3667 = vmul.f32 %v3651, %v3666
        %v3668 = vperm.slane %v3646, 0
        %v3669 = vmul.f32 %v3667, %v3668
        %v3670 = vperm.slane %v3647, 0
        %v3671 = vadd.f32 %v3669, %v3670
        %v3672 = vpack.c.bf16 %v3671, %v3671
        %s3673 = scalar_lea.vmem [#allocation4], 1152
        %v3674 = vld [vmem:[%s3673] sm:$0xff]
        %v3675 = vld [vmem:[%s3673 + $0x8] sm:$0xff]
        %v3676 = vld [vmem:[%s3673 + $0x10] sm:$0xff]
        %v3677 = vld [vmem:[%s3673 + $0x18] sm:$0xff]
        %v3678 = vld [vmem:[%s3673 + $0x20] sm:$0xff]
        %v3679 = vld [vmem:[%s3673 + $0x28] sm:$0xff]
        %v3680 = vld [vmem:[%s3673 + $0x30] sm:$0xff]
        %v3681 = vld [vmem:[%s3673 + $0x38] sm:$0xff]
        %v3682 = vld [vmem:[%s3673 + $0x40] sm:$0xff]
        %v3683 = vld [vmem:[%s3673 + $0x48] sm:$0xff]
        %v3684 = vld [vmem:[%s3673 + $0x50] sm:$0xff]
        %v3685 = vld [vmem:[%s3673 + $0x58] sm:$0xff]
        %v3686 = vld [vmem:[%s3673 + $0x60] sm:$0xff]
        %v3687 = vld [vmem:[%s3673 + $0x68] sm:$0xff]
        %v3688 = vld [vmem:[%s3673 + $0x70] sm:$0xff]
        %v3689 = vld [vmem:[%s3673 + $0x78] sm:$0xff]
        %v3690 = vld [vmem:[%s3673 + $0x80] sm:$0xff]
        %v3691 = vld [vmem:[%s3673 + $0x88] sm:$0xff]
        %v3692 = vld [vmem:[%s3673 + $0x90] sm:$0xff]
        %v3693 = vld [vmem:[%s3673 + $0x98] sm:$0xff]
        %v3694 = vld [vmem:[%s3673 + $0xa0] sm:$0xff]
        %v3695 = vld [vmem:[%s3673 + $0xa8] sm:$0xff]
        %v3696 = vld [vmem:[%s3673 + $0xb0] sm:$0xff]
        %v3697 = vld [vmem:[%s3673 + $0xb8] sm:$0xff]
        %v3698 = vld [vmem:[%s3673 + $0xc0] sm:$0xff]
        %v3699 = vld [vmem:[%s3673 + $0xc8] sm:$0xff]
        %v3700 = vld [vmem:[%s3673 + $0xd0] sm:$0xff]
        %v3701 = vld [vmem:[%s3673 + $0xd8] sm:$0xff]
        %v3702 = vld [vmem:[%s3673 + $0xe0] sm:$0xff]
        %v3703 = vld [vmem:[%s3673 + $0xe8] sm:$0xff]
        %v3704 = vld [vmem:[%s3673 + $0xf0] sm:$0xff]
        %v3705 = vld [vmem:[%s3673 + $0xf8] sm:$0xff]
        %v3706 = vld [vmem:[%s3673 + $0x100] sm:$0xff]
        %v3707 = vld [vmem:[%s3673 + $0x108] sm:$0xff]
        %v3708 = vld [vmem:[%s3673 + $0x110] sm:$0xff]
        %v3709 = vld [vmem:[%s3673 + $0x118] sm:$0xff]
        %v3710 = vld [vmem:[%s3673 + $0x120] sm:$0xff]
        %v3711 = vld [vmem:[%s3673 + $0x128] sm:$0xff]
        %v3712 = vld [vmem:[%s3673 + $0x130] sm:$0xff]
        %v3713 = vld [vmem:[%s3673 + $0x138] sm:$0xff]
        %v3714 = vld [vmem:[%s3673 + $0x140] sm:$0xff]
        %v3715 = vld [vmem:[%s3673 + $0x148] sm:$0xff]
        %v3716 = vld [vmem:[%s3673 + $0x150] sm:$0xff]
        %v3717 = vld [vmem:[%s3673 + $0x158] sm:$0xff]
        %v3718 = vld [vmem:[%s3673 + $0x160] sm:$0xff]
        %v3719 = vld [vmem:[%s3673 + $0x168] sm:$0xff]
        %v3720 = vld [vmem:[%s3673 + $0x170] sm:$0xff]
        %v3721 = vld [vmem:[%s3673 + $0x178] sm:$0xff]
        %v3770 = vunpack.c.l.b16 %v3674
        %v3771 = vunpack.c.h.b16 %v3674
        %v3772 = vunpack.c.l.b16 %v3675
        %v3773 = vunpack.c.h.b16 %v3675
        %v3774 = vunpack.c.l.b16 %v3676
        %v3775 = vunpack.c.h.b16 %v3676
        %v3776 = vunpack.c.l.b16 %v3677
        %v3777 = vunpack.c.h.b16 %v3677
        %v3778 = vunpack.c.l.b16 %v3678
        %v3779 = vunpack.c.h.b16 %v3678
        %v3780 = vunpack.c.l.b16 %v3679
        %v3781 = vunpack.c.h.b16 %v3679
        %v3782 = vunpack.c.l.b16 %v3680
        %v3783 = vunpack.c.h.b16 %v3680
        %v3784 = vunpack.c.l.b16 %v3681
        %v3785 = vunpack.c.h.b16 %v3681
        %v3786 = vunpack.c.l.b16 %v3682
        %v3787 = vunpack.c.h.b16 %v3682
        %v3788 = vunpack.c.l.b16 %v3683
        %v3789 = vunpack.c.h.b16 %v3683
        %v3790 = vunpack.c.l.b16 %v3684
        %v3791 = vunpack.c.h.b16 %v3684
        %v3792 = vunpack.c.l.b16 %v3685
        %v3793 = vunpack.c.h.b16 %v3685
        %v3794 = vunpack.c.l.b16 %v3686
        %v3795 = vunpack.c.h.b16 %v3686
        %v3796 = vunpack.c.l.b16 %v3687
        %v3797 = vunpack.c.h.b16 %v3687
        %v3798 = vunpack.c.l.b16 %v3688
        %v3799 = vunpack.c.h.b16 %v3688
        %v3800 = vunpack.c.l.b16 %v3689
        %v3801 = vunpack.c.h.b16 %v3689
        %v3802 = vunpack.c.l.b16 %v3690
        %v3803 = vunpack.c.h.b16 %v3690
        %v3804 = vunpack.c.l.b16 %v3691
        %v3805 = vunpack.c.h.b16 %v3691
        %v3806 = vunpack.c.l.b16 %v3692
        %v3807 = vunpack.c.h.b16 %v3692
        %v3808 = vunpack.c.l.b16 %v3693
        %v3809 = vunpack.c.h.b16 %v3693
        %v3810 = vunpack.c.l.b16 %v3694
        %v3811 = vunpack.c.h.b16 %v3694
        %v3812 = vunpack.c.l.b16 %v3695
        %v3813 = vunpack.c.h.b16 %v3695
        %v3814 = vunpack.c.l.b16 %v3696
        %v3815 = vunpack.c.h.b16 %v3696
        %v3816 = vunpack.c.l.b16 %v3697
        %v3817 = vunpack.c.h.b16 %v3697
        %v3818 = vunpack.c.l.b16 %v3698
        %v3819 = vunpack.c.h.b16 %v3698
        %v3820 = vunpack.c.l.b16 %v3699
        %v3821 = vunpack.c.h.b16 %v3699
        %v3822 = vunpack.c.l.b16 %v3700
        %v3823 = vunpack.c.h.b16 %v3700
        %v3824 = vunpack.c.l.b16 %v3701
        %v3825 = vunpack.c.h.b16 %v3701
        %v3826 = vunpack.c.l.b16 %v3702
        %v3827 = vunpack.c.h.b16 %v3702
        %v3828 = vunpack.c.l.b16 %v3703
        %v3829 = vunpack.c.h.b16 %v3703
        %v3830 = vunpack.c.l.b16 %v3704
        %v3831 = vunpack.c.h.b16 %v3704
        %v3832 = vunpack.c.l.b16 %v3705
        %v3833 = vunpack.c.h.b16 %v3705
        %v3834 = vunpack.c.l.b16 %v3706
        %v3835 = vunpack.c.h.b16 %v3706
        %v3836 = vunpack.c.l.b16 %v3707
        %v3837 = vunpack.c.h.b16 %v3707
        %v3838 = vunpack.c.l.b16 %v3708
        %v3839 = vunpack.c.h.b16 %v3708
        %v3840 = vunpack.c.l.b16 %v3709
        %v3841 = vunpack.c.h.b16 %v3709
        %v3842 = vunpack.c.l.b16 %v3710
        %v3843 = vunpack.c.h.b16 %v3710
        %v3844 = vunpack.c.l.b16 %v3711
        %v3845 = vunpack.c.h.b16 %v3711
        %v3846 = vunpack.c.l.b16 %v3712
        %v3847 = vunpack.c.h.b16 %v3712
        %v3848 = vunpack.c.l.b16 %v3713
        %v3849 = vunpack.c.h.b16 %v3713
        %v3850 = vunpack.c.l.b16 %v3714
        %v3851 = vunpack.c.h.b16 %v3714
        %v3852 = vunpack.c.l.b16 %v3715
        %v3853 = vunpack.c.h.b16 %v3715
        %v3854 = vunpack.c.l.b16 %v3716
        %v3855 = vunpack.c.h.b16 %v3716
        %v3856 = vunpack.c.l.b16 %v3717
        %v3857 = vunpack.c.h.b16 %v3717
        %v3858 = vunpack.c.l.b16 %v3718
        %v3859 = vunpack.c.h.b16 %v3718
        %v3860 = vunpack.c.l.b16 %v3719
        %v3861 = vunpack.c.h.b16 %v3719
        %v3862 = vunpack.c.l.b16 %v3720
        %v3863 = vunpack.c.h.b16 %v3720
        %v3864 = vunpack.c.l.b16 %v3721
        %v3865 = vunpack.c.h.b16 %v3721
        %v3866 = vpack.c.b16 %v3776, %v3770
        %v3867 = vpack.c.b16 %v3777, %v3771
        %v3868 = vpack.c.b16 %v3778, %v3772
        %v3869 = vpack.c.b16 %v3779, %v3773
        %v3870 = vpack.c.b16 %v3780, %v3774
        %v3871 = vpack.c.b16 %v3781, %v3775
        %v3872 = vpack.c.b16 %v3788, %v3782
        %v3873 = vpack.c.b16 %v3789, %v3783
        %v3874 = vpack.c.b16 %v3790, %v3784
        %v3875 = vpack.c.b16 %v3791, %v3785
        %v3876 = vpack.c.b16 %v3792, %v3786
        %v3877 = vpack.c.b16 %v3793, %v3787
        %v3878 = vpack.c.b16 %v3800, %v3794
        %v3879 = vpack.c.b16 %v3801, %v3795
        %v3880 = vpack.c.b16 %v3802, %v3796
        %v3881 = vpack.c.b16 %v3803, %v3797
        %v3882 = vpack.c.b16 %v3804, %v3798
        %v3883 = vpack.c.b16 %v3805, %v3799
        %v3884 = vpack.c.b16 %v3812, %v3806
        %v3885 = vpack.c.b16 %v3813, %v3807
        %v3886 = vpack.c.b16 %v3814, %v3808
        %v3887 = vpack.c.b16 %v3815, %v3809
        %v3888 = vpack.c.b16 %v3816, %v3810
        %v3889 = vpack.c.b16 %v3817, %v3811
        %v3890 = vpack.c.b16 %v3824, %v3818
        %v3891 = vpack.c.b16 %v3825, %v3819
        %v3892 = vpack.c.b16 %v3826, %v3820
        %v3893 = vpack.c.b16 %v3827, %v3821
        %v3894 = vpack.c.b16 %v3828, %v3822
        %v3895 = vpack.c.b16 %v3829, %v3823
        %v3896 = vpack.c.b16 %v3836, %v3830
        %v3897 = vpack.c.b16 %v3837, %v3831
        %v3898 = vpack.c.b16 %v3838, %v3832
        %v3899 = vpack.c.b16 %v3839, %v3833
        %v3900 = vpack.c.b16 %v3840, %v3834
        %v3901 = vpack.c.b16 %v3841, %v3835
        %v3902 = vpack.c.b16 %v3848, %v3842
        %v3903 = vpack.c.b16 %v3849, %v3843
        %v3904 = vpack.c.b16 %v3850, %v3844
        %v3905 = vpack.c.b16 %v3851, %v3845
        %v3906 = vpack.c.b16 %v3852, %v3846
        %v3907 = vpack.c.b16 %v3853, %v3847
        %v3908 = vpack.c.b16 %v3860, %v3854
        %v3909 = vpack.c.b16 %v3861, %v3855
        %v3910 = vpack.c.b16 %v3862, %v3856
        %v3911 = vpack.c.b16 %v3863, %v3857
        %v3912 = vpack.c.b16 %v3864, %v3858
        %v3913 = vpack.c.b16 %v3865, %v3859
        %3962 = vmatpush.bf16.msra.mxu0 %v3908
        %3963 = vmatpush.bf16.msra.mxu0 %v3902
        %3964 = vmatpush.bf16.msra.mxu0 %v3896
        %3965 = vmatpush.bf16.msra.mxu0 %v3890
        %3966 = vmatpush.bf16.msra.mxu0 %v3884
        %3967 = vmatpush.bf16.msra.mxu0 %v3878
        %3968 = vmatpush.bf16.msra.mxu0 %v3872
        %3969 = vmatpush.bf16.msra.mxu0 %v3866
        %3970 = vmatmul.bf16.gmra.mxu0 %v3672
        %v3971 = vpop.f32.mrf.mxu0
        %v3972 = vadd.f32 0.0, %v3971
        %v3973 = vpop.f32.mrf.mxu0
        %3974 = vdwg.mxu0
        %3975 = vmatpush.bf16.msra.mxu0 %v3909
        %3976 = vmatpush.bf16.msra.mxu0 %v3903
        %3977 = vmatpush.bf16.msra.mxu0 %v3897
        %3978 = vmatpush.bf16.msra.mxu0 %v3891
        %3979 = vmatpush.bf16.msra.mxu0 %v3885
        %3980 = vmatpush.bf16.msra.mxu0 %v3879
        %3981 = vmatpush.bf16.msra.mxu0 %v3873
        %3982 = vmatpush.bf16.msra.mxu0 %v3867
        %3983 = vmatmul.bf16.gmra.mxu0 %v3672
        %v3984 = vpop.f32.mrf.mxu0
        %v3985 = vadd.f32 0.0, %v3984
        %v3986 = vpop.f32.mrf.mxu0
        %3987 = vdwg.mxu0
        %3988 = vmatpush.bf16.msra.mxu0 %v3910
        %3989 = vmatpush.bf16.msra.mxu0 %v3904
        %3990 = vmatpush.bf16.msra.mxu0 %v3898
        %3991 = vmatpush.bf16.msra.mxu0 %v3892
        %3992 = vmatpush.bf16.msra.mxu0 %v3886
        %3993 = vmatpush.bf16.msra.mxu0 %v3880
        %3994 = vmatpush.bf16.msra.mxu0 %v3874
        %3995 = vmatpush.bf16.msra.mxu0 %v3868
        %3996 = vmatmul.bf16.gmra.mxu0 %v3672
        %v3997 = vpop.f32.mrf.mxu0
        %v3998 = vadd.f32 0.0, %v3997
        %v3999 = vpop.f32.mrf.mxu0
        %4000 = vdwg.mxu0
        %4001 = vmatpush.bf16.msra.mxu0 %v3911
        %4002 = vmatpush.bf16.msra.mxu0 %v3905
        %4003 = vmatpush.bf16.msra.mxu0 %v3899
        %4004 = vmatpush.bf16.msra.mxu0 %v3893
        %4005 = vmatpush.bf16.msra.mxu0 %v3887
        %4006 = vmatpush.bf16.msra.mxu0 %v3881
        %4007 = vmatpush.bf16.msra.mxu0 %v3875
        %4008 = vmatpush.bf16.msra.mxu0 %v3869
        %4009 = vmatmul.bf16.gmra.mxu0 %v3672
        %v4010 = vpop.f32.mrf.mxu0
        %v4011 = vadd.f32 0.0, %v4010
        %v4012 = vpop.f32.mrf.mxu0
        %4013 = vdwg.mxu0
        %4014 = vmatpush.bf16.msra.mxu0 %v3912
        %4015 = vmatpush.bf16.msra.mxu0 %v3906
        %4016 = vmatpush.bf16.msra.mxu0 %v3900
        %4017 = vmatpush.bf16.msra.mxu0 %v3894
        %4018 = vmatpush.bf16.msra.mxu0 %v3888
        %4019 = vmatpush.bf16.msra.mxu0 %v3882
        %4020 = vmatpush.bf16.msra.mxu0 %v3876
        %4021 = vmatpush.bf16.msra.mxu0 %v3870
        %4022 = vmatmul.bf16.gmra.mxu0 %v3672
        %v4023 = vpop.f32.mrf.mxu0
        %v4024 = vadd.f32 0.0, %v4023
        %v4025 = vpop.f32.mrf.mxu0
        %4026 = vdwg.mxu0
        %4027 = vmatpush.bf16.msra.mxu0 %v3913
        %4028 = vmatpush.bf16.msra.mxu0 %v3907
        %4029 = vmatpush.bf16.msra.mxu0 %v3901
        %4030 = vmatpush.bf16.msra.mxu0 %v3895
        %4031 = vmatpush.bf16.msra.mxu0 %v3889
        %4032 = vmatpush.bf16.msra.mxu0 %v3883
        %4033 = vmatpush.bf16.msra.mxu0 %v3877
        %4034 = vmatpush.bf16.msra.mxu0 %v3871
        %4035 = vmatmul.bf16.gmra.mxu0 %v3672
        %v4036 = vpop.f32.mrf.mxu0
        %v4037 = vadd.f32 0.0, %v4036
        %v4038 = vpop.f32.mrf.mxu0
        %4039 = vdwg.mxu0
        %v4040 = vpack.c.bf16 %v3972, %v3972
        %v4041 = vpack.c.bf16 %v3998, %v3998
        %v4042 = vpack.c.bf16 %v4024, %v4024
        %4043 = vmatpush.bf16.xpose.msra.mxu0 0
        %4044 = vmatpush.bf16.xpose.msra.mxu0 0
        %4045 = vmatpush.bf16.xpose.msra.mxu0 0
        %4046 = vmatpush.bf16.xpose.msra.mxu0 0
        %4047 = vmatpush.bf16.xpose.msra.mxu0 0
        %4048 = vmatpush.bf16.xpose.msra.mxu0 0
        %4049 = vmatpush.bf16.xpose.msra.mxu0 0
        %4050 = vmatpush.bf16.xpose.msra.mxu0 %v4041
        %4051 = vmatmul.bf16.gmra.mxu0 %v4040
        %v4052 = vpop.f32.mrf.mxu0
        %v4053 = vadd.f32 0.0, %v4052
        %v4054 = vpop.f32.mrf.mxu0
        %4055 = vdwg.mxu0
        %v4056 = vsel %vm1510, %v4053, -inf
        %4057 = vmax.xlane.f32.xlu0 %v4056
        %v4058 = vpop.xlane.xlu0 %4057
        %v4059 = vsub.f32 %v4053, %v4058
        %v4060 = vmul.f32 %v4059, 1.442695
        %v4061 = vpow.pop %v4060
        %v4062 = vsel %vm1510, %v4061, 0.0
        %4063 = vadd.xlane.f32.xlu0 %v4062
        %v4064 = vpop.xlane.xlu0 %4063
        %v4065 = vrcp.pop %v4064
        %v4066 = vmul.f32 %v4061, %v4065
        %v4067 = vpack.c.bf16 %v4066, %v4066
        %v4069 = vsel %vm1510, %v4067, 0
        %v4072 = vsel %vm1526, %v4042, 0
        %4074 = vmatpush.bf16.msra.mxu0 0
        %4075 = vmatpush.bf16.msra.mxu0 0
        %4076 = vmatpush.bf16.msra.mxu0 0
        %4077 = vmatpush.bf16.msra.mxu0 0
        %4078 = vmatpush.bf16.msra.mxu0 0
        %4079 = vmatpush.bf16.msra.mxu0 0
        %4080 = vmatpush.bf16.msra.mxu0 0
        %4081 = vmatpush.bf16.msra.mxu0 %v4072
        %4082 = vmatmul.bf16.gmra.mxu0 %v4069
        %v4083 = vpop.f32.mrf.mxu0
        %v4084 = vadd.f32 0.0, %v4083
        %v4085 = vpop.f32.mrf.mxu0
        %4086 = vdwg.mxu0
        %s4087 = scalar_lea.vmem [#allocation6], 384
        %v4088 = vld [vmem:[%s4087] sm:$0xf]
        %v4089 = vld [vmem:[%s4087 + $0x4] sm:$0xf]
        %v4090 = vld [vmem:[%s4087 + $0x8] sm:$0xf]
        %v4091 = vld [vmem:[%s4087 + $0xc] sm:$0xf]
        %v4092 = vld [vmem:[%s4087 + $0x10] sm:$0xf]
        %v4093 = vld [vmem:[%s4087 + $0x14] sm:$0xf]
        %v4094 = vld [vmem:[%s4087 + $0x18] sm:$0xf]
        %v4095 = vld [vmem:[%s4087 + $0x1c] sm:$0xf]
        %v4096 = vld [vmem:[%s4087 + $0x20] sm:$0xf]
        %v4097 = vld [vmem:[%s4087 + $0x24] sm:$0xf]
        %v4098 = vld [vmem:[%s4087 + $0x28] sm:$0xf]
        %v4099 = vld [vmem:[%s4087 + $0x2c] sm:$0xf]
        %v4100 = vld [vmem:[%s4087 + $0x30] sm:$0xf]
        %v4101 = vld [vmem:[%s4087 + $0x34] sm:$0xf]
        %v4102 = vld [vmem:[%s4087 + $0x38] sm:$0xf]
        %v4103 = vld [vmem:[%s4087 + $0x3c] sm:$0xf]
        %v4104 = vpack.c.bf16 %v4084, %v4084
        %v4121 = vunpack.c.l.b16 %v4088
        %v4122 = vunpack.c.l.b16 %v4089
        %v4123 = vunpack.c.l.b16 %v4090
        %v4124 = vunpack.c.l.b16 %v4091
        %v4125 = vunpack.c.l.b16 %v4092
        %v4126 = vunpack.c.l.b16 %v4093
        %v4127 = vunpack.c.l.b16 %v4094
        %v4128 = vunpack.c.l.b16 %v4095
        %v4129 = vunpack.c.l.b16 %v4096
        %v4130 = vunpack.c.l.b16 %v4097
        %v4131 = vunpack.c.l.b16 %v4098
        %v4132 = vunpack.c.l.b16 %v4099
        %v4133 = vunpack.c.l.b16 %v4100
        %v4134 = vunpack.c.l.b16 %v4101
        %v4135 = vunpack.c.l.b16 %v4102
        %v4136 = vunpack.c.l.b16 %v4103
        %v4137 = vpack.c.b16 %v4122, %v4121
        %v4138 = vpack.c.b16 %v4124, %v4123
        %v4139 = vpack.c.b16 %v4126, %v4125
        %v4140 = vpack.c.b16 %v4128, %v4127
        %v4141 = vpack.c.b16 %v4130, %v4129
        %v4142 = vpack.c.b16 %v4132, %v4131
        %v4143 = vpack.c.b16 %v4134, %v4133
        %v4144 = vpack.c.b16 %v4136, %v4135
        %4153 = vmatpush.bf16.msra.mxu0 %v4144
        %4154 = vmatpush.bf16.msra.mxu0 %v4143
        %4155 = vmatpush.bf16.msra.mxu0 %v4142
        %4156 = vmatpush.bf16.msra.mxu0 %v4141
        %4157 = vmatpush.bf16.msra.mxu0 %v4140
        %4158 = vmatpush.bf16.msra.mxu0 %v4139
        %4159 = vmatpush.bf16.msra.mxu0 %v4138
        %4160 = vmatpush.bf16.msra.mxu0 %v4137
        %4161 = vmatmul.bf16.gmra.mxu0 %v4104
        %v4162 = vpop.f32.mrf.mxu0
        %v4163 = vadd.f32 0.0, %v4162
        %v4164 = vpop.f32.mrf.mxu0
        %4165 = vdwg.mxu0
        %v4166 = vadd.f32 %v3645, %v4163
        %v4167 = vpack.c.bf16 %v3985, %v3985
        %v4168 = vpack.c.bf16 %v4011, %v4011
        %v4169 = vpack.c.bf16 %v4037, %v4037
        %4170 = vmatpush.bf16.xpose.msra.mxu0 0
        %4171 = vmatpush.bf16.xpose.msra.mxu0 0
        %4172 = vmatpush.bf16.xpose.msra.mxu0 0
        %4173 = vmatpush.bf16.xpose.msra.mxu0 0
        %4174 = vmatpush.bf16.xpose.msra.mxu0 0
        %4175 = vmatpush.bf16.xpose.msra.mxu0 0
        %4176 = vmatpush.bf16.xpose.msra.mxu0 0
        %4177 = vmatpush.bf16.xpose.msra.mxu0 %v4168
        %4178 = vmatmul.bf16.gmra.mxu0 %v4167
        %v4179 = vpop.f32.mrf.mxu0
        %v4180 = vadd.f32 0.0, %v4179
        %v4181 = vpop.f32.mrf.mxu0
        %4182 = vdwg.mxu0
        %v4183 = vsel %vm1510, %v4180, -inf
        %4184 = vmax.xlane.f32.xlu0 %v4183
        %v4185 = vpop.xlane.xlu0 %4184
        %v4186 = vsub.f32 %v4180, %v4185
        %v4187 = vmul.f32 %v4186, 1.442695
        %v4188 = vpow.pop %v4187
        %v4189 = vsel %vm1510, %v4188, 0.0
        %4190 = vadd.xlane.f32.xlu0 %v4189
        %v4191 = vpop.xlane.xlu0 %4190
        %v4192 = vrcp.pop %v4191
        %v4193 = vmul.f32 %v4188, %v4192
        %v4194 = vpack.c.bf16 %v4193, %v4193
        %v4196 = vsel %vm1510, %v4194, 0
        %v4199 = vsel %vm1526, %v4169, 0
        %4201 = vmatpush.bf16.msra.mxu0 0
        %4202 = vmatpush.bf16.msra.mxu0 0
        %4203 = vmatpush.bf16.msra.mxu0 0
        %4204 = vmatpush.bf16.msra.mxu0 0
        %4205 = vmatpush.bf16.msra.mxu0 0
        %4206 = vmatpush.bf16.msra.mxu0 0
        %4207 = vmatpush.bf16.msra.mxu0 0
        %4208 = vmatpush.bf16.msra.mxu0 %v4199
        %4209 = vmatmul.bf16.gmra.mxu0 %v4196
        %v4210 = vpop.f32.mrf.mxu0
        %v4211 = vadd.f32 0.0, %v4210
        %v4212 = vpop.f32.mrf.mxu0
        %4213 = vdwg.mxu0
        %v4214 = vld [vmem:[%s4087 + $0x40] sm:$0xf]
        %v4215 = vld [vmem:[%s4087 + $0x44] sm:$0xf]
        %v4216 = vld [vmem:[%s4087 + $0x48] sm:$0xf]
        %v4217 = vld [vmem:[%s4087 + $0x4c] sm:$0xf]
        %v4218 = vld [vmem:[%s4087 + $0x50] sm:$0xf]
        %v4219 = vld [vmem:[%s4087 + $0x54] sm:$0xf]
        %v4220 = vld [vmem:[%s4087 + $0x58] sm:$0xf]
        %v4221 = vld [vmem:[%s4087 + $0x5c] sm:$0xf]
        %v4222 = vld [vmem:[%s4087 + $0x60] sm:$0xf]
        %v4223 = vld [vmem:[%s4087 + $0x64] sm:$0xf]
        %v4224 = vld [vmem:[%s4087 + $0x68] sm:$0xf]
        %v4225 = vld [vmem:[%s4087 + $0x6c] sm:$0xf]
        %v4226 = vld [vmem:[%s4087 + $0x70] sm:$0xf]
        %v4227 = vld [vmem:[%s4087 + $0x74] sm:$0xf]
        %v4228 = vld [vmem:[%s4087 + $0x78] sm:$0xf]
        %v4229 = vld [vmem:[%s4087 + $0x7c] sm:$0xf]
        %v4230 = vpack.c.bf16 %v4211, %v4211
        %v4247 = vunpack.c.l.b16 %v4214
        %v4248 = vunpack.c.l.b16 %v4215
        %v4249 = vunpack.c.l.b16 %v4216
        %v4250 = vunpack.c.l.b16 %v4217
        %v4251 = vunpack.c.l.b16 %v4218
        %v4252 = vunpack.c.l.b16 %v4219
        %v4253 = vunpack.c.l.b16 %v4220
        %v4254 = vunpack.c.l.b16 %v4221
        %v4255 = vunpack.c.l.b16 %v4222
        %v4256 = vunpack.c.l.b16 %v4223
        %v4257 = vunpack.c.l.b16 %v4224
        %v4258 = vunpack.c.l.b16 %v4225
        %v4259 = vunpack.c.l.b16 %v4226
        %v4260 = vunpack.c.l.b16 %v4227
        %v4261 = vunpack.c.l.b16 %v4228
        %v4262 = vunpack.c.l.b16 %v4229
        %v4263 = vpack.c.b16 %v4248, %v4247
        %v4264 = vpack.c.b16 %v4250, %v4249
        %v4265 = vpack.c.b16 %v4252, %v4251
        %v4266 = vpack.c.b16 %v4254, %v4253
        %v4267 = vpack.c.b16 %v4256, %v4255
        %v4268 = vpack.c.b16 %v4258, %v4257
        %v4269 = vpack.c.b16 %v4260, %v4259
        %v4270 = vpack.c.b16 %v4262, %v4261
        %4279 = vmatpush.bf16.msra.mxu0 %v4270
        %4280 = vmatpush.bf16.msra.mxu0 %v4269
        %4281 = vmatpush.bf16.msra.mxu0 %v4268
        %4282 = vmatpush.bf16.msra.mxu0 %v4267
        %4283 = vmatpush.bf16.msra.mxu0 %v4266
        %4284 = vmatpush.bf16.msra.mxu0 %v4265
        %4285 = vmatpush.bf16.msra.mxu0 %v4264
        %4286 = vmatpush.bf16.msra.mxu0 %v4263
        %4287 = vmatmul.bf16.gmra.mxu0 %v4230
        %v4288 = vpop.f32.mrf.mxu0
        %v4289 = vadd.f32 0.0, %v4288
        %v4290 = vpop.f32.mrf.mxu0
        %4291 = vdwg.mxu0
        %v4292 = vadd.f32 %v4166, %v4289
        %v4293 = vld [vmem:[%s7 + $0x3] sm:$0x1]
        %v4294 = vperm.slane %v4293, 0
        %v4295 = vadd.f32 %v4292, %v4294
        %v4296 = vld [vmem:[%s8 + $0x3] sm:$0x1]
        %v4297 = vld [vmem:[%s9 + $0x3] sm:$0x1]
        %4298 = vadd.xlane.f32.xlu0 %v4295
        %v4299 = vpop.xlane.xlu0 %4298
        %v4300 = vmul.f32 %v4299, %v1104
        %v4301 = vsub.f32 %v4295, %v4300
        %v4302 = vmul.f32 %v4301, %v4301
        %4303 = vadd.xlane.f32.xlu0 %v4302
        %v4304 = vpop.xlane.xlu0 %4303
        %v4305 = vmul.f32 %v4304, %v1104
        %v4306 = vadd.f32 %v4305, 1e-05
        %v4307 = vrsqrt.pop %v4306
        %v4308 = vmul.f32 %v4307, %v4306
        %v4309 = vmul.f32 %v4308, %v4307
        %v4310 = vmul.f32 0.5, %v4309
        %v4311 = vsub.f32 1.5, %v4310
        %v4312 = vmul.f32 %v4307, %v4311
        %vm4313 = vweird.f32 %v4306
        %vm4314 = vweird.f32 %v4307
        %vm4315 = vmor %vm4313, %vm4314
        %v4316 = vsel %vm4315, %v4307, %v4312
        %v4317 = vmul.f32 %v4301, %v4316
        %v4318 = vperm.slane %v4296, 0
        %v4319 = vmul.f32 %v4317, %v4318
        %v4320 = vperm.slane %v4297, 0
        %v4321 = vadd.f32 %v4319, %v4320
        %v4322 = vpack.c.bf16 %v4321, %v4321
        %s4323 = scalar_lea.vmem [#allocation7], 192
        %v4324 = vld [vmem:[%s4323] sm:$0xf]
        %v4325 = vld [vmem:[%s4323 + $0x4] sm:$0xf]
        %v4326 = vld [vmem:[%s4323 + $0x8] sm:$0xf]
        %v4327 = vld [vmem:[%s4323 + $0xc] sm:$0xf]
        %v4328 = vld [vmem:[%s4323 + $0x10] sm:$0xf]
        %v4329 = vld [vmem:[%s4323 + $0x14] sm:$0xf]
        %v4330 = vld [vmem:[%s4323 + $0x18] sm:$0xf]
        %v4331 = vld [vmem:[%s4323 + $0x1c] sm:$0xf]
        %v4332 = vld [vmem:[%s4323 + $0x20] sm:$0xf]
        %v4333 = vld [vmem:[%s4323 + $0x24] sm:$0xf]
        %v4334 = vld [vmem:[%s4323 + $0x28] sm:$0xf]
        %v4335 = vld [vmem:[%s4323 + $0x2c] sm:$0xf]
        %v4336 = vld [vmem:[%s4323 + $0x30] sm:$0xf]
        %v4337 = vld [vmem:[%s4323 + $0x34] sm:$0xf]
        %v4338 = vld [vmem:[%s4323 + $0x38] sm:$0xf]
        %v4339 = vld [vmem:[%s4323 + $0x3c] sm:$0xf]
        %v4340 = vld [vmem:[%s11 + $0x3] sm:$0x1]
        %v4341 = vperm.slane %v4340, 0
        %v4358 = vunpack.c.l.b16 %v4324
        %v4359 = vunpack.c.l.b16 %v4325
        %v4360 = vunpack.c.l.b16 %v4326
        %v4361 = vunpack.c.l.b16 %v4327
        %v4362 = vunpack.c.l.b16 %v4328
        %v4363 = vunpack.c.l.b16 %v4329
        %v4364 = vunpack.c.l.b16 %v4330
        %v4365 = vunpack.c.l.b16 %v4331
        %v4366 = vunpack.c.l.b16 %v4332
        %v4367 = vunpack.c.l.b16 %v4333
        %v4368 = vunpack.c.l.b16 %v4334
        %v4369 = vunpack.c.l.b16 %v4335
        %v4370 = vunpack.c.l.b16 %v4336
        %v4371 = vunpack.c.l.b16 %v4337
        %v4372 = vunpack.c.l.b16 %v4338
        %v4373 = vunpack.c.l.b16 %v4339
        %v4374 = vpack.c.b16 %v4359, %v4358
        %v4375 = vpack.c.b16 %v4361, %v4360
        %v4376 = vpack.c.b16 %v4363, %v4362
        %v4377 = vpack.c.b16 %v4365, %v4364
        %v4378 = vpack.c.b16 %v4367, %v4366
        %v4379 = vpack.c.b16 %v4369, %v4368
        %v4380 = vpack.c.b16 %v4371, %v4370
        %v4381 = vpack.c.b16 %v4373, %v4372
        %4390 = vmatpush.bf16.msra.mxu0 %v4381
        %4391 = vmatpush.bf16.msra.mxu0 %v4380
        %4392 = vmatpush.bf16.msra.mxu0 %v4379
        %4393 = vmatpush.bf16.msra.mxu0 %v4378
        %4394 = vmatpush.bf16.msra.mxu0 %v4377
        %4395 = vmatpush.bf16.msra.mxu0 %v4376
        %4396 = vmatpush.bf16.msra.mxu0 %v4375
        %4397 = vmatpush.bf16.msra.mxu0 %v4374
        %4398 = vmatmul.bf16.gmra.mxu0 %v4322
        %v4399 = vpop.f32.mrf.mxu0
        %v4400 = vadd.f32 %v4341, %v4399
        %v4401 = vpop.f32.mrf.mxu0
        %4402 = vdwg.mxu0
        %v4403 = vmul.f32 %v4400, %v4400
        %v4404 = vmul.f32 %v4400, %v4403
        %v4405 = vmul.f32 %v4404, 0.044715
        %v4406 = vadd.f32 %v4400, %v4405
        %v4407 = vmul.f32 %v4406, 0.7978846
        %v4408 = vtanh.pop %v4407
        %v4409 = vadd.f32 %v4408, 1.0
        %v4410 = vmul.f32 %v4409, 0.5
        %v4411 = vmul.f32 %v4400, %v4410
        %s4412 = scalar_lea.vmem [#allocation9], 192
        %v4413 = vld [vmem:[%s4412] sm:$0xf]
        %v4414 = vld [vmem:[%s4412 + $0x4] sm:$0xf]
        %v4415 = vld [vmem:[%s4412 + $0x8] sm:$0xf]
        %v4416 = vld [vmem:[%s4412 + $0xc] sm:$0xf]
        %v4417 = vld [vmem:[%s4412 + $0x10] sm:$0xf]
        %v4418 = vld [vmem:[%s4412 + $0x14] sm:$0xf]
        %v4419 = vld [vmem:[%s4412 + $0x18] sm:$0xf]
        %v4420 = vld [vmem:[%s4412 + $0x1c] sm:$0xf]
        %v4421 = vld [vmem:[%s4412 + $0x20] sm:$0xf]
        %v4422 = vld [vmem:[%s4412 + $0x24] sm:$0xf]
        %v4423 = vld [vmem:[%s4412 + $0x28] sm:$0xf]
        %v4424 = vld [vmem:[%s4412 + $0x2c] sm:$0xf]
        %v4425 = vld [vmem:[%s4412 + $0x30] sm:$0xf]
        %v4426 = vld [vmem:[%s4412 + $0x34] sm:$0xf]
        %v4427 = vld [vmem:[%s4412 + $0x38] sm:$0xf]
        %v4428 = vld [vmem:[%s4412 + $0x3c] sm:$0xf]
        %v4429 = vpack.c.bf16 %v4411, %v4411
        %v4446 = vunpack.c.l.b16 %v4413
        %v4447 = vunpack.c.l.b16 %v4414
        %v4448 = vunpack.c.l.b16 %v4415
        %v4449 = vunpack.c.l.b16 %v4416
        %v4450 = vunpack.c.l.b16 %v4417
        %v4451 = vunpack.c.l.b16 %v4418
        %v4452 = vunpack.c.l.b16 %v4419
        %v4453 = vunpack.c.l.b16 %v4420
        %v4454 = vunpack.c.l.b16 %v4421
        %v4455 = vunpack.c.l.b16 %v4422
        %v4456 = vunpack.c.l.b16 %v4423
        %v4457 = vunpack.c.l.b16 %v4424
        %v4458 = vunpack.c.l.b16 %v4425
        %v4459 = vunpack.c.l.b16 %v4426
        %v4460 = vunpack.c.l.b16 %v4427
        %v4461 = vunpack.c.l.b16 %v4428
        %v4462 = vpack.c.b16 %v4447, %v4446
        %v4463 = vpack.c.b16 %v4449, %v4448
        %v4464 = vpack.c.b16 %v4451, %v4450
        %v4465 = vpack.c.b16 %v4453, %v4452
        %v4466 = vpack.c.b16 %v4455, %v4454
        %v4467 = vpack.c.b16 %v4457, %v4456
        %v4468 = vpack.c.b16 %v4459, %v4458
        %v4469 = vpack.c.b16 %v4461, %v4460
        %4478 = vmatpush.bf16.msra.mxu0 %v4469
        %4479 = vmatpush.bf16.msra.mxu0 %v4468
        %4480 = vmatpush.bf16.msra.mxu0 %v4467
        %4481 = vmatpush.bf16.msra.mxu0 %v4466
        %4482 = vmatpush.bf16.msra.mxu0 %v4465
        %4483 = vmatpush.bf16.msra.mxu0 %v4464
        %4484 = vmatpush.bf16.msra.mxu0 %v4463
        %4485 = vmatpush.bf16.msra.mxu0 %v4462
        %4486 = vmatmul.bf16.gmra.mxu0 %v4429
        %v4487 = vpop.f32.mrf.mxu0
        %v4488 = vadd.f32 0.0, %v4487
        %v4489 = vpop.f32.mrf.mxu0
        %4490 = vdwg.mxu0
        %v4491 = vadd.f32 %v4295, %v4488
        %v4492 = vld [vmem:[%s13 + $0x3] sm:$0x1]
        %v4493 = vperm.slane %v4492, 0
        %v4494 = vadd.f32 %v4491, %v4493
        %v4495 = vld [vmem:[%s14] sm:$0xf]
        %v4496 = vld [vmem:[%s14 + $0x4] sm:$0xf]
        %v4497 = vld [vmem:[%s14 + $0x8] sm:$0xf]
        %v4498 = vld [vmem:[%s14 + $0xc] sm:$0xf]
        %v4499 = vld [vmem:[%s14 + $0x10] sm:$0xf]
        %v4500 = vld [vmem:[%s14 + $0x14] sm:$0xf]
        %v4501 = vld [vmem:[%s14 + $0x18] sm:$0xf]
        %v4502 = vld [vmem:[%s14 + $0x1c] sm:$0xf]
        %v4503 = vld [vmem:[%s14 + $0x20] sm:$0xf]
        %v4504 = vld [vmem:[%s14 + $0x24] sm:$0xf]
        %v4505 = vld [vmem:[%s14 + $0x28] sm:$0xf]
        %v4506 = vld [vmem:[%s14 + $0x2c] sm:$0xf]
        %v4507 = vld [vmem:[%s14 + $0x30] sm:$0xf]
        %v4508 = vld [vmem:[%s14 + $0x34] sm:$0xf]
        %v4509 = vld [vmem:[%s14 + $0x38] sm:$0xf]
        %v4510 = vld [vmem:[%s14 + $0x3c] sm:$0xf]
        %v4511 = vpack.c.bf16 %v4494, %v4494
        %v4512 = vld [vmem:[%s15] sm:$0x1]
        %v4514 = vperm.slane %v4512, 0
        %v4532 = vunpack.c.l.b16 %v4495
        %v4533 = vunpack.c.l.b16 %v4496
        %v4534 = vunpack.c.l.b16 %v4497
        %v4535 = vunpack.c.l.b16 %v4498
        %v4536 = vunpack.c.l.b16 %v4499
        %v4537 = vunpack.c.l.b16 %v4500
        %v4538 = vunpack.c.l.b16 %v4501
        %v4539 = vunpack.c.l.b16 %v4502
        %v4540 = vunpack.c.l.b16 %v4503
        %v4541 = vunpack.c.l.b16 %v4504
        %v4542 = vunpack.c.l.b16 %v4505
        %v4543 = vunpack.c.l.b16 %v4506
        %v4544 = vunpack.c.l.b16 %v4507
        %v4545 = vunpack.c.l.b16 %v4508
        %v4546 = vunpack.c.l.b16 %v4509
        %v4547 = vunpack.c.l.b16 %v4510
        %v4548 = vpack.c.b16 %v4533, %v4532
        %v4549 = vpack.c.b16 %v4535, %v4534
        %v4550 = vpack.c.b16 %v4537, %v4536
        %v4551 = vpack.c.b16 %v4539, %v4538
        %v4552 = vpack.c.b16 %v4541, %v4540
        %v4553 = vpack.c.b16 %v4543, %v4542
        %v4554 = vpack.c.b16 %v4545, %v4544
        %v4555 = vpack.c.b16 %v4547, %v4546
        %4564 = vmatpush.bf16.msra.mxu0 %v4555
        %4565 = vmatpush.bf16.msra.mxu0 %v4554
        %4566 = vmatpush.bf16.msra.mxu0 %v4553
        %4567 = vmatpush.bf16.msra.mxu0 %v4552
        %4568 = vmatpush.bf16.msra.mxu0 %v4551
        %4569 = vmatpush.bf16.msra.mxu0 %v4550
        %4570 = vmatpush.bf16.msra.mxu0 %v4549
        %4571 = vmatpush.bf16.msra.mxu0 %v4548
        %4572 = vmatmul.bf16.gmra.mxu0 %v4511
        %v4573 = vpop.f32.mrf.mxu0
        %v4574 = vadd.f32 %v4514, %v4573
        %v4575 = vpop.f32.mrf.mxu0
        %4576 = vdwg.mxu0
        %4577 = vst [vmem:[%s602] sm:$0xff] %v4574
        %p4578 = scmp.lt.s32.totalorder %s30, 1
        %s4579 = scalar_select %p4578, %s30, 1
        %s4580 = smul.addr %s4579, 8
        %s4581 = scalar_lea.vmem %s16, %s4580
        // Predicated region
        $region105: #{tdiscriminator_forward.1} parent=83 // pred_check
          %p4582 = pneg %p389
        $region106: #{tdiscriminator_forward.1} parent=83 // pred_check_branch
          %4584 = sbr.rel (%p4582) target = $region108
        $region107: #{tdiscriminator_forward.1} parent=83 // pred_region
          _
        $region108: #{tdiscriminator_forward.1} parent=83 // pred_fallthru
          _
      $region84: #{tdiscriminator_forward.1} parent=5 // pred_fallthru
        _
      %p4585 = scmp.le.s32.totalorder 2, %s25
      // Predicated region
      $region109: #{tdiscriminator_forward.1} parent=5 // pred_check
        %p4586 = pneg %p4585
      $region110: #{tdiscriminator_forward.1} parent=5 // pred_check_branch
        %4588 = sbr.rel (%p4586) target = $region112
      $region111: #{tdiscriminator_forward.1} parent=5 // pred_region
        %s4589 = ssub.s32 %s25, 2
        // Predicated region
        $region113: #{tdiscriminator_forward.1} parent=111 // pred_check
          %p4590 = pneg %p395
        $region114: #{tdiscriminator_forward.1} parent=111 // pred_check_branch
          %4592 = sbr.rel (%p4590) target = $region116
        $region115: #{tdiscriminator_forward.1} parent=111 // pred_region
          %p4593 = scmp.lt.s32.totalorder %s31, 1
          %s4594 = scalar_select %p4593, %s31, 1
          %s4595 = smul.addr %s4594, 8
          %s4596 = scalar_lea.vmem %s16, %s4595
        $region116: #{tdiscriminator_forward.1} parent=111 // pred_fallthru
          _
      $region112: #{tdiscriminator_forward.1} parent=5 // pred_fallthru
        _
    $region6: #{tdiscriminator_forward.1} parent=1 // loop_footer
      %s29 = sadd.s32 1, %s25
    $region7: #{tdiscriminator_forward.1} parent=1 // loop_footer_branch
      %24 = sbr.rel target = $region3
    $region8: #{tdiscriminator_forward.1} parent=1 // loop_exit
      _
    %4597 = vsyncpa [#allocation3], 1
    %s4598 = scalar_lea.sflag [#allocation3], 1
    %4599 = vsyncpa %s4598, 1
    %4600 = vsyncpa [#allocation5], 1
    %4601 = vsyncpa [#allocation8], 1

</llo_original>
